<compile_context>
chip_gen: v5e
topology: v5e:2x2
jax: 0.10.0
libtpu: 0.0.40
codegen_flags: <defaults>
</compile_context>

<pallas_src>
import jax
import jax.numpy as jnp
from jax.experimental import pallas as pl
from jax.experimental.pallas import tpu as pltpu

# ---------------- sizes (small test shapes, consistent with the module) ----
B = 2          # batch
D_IMG = 256    # image backbone channels   (2048 in the original)
D_TXT = 128    # BERT hidden size          (768 in the original)
F = 128        # args.feature_size (must equal D_TXT for the text concat)
F2 = 2 * F
N_SEP = 2      # n_sep
N_TOK = 98     # tokens text_features[:, 1:99]
T = 1 + N_SEP + N_TOK   # 101  == LayerNorm([98 + 2 + 1, feature_size])
P2 = 2         # args.part2
P3 = 3         # args.part3
NP = 1 + P2 + P3
EPS = 1e-5


def _full_spec(shape):
    """Whole-array block resident in VMEM (grid=(1,))."""
    n = len(shape)
    return pl.BlockSpec(shape, lambda i, _n=n: (0,) * _n)


# ---------------- single fused kernel ---------------------------------------
def _fused_kernel(
    # activations
    img_ref, cls_ref, sep_ref, tok_ref, p2_ref, p3_ref,
    # 1x1 convs + BatchNorm bottlenecks
    w_ci_ref, b_ci_ref, w_ct_ref, b_ct_ref,
    bn_ig_ref, bn_ib_ref, bn_tg_ref, bn_tb_ref,
    # global image query/value (fused along output dim)
    w_gqv_ref, b_gqv_ref,
    # per-part projections (stacked over part axis)
    w_p2_ref, b_p2_ref, w_p3_ref, b_p3_ref,
    w_p2qv_ref, b_p2qv_ref, w_p3qv_ref, b_p3qv_ref,
    # local text key/value (fused) + LayerNorm params
    w_kv_ref, b_kv_ref, ln_kg_ref, ln_kb_ref, ln_vg_ref, ln_vb_ref,
    # outputs
    gi_ref, gt_ref, liq_ref, liv_ref, key_ref, val_ref,
    # scratch: assembled [CLS ; sep ; tokens] slab, flattened to (B*T, D_TXT)
    txt_scratch,
):
    f32 = jnp.float32
    bf16 = jnp.bfloat16

    def bn(x, g, beta):
        # BatchNorm1d, training-mode batch statistics (biased variance)
        mean = jnp.mean(x, axis=0, keepdims=True)
        var = jnp.mean((x - mean) ** 2, axis=0, keepdims=True)
        return (x - mean) * jax.lax.rsqrt(var + EPS) * g + beta

    # ---- global image / text embeddings (1x1 conv == channel matmul) + BN --
    gi = jnp.dot(img_ref[...].astype(bf16), w_ci_ref[...],
                 preferred_element_type=f32) + b_ci_ref[...]
    gi = bn(gi, bn_ig_ref[...], bn_ib_ref[...])
    gi_ref[...] = gi

    gt = jnp.dot(cls_ref[...].astype(bf16), w_ct_ref[...],
                 preferred_element_type=f32) + b_ct_ref[...]
    gt = bn(gt, bn_tg_ref[...], bn_tb_ref[...])
    gt_ref[...] = gt

    # ---- global image query / value, written into token 0 of the output ----
    gqv = jnp.dot(gi.astype(bf16), w_gqv_ref[...],
                  preferred_element_type=f32) + b_gqv_ref[...]       # (B, 2F)
    liq_ref[:, 0, :] = gqv[:, :F]
    liv_ref[:, 0, :] = gqv[:, F:]

    # ---- per-part chains: batched over the part axis (part -> feat -> q/v) -
    def part_group(parts_ref, w_ref, b_ref, wqv_ref, bqv_ref, tok_off, n_parts):
        feat = jnp.einsum('pbd,pdf->pbf', parts_ref[...].astype(bf16),
                          w_ref[...], preferred_element_type=f32) + b_ref[...]
        qv = jnp.einsum('pbf,pfe->pbe', feat.astype(bf16), wqv_ref[...],
                        preferred_element_type=f32) + bqv_ref[...]   # (P,B,2F)
        for p in range(n_parts):
            liq_ref[:, tok_off + p, :] = qv[p, :, :F]
            liv_ref[:, tok_off + p, :] = qv[p, :, F:]

    part_group(p2_ref, w_p2_ref, b_p2_ref, w_p2qv_ref, b_p2qv_ref, 1, P2)
    part_group(p3_ref, w_p3_ref, b_p3_ref, w_p3qv_ref, b_p3qv_ref, 1 + P2, P3)

    # ---- local text branch --------------------------------------------------
    # Assemble [gt ; sep sentences ; tokens 1..98] per sample into the flat
    # (B*T, D_TXT) VMEM scratch (concat never touches HBM; gt stays in VMEM).
    for bi in range(B):
        base = bi * T
        txt_scratch[base:base + 1, :] = gt[bi:bi + 1, :]
        txt_scratch[base + 1:base + 1 + N_SEP, :] = sep_ref[bi]
        txt_scratch[base + 1 + N_SEP:base + T, :] = tok_ref[bi]

    # One flattened matmul: (B*T, D_TXT) @ (D_TXT, 2F), key+value fused.
    kv = jnp.dot(txt_scratch[...].astype(bf16), w_kv_ref[...],
                 preferred_element_type=f32) + b_kv_ref[...]          # (B*T, 2F)

    ln_kg = ln_kg_ref[...]
    ln_kb = ln_kb_ref[...]
    ln_vg = ln_vg_ref[...]
    ln_vb = ln_vb_ref[...]
    inv_n = 1.0 / (T * F)

    for bi in range(B):
        slab = kv[bi * T:(bi + 1) * T, :]        # (T, 2F) — this sample's rows
        k = slab[:, :F]
        v = slab[:, F:]
        # LayerNorm([T, F]) per sample: one-pass statistics, key/value
        # reductions issued back-to-back.
        ks = jnp.sum(k)
        ks2 = jnp.sum(k * k)
        vs = jnp.sum(v)
        vs2 = jnp.sum(v * v)
        km = ks * inv_n
        kvar = jnp.maximum(ks2 * inv_n - km * km, 0.0)
        vm = vs * inv_n
        vvar = jnp.maximum(vs2 * inv_n - vm * vm, 0.0)
        key_ref[bi] = (k - km) * jax.lax.rsqrt(kvar + EPS) * ln_kg + ln_kb
        val_ref[bi] = (v - vm) * jax.lax.rsqrt(vvar + EPS) * ln_vg + ln_vb


# ---------------- parameters ------------------------------------------------
def init_params(key):
    ks = iter(jax.random.split(key, 32))
    bf16 = jnp.bfloat16

    def kaiming(k, shape, fan):
        return jax.random.normal(k, shape, jnp.float32) * jnp.sqrt(2.0 / fan)

    p = {}
    # 1x1 convs (== linears over channels), pre-transposed to (K, F), bf16
    p["w_conv_img"] = kaiming(next(ks), (D_IMG, F), D_IMG).astype(bf16)
    p["b_conv_img"] = jnp.zeros((1, F), jnp.float32)
    p["w_conv_txt"] = kaiming(next(ks), (D_TXT, F), D_TXT).astype(bf16)
    p["b_conv_txt"] = jnp.zeros((1, F), jnp.float32)
    # BatchNorm bottlenecks (weights_init_kaiming -> weight=1, bias=0)
    p["bn_img_g"] = jnp.ones((1, F), jnp.float32)
    p["bn_img_b"] = jnp.zeros((1, F), jnp.float32)
    p["bn_txt_g"] = jnp.ones((1, F), jnp.float32)
    p["bn_txt_b"] = jnp.zeros((1, F), jnp.float32)
    # local text key/value linears, fused along output dim -> (D_TXT, 2F)
    w_key = kaiming(next(ks), (D_TXT, F), F)
    w_val = kaiming(next(ks), (D_TXT, F), F)
    p["w_kv"] = jnp.concatenate([w_key, w_val], axis=1).astype(bf16)
    p["b_kv"] = jnp.zeros((1, F2), jnp.float32)
    p["ln_key_g"] = jnp.ones((T, F), jnp.float32)
    p["ln_key_b"] = jnp.zeros((T, F), jnp.float32)
    p["ln_val_g"] = jnp.ones((T, F), jnp.float32)
    p["ln_val_b"] = jnp.zeros((T, F), jnp.float32)
    # global image query / value, fused -> (F, 2F)
    w_gq = kaiming(next(ks), (F, F), F)
    w_gv = kaiming(next(ks), (F, F), F)
    p["w_gqv"] = jnp.concatenate([w_gq, w_gv], axis=1).astype(bf16)
    p["b_gqv"] = jnp.zeros((1, F2), jnp.float32)
    # per-part projections (stacked over the part axis, pre-transposed)
    p["w_p2"] = kaiming(next(ks), (P2, D_IMG, F), F).astype(bf16)
    p["b_p2"] = jnp.zeros((P2, 1, F), jnp.float32)
    p["w_p3"] = kaiming(next(ks), (P3, D_IMG, F), F).astype(bf16)
    p["b_p3"] = jnp.zeros((P3, 1, F), jnp.float32)
    # per-part query/value, fused along output dim -> (P, F, 2F)
    w_p2q = kaiming(next(ks), (P2, F, F), F)
    w_p2v = kaiming(next(ks), (P2, F, F), F)
    p["w_p2qv"] = jnp.concatenate([w_p2q, w_p2v], axis=2).astype(bf16)
    p["b_p2qv"] = jnp.zeros((P2, 1, F2), jnp.float32)
    w_p3q = kaiming(next(ks), (P3, F, F), F)
    w_p3v = kaiming(next(ks), (P3, F, F), F)
    p["w_p3qv"] = jnp.concatenate([w_p3q, w_p3v], axis=2).astype(bf16)
    p["b_p3qv"] = jnp.zeros((P3, 1, F2), jnp.float32)
    return p


# ---------------- forward ----------------------------------------------------
@jax.jit
def forward(params, b1, text_cls, text_tokens, sep_text_feat, parts2, parts3):
    """
    b1:            (B, D_IMG, 1, 1)  pooled image backbone feature (NCHW, 1x1)
    text_cls:      (B, D_TXT)        BERT [CLS] of the full caption
    text_tokens:   (B, N_TOK, D_TXT) BERT tokens 1..98 of the full caption
    sep_text_feat: (B, N_SEP, D_TXT) per-sentence [CLS] features
    parts2:        (P2, B, D_IMG)    part features (branch 2)
    parts3:        (P3, B, D_IMG)    part features (branch 3)
    """
    Bm = b1.shape[0]
    img_flat = b1.reshape(Bm, D_IMG)
    p = params

    inputs = (
        img_flat, text_cls, sep_text_feat, text_tokens, parts2, parts3,
        p["w_conv_img"], p["b_conv_img"], p["w_conv_txt"], p["b_conv_txt"],
        p["bn_img_g"], p["bn_img_b"], p["bn_txt_g"], p["bn_txt_b"],
        p["w_gqv"], p["b_gqv"],
        p["w_p2"], p["b_p2"], p["w_p3"], p["b_p3"],
        p["w_p2qv"], p["b_p2qv"], p["w_p3qv"], p["b_p3qv"],
        p["w_kv"], p["b_kv"],
        p["ln_key_g"], p["ln_key_b"], p["ln_val_g"], p["ln_val_b"],
    )
    out_shape = (
        jax.ShapeDtypeStruct((Bm, F), jnp.float32),       # global_img_feat
        jax.ShapeDtypeStruct((Bm, F), jnp.float32),       # global_text_feat
        jax.ShapeDtypeStruct((Bm, NP, F), jnp.float32),   # local_img_query
        jax.ShapeDtypeStruct((Bm, NP, F), jnp.float32),   # local_img_value
        jax.ShapeDtypeStruct((Bm, T, F), jnp.float32),    # local_text_key
        jax.ShapeDtypeStruct((Bm, T, F), jnp.float32),    # local_text_value
    )
    return pl.pallas_call(
        _fused_kernel,
        out_shape=out_shape,
        grid=(1,),
        in_specs=[_full_spec(x.shape) for x in inputs],
        out_specs=tuple(_full_spec(s.shape) for s in out_shape),
        scratch_shapes=[pltpu.VMEM((Bm * T, D_TXT), jnp.float32)],
        compiler_params=pltpu.CompilerParams(
            dimension_semantics=("arbitrary",),
            vmem_limit_bytes=32 * 1024 * 1024),
    )(*inputs)


# ---------------- main -------------------------------------------------------
if __name__ == "__main__":
    root = jax.random.PRNGKey(0)
    k_par, k_in = jax.random.split(root)
    params = init_params(k_par)

    kin = jax.random.split(k_in, 6)
    b1 = jax.random.normal(kin[0], (B, D_IMG, 1, 1), jnp.float32)
    text_cls = jax.random.normal(kin[1], (B, D_TXT), jnp.float32)
    text_tokens = jax.random.normal(kin[2], (B, N_TOK, D_TXT), jnp.float32)
    sep_text_feat = jax.random.normal(kin[3], (B, N_SEP, D_TXT), jnp.float32)
    parts2 = jax.random.normal(kin[4], (P2, B, D_IMG), jnp.float32)
    parts3 = jax.random.normal(kin[5], (P3, B, D_IMG), jnp.float32)

    outs = forward(params, b1, text_cls, text_tokens, sep_text_feat, parts2, parts3)
    outs = jax.block_until_ready(outs)

    gi, gt, liq, liv, ltk, ltv = outs
    assert gi.shape == (B, F)
    assert gt.shape == (B, F)
    assert liq.shape == (B, NP, F)
    assert liv.shape == (B, NP, F)
    assert ltk.shape == (B, T, F)
    assert ltv.shape == (B, T, F)
    for o in (gi, gt, liq, liv, ltk, ltv):
        assert bool(jnp.all(jnp.isfinite(o)))
    print("KERNEL_OK")
</pallas_src>

<mosaic_0001>
module attributes {stable_mosaic.version = 11 : i64} {
  func.func @_fused_kernel(%arg0: i32, %arg1: memref<2x256xf32, #tpu.memory_space<vmem>>, %arg2: memref<2x128xf32, #tpu.memory_space<vmem>>, %arg3: memref<2x2x128xf32, #tpu.memory_space<vmem>>, %arg4: memref<2x98x128xf32, #tpu.memory_space<vmem>>, %arg5: memref<2x2x256xf32, #tpu.memory_space<vmem>>, %arg6: memref<3x2x256xf32, #tpu.memory_space<vmem>>, %arg7: memref<256x128xbf16, #tpu.memory_space<vmem>>, %arg8: memref<1x128xf32, #tpu.memory_space<vmem>>, %arg9: memref<128x128xbf16, #tpu.memory_space<vmem>>, %arg10: memref<1x128xf32, #tpu.memory_space<vmem>>, %arg11: memref<1x128xf32, #tpu.memory_space<vmem>>, %arg12: memref<1x128xf32, #tpu.memory_space<vmem>>, %arg13: memref<1x128xf32, #tpu.memory_space<vmem>>, %arg14: memref<1x128xf32, #tpu.memory_space<vmem>>, %arg15: memref<128x256xbf16, #tpu.memory_space<vmem>>, %arg16: memref<1x256xf32, #tpu.memory_space<vmem>>, %arg17: memref<2x256x128xbf16, #tpu.memory_space<vmem>>, %arg18: memref<2x1x128xf32, #tpu.memory_space<vmem>>, %arg19: memref<3x256x128xbf16, #tpu.memory_space<vmem>>, %arg20: memref<3x1x128xf32, #tpu.memory_space<vmem>>, %arg21: memref<2x128x256xbf16, #tpu.memory_space<vmem>>, %arg22: memref<2x1x256xf32, #tpu.memory_space<vmem>>, %arg23: memref<3x128x256xbf16, #tpu.memory_space<vmem>>, %arg24: memref<3x1x256xf32, #tpu.memory_space<vmem>>, %arg25: memref<128x256xbf16, #tpu.memory_space<vmem>>, %arg26: memref<1x256xf32, #tpu.memory_space<vmem>>, %arg27: memref<101x128xf32, #tpu.memory_space<vmem>>, %arg28: memref<101x128xf32, #tpu.memory_space<vmem>>, %arg29: memref<101x128xf32, #tpu.memory_space<vmem>>, %arg30: memref<101x128xf32, #tpu.memory_space<vmem>>, %arg31: memref<2x128xf32, #tpu.memory_space<vmem>>, %arg32: memref<2x128xf32, #tpu.memory_space<vmem>>, %arg33: memref<2x6x128xf32, #tpu.memory_space<vmem>>, %arg34: memref<2x6x128xf32, #tpu.memory_space<vmem>>, %arg35: memref<2x101x128xf32, #tpu.memory_space<vmem>>, %arg36: memref<2x101x128xf32, #tpu.memory_space<vmem>>, %arg37: memref<202x128xf32, #tpu.memory_space<vmem>>) attributes {dimension_semantics = [#tpu.dimension_semantics<arbitrary>], iteration_bounds = array<i64: 1>, scalar_prefetch = 0 : i64, scratch_operands = 1 : i64, tpu.core_type = #tpu.core_type<tc>, window_params = [{pipeline_mode = #tpu.pipeline_mode<synchronous>, transform_indices = @transform_0, window_bounds = array<i64: 2, 256>}, {pipeline_mode = #tpu.pipeline_mode<synchronous>, transform_indices = @transform_1, window_bounds = array<i64: 2, 128>}, {pipeline_mode = #tpu.pipeline_mode<synchronous>, transform_indices = @transform_2, window_bounds = array<i64: 2, 2, 128>}, {pipeline_mode = #tpu.pipeline_mode<synchronous>, transform_indices = @transform_3, window_bounds = array<i64: 2, 98, 128>}, {pipeline_mode = #tpu.pipeline_mode<synchronous>, transform_indices = @transform_4, window_bounds = array<i64: 2, 2, 256>}, {pipeline_mode = #tpu.pipeline_mode<synchronous>, transform_indices = @transform_5, window_bounds = array<i64: 3, 2, 256>}, {pipeline_mode = #tpu.pipeline_mode<synchronous>, transform_indices = @transform_6, window_bounds = array<i64: 256, 128>}, {pipeline_mode = #tpu.pipeline_mode<synchronous>, transform_indices = @transform_7, window_bounds = array<i64: 1, 128>}, {pipeline_mode = #tpu.pipeline_mode<synchronous>, transform_indices = @transform_8, window_bounds = array<i64: 128, 128>}, {pipeline_mode = #tpu.pipeline_mode<synchronous>, transform_indices = @transform_9, window_bounds = array<i64: 1, 128>}, {pipeline_mode = #tpu.pipeline_mode<synchronous>, transform_indices = @transform_10, window_bounds = array<i64: 1, 128>}, {pipeline_mode = #tpu.pipeline_mode<synchronous>, transform_indices = @transform_11, window_bounds = array<i64: 1, 128>}, {pipeline_mode = #tpu.pipeline_mode<synchronous>, transform_indices = @transform_12, window_bounds = array<i64: 1, 128>}, {pipeline_mode = #tpu.pipeline_mode<synchronous>, transform_indices = @transform_13, window_bounds = array<i64: 1, 128>}, {pipeline_mode = #tpu.pipeline_mode<synchronous>, transform_indices = @transform_14, window_bounds = array<i64: 128, 256>}, {pipeline_mode = #tpu.pipeline_mode<synchronous>, transform_indices = @transform_15, window_bounds = array<i64: 1, 256>}, {pipeline_mode = #tpu.pipeline_mode<synchronous>, transform_indices = @transform_16, window_bounds = array<i64: 2, 256, 128>}, {pipeline_mode = #tpu.pipeline_mode<synchronous>, transform_indices = @transform_17, window_bounds = array<i64: 2, 1, 128>}, {pipeline_mode = #tpu.pipeline_mode<synchronous>, transform_indices = @transform_18, window_bounds = array<i64: 3, 256, 128>}, {pipeline_mode = #tpu.pipeline_mode<synchronous>, transform_indices = @transform_19, window_bounds = array<i64: 3, 1, 128>}, {pipeline_mode = #tpu.pipeline_mode<synchronous>, transform_indices = @transform_20, window_bounds = array<i64: 2, 128, 256>}, {pipeline_mode = #tpu.pipeline_mode<synchronous>, transform_indices = @transform_21, window_bounds = array<i64: 2, 1, 256>}, {pipeline_mode = #tpu.pipeline_mode<synchronous>, transform_indices = @transform_22, window_bounds = array<i64: 3, 128, 256>}, {pipeline_mode = #tpu.pipeline_mode<synchronous>, transform_indices = @transform_23, window_bounds = array<i64: 3, 1, 256>}, {pipeline_mode = #tpu.pipeline_mode<synchronous>, transform_indices = @transform_24, window_bounds = array<i64: 128, 256>}, {pipeline_mode = #tpu.pipeline_mode<synchronous>, transform_indices = @transform_25, window_bounds = array<i64: 1, 256>}, {pipeline_mode = #tpu.pipeline_mode<synchronous>, transform_indices = @transform_26, window_bounds = array<i64: 101, 128>}, {pipeline_mode = #tpu.pipeline_mode<synchronous>, transform_indices = @transform_27, window_bounds = array<i64: 101, 128>}, {pipeline_mode = #tpu.pipeline_mode<synchronous>, transform_indices = @transform_28, window_bounds = array<i64: 101, 128>}, {pipeline_mode = #tpu.pipeline_mode<synchronous>, transform_indices = @transform_29, window_bounds = array<i64: 101, 128>}, {pipeline_mode = #tpu.pipeline_mode<synchronous>, transform_indices = @transform_30, window_bounds = array<i64: 2, 128>}, {pipeline_mode = #tpu.pipeline_mode<synchronous>, transform_indices = @transform_31, window_bounds = array<i64: 2, 128>}, {pipeline_mode = #tpu.pipeline_mode<synchronous>, transform_indices = @transform_32, window_bounds = array<i64: 2, 6, 128>}, {pipeline_mode = #tpu.pipeline_mode<synchronous>, transform_indices = @transform_33, window_bounds = array<i64: 2, 6, 128>}, {pipeline_mode = #tpu.pipeline_mode<synchronous>, transform_indices = @transform_34, window_bounds = array<i64: 2, 101, 128>}, {pipeline_mode = #tpu.pipeline_mode<synchronous>, transform_indices = @transform_35, window_bounds = array<i64: 2, 101, 128>}]} {
    %c0 = arith.constant 0 : index
    %c0_0 = arith.constant 0 : index
    %0 = vector.load %arg1[%c0, %c0_0] : memref<2x256xf32, #tpu.memory_space<vmem>>, vector<2x256xf32>
    %1 = arith.truncf %0 : vector<2x256xf32> to vector<2x256xbf16>
    %c0_1 = arith.constant 0 : index
    %c0_2 = arith.constant 0 : index
    %2 = vector.load %arg7[%c0_1, %c0_2] : memref<256x128xbf16, #tpu.memory_space<vmem>>, vector<256x128xbf16>
    %cst = arith.constant dense<0.000000e+00> : vector<2x128xf32>
    %3 = tpu.matmul %1, %2, %cst {dimension_numbers = #tpu.dot_dimension_numbers<[1], [0], [0], [1], [0, 0, 1, 1], [], []>} : vector<2x256xbf16>, vector<256x128xbf16>, vector<2x128xf32> -> vector<2x128xf32>
    %c0_3 = arith.constant 0 : index
    %c0_4 = arith.constant 0 : index
    %4 = vector.load %arg8[%c0_3, %c0_4] : memref<1x128xf32, #tpu.memory_space<vmem>>, vector<1x128xf32>
    %5 = vector.broadcast %4 : vector<1x128xf32> to vector<2x128xf32>
    %6 = arith.addf %3, %5 : vector<2x128xf32>
    %c0_5 = arith.constant 0 : index
    %c0_6 = arith.constant 0 : index
    %7 = vector.load %arg11[%c0_5, %c0_6] : memref<1x128xf32, #tpu.memory_space<vmem>>, vector<1x128xf32>
    %c0_7 = arith.constant 0 : index
    %c0_8 = arith.constant 0 : index
    %8 = vector.load %arg12[%c0_7, %c0_8] : memref<1x128xf32, #tpu.memory_space<vmem>>, vector<1x128xf32>
    %cst_9 = arith.constant dense<0.000000e+00> : vector<128xf32>
    %9 = vector.multi_reduction <add>, %6, %cst_9 [0] : vector<2x128xf32> to vector<128xf32>
    %10 = vector.shape_cast %9 : vector<128xf32> to vector<1x128xf32>
    %cst_10 = arith.constant 2.000000e+00 : f32
    %11 = vector.broadcast %cst_10 : f32 to vector<1x128xf32>
    %12 = arith.divf %10, %11 : vector<1x128xf32>
    %13 = vector.broadcast %12 : vector<1x128xf32> to vector<2x128xf32>
    %14 = arith.subf %6, %13 : vector<2x128xf32>
    %15 = arith.mulf %14, %14 : vector<2x128xf32>
    %cst_11 = arith.constant dense<0.000000e+00> : vector<128xf32>
    %16 = vector.multi_reduction <add>, %15, %cst_11 [0] : vector<2x128xf32> to vector<128xf32>
    %17 = vector.shape_cast %16 : vector<128xf32> to vector<1x128xf32>
    %cst_12 = arith.constant 2.000000e+00 : f32
    %18 = vector.broadcast %cst_12 : f32 to vector<1x128xf32>
    %19 = arith.divf %17, %18 : vector<1x128xf32>
    %20 = vector.broadcast %12 : vector<1x128xf32> to vector<2x128xf32>
    %21 = arith.subf %6, %20 : vector<2x128xf32>
    %cst_13 = arith.constant 9.99999974E-6 : f32
    %22 = vector.broadcast %cst_13 : f32 to vector<1x128xf32>
    %23 = arith.addf %19, %22 : vector<1x128xf32>
    %24 = math.rsqrt %23 : vector<1x128xf32>
    %25 = vector.broadcast %24 : vector<1x128xf32> to vector<2x128xf32>
    %26 = arith.mulf %21, %25 : vector<2x128xf32>
    %27 = vector.broadcast %7 : vector<1x128xf32> to vector<2x128xf32>
    %28 = arith.mulf %26, %27 : vector<2x128xf32>
    %29 = vector.broadcast %8 : vector<1x128xf32> to vector<2x128xf32>
    %30 = arith.addf %28, %29 : vector<2x128xf32>
    %c0_14 = arith.constant 0 : index
    %c0_15 = arith.constant 0 : index
    %31 = vector.load %arg31[%c0_14, %c0_15] : memref<2x128xf32, #tpu.memory_space<vmem>>, vector<2x128xf32>
    tpu.vector_store %arg31[%c0_14, %c0_15], %30 {strides = array<i32>} : memref<2x128xf32, #tpu.memory_space<vmem>>, vector<2x128xf32>,
    %c0_16 = arith.constant 0 : index
    %c0_17 = arith.constant 0 : index
    %32 = vector.load %arg2[%c0_16, %c0_17] : memref<2x128xf32, #tpu.memory_space<vmem>>, vector<2x128xf32>
    %33 = arith.truncf %32 : vector<2x128xf32> to vector<2x128xbf16>
    %c0_18 = arith.constant 0 : index
    %c0_19 = arith.constant 0 : index
    %34 = vector.load %arg9[%c0_18, %c0_19] : memref<128x128xbf16, #tpu.memory_space<vmem>>, vector<128x128xbf16>
    %cst_20 = arith.constant dense<0.000000e+00> : vector<2x128xf32>
    %35 = tpu.matmul %33, %34, %cst_20 {dimension_numbers = #tpu.dot_dimension_numbers<[1], [0], [0], [1], [0, 0, 1, 1], [], []>} : vector<2x128xbf16>, vector<128x128xbf16>, vector<2x128xf32> -> vector<2x128xf32>
    %c0_21 = arith.constant 0 : index
    %c0_22 = arith.constant 0 : index
    %36 = vector.load %arg10[%c0_21, %c0_22] : memref<1x128xf32, #tpu.memory_space<vmem>>, vector<1x128xf32>
    %37 = vector.broadcast %36 : vector<1x128xf32> to vector<2x128xf32>
    %38 = arith.addf %35, %37 : vector<2x128xf32>
    %c0_23 = arith.constant 0 : index
    %c0_24 = arith.constant 0 : index
    %39 = vector.load %arg13[%c0_23, %c0_24] : memref<1x128xf32, #tpu.memory_space<vmem>>, vector<1x128xf32>
    %c0_25 = arith.constant 0 : index
    %c0_26 = arith.constant 0 : index
    %40 = vector.load %arg14[%c0_25, %c0_26] : memref<1x128xf32, #tpu.memory_space<vmem>>, vector<1x128xf32>
    %cst_27 = arith.constant dense<0.000000e+00> : vector<128xf32>
    %41 = vector.multi_reduction <add>, %38, %cst_27 [0] : vector<2x128xf32> to vector<128xf32>
    %42 = vector.shape_cast %41 : vector<128xf32> to vector<1x128xf32>
    %cst_28 = arith.constant 2.000000e+00 : f32
    %43 = vector.broadcast %cst_28 : f32 to vector<1x128xf32>
    %44 = arith.divf %42, %43 : vector<1x128xf32>
    %45 = vector.broadcast %44 : vector<1x128xf32> to vector<2x128xf32>
    %46 = arith.subf %38, %45 : vector<2x128xf32>
    %47 = arith.mulf %46, %46 : vector<2x128xf32>
    %cst_29 = arith.constant dense<0.000000e+00> : vector<128xf32>
    %48 = vector.multi_reduction <add>, %47, %cst_29 [0] : vector<2x128xf32> to vector<128xf32>
    %49 = vector.shape_cast %48 : vector<128xf32> to vector<1x128xf32>
    %cst_30 = arith.constant 2.000000e+00 : f32
    %50 = vector.broadcast %cst_30 : f32 to vector<1x128xf32>
    %51 = arith.divf %49, %50 : vector<1x128xf32>
    %52 = vector.broadcast %44 : vector<1x128xf32> to vector<2x128xf32>
    %53 = arith.subf %38, %52 : vector<2x128xf32>
    %cst_31 = arith.constant 9.99999974E-6 : f32
    %54 = vector.broadcast %cst_31 : f32 to vector<1x128xf32>
    %55 = arith.addf %51, %54 : vector<1x128xf32>
    %56 = math.rsqrt %55 : vector<1x128xf32>
    %57 = vector.broadcast %56 : vector<1x128xf32> to vector<2x128xf32>
    %58 = arith.mulf %53, %57 : vector<2x128xf32>
    %59 = vector.broadcast %39 : vector<1x128xf32> to vector<2x128xf32>
    %60 = arith.mulf %58, %59 : vector<2x128xf32>
    %61 = vector.broadcast %40 : vector<1x128xf32> to vector<2x128xf32>
    %62 = arith.addf %60, %61 : vector<2x128xf32>
    %c0_32 = arith.constant 0 : index
    %c0_33 = arith.constant 0 : index
    %63 = vector.load %arg32[%c0_32, %c0_33] : memref<2x128xf32, #tpu.memory_space<vmem>>, vector<2x128xf32>
    tpu.vector_store %arg32[%c0_32, %c0_33], %62 {strides = array<i32>} : memref<2x128xf32, #tpu.memory_space<vmem>>, vector<2x128xf32>,
    %64 = arith.truncf %30 : vector<2x128xf32> to vector<2x128xbf16>
    %c0_34 = arith.constant 0 : index
    %c0_35 = arith.constant 0 : index
    %65 = vector.load %arg15[%c0_34, %c0_35] : memref<128x256xbf16, #tpu.memory_space<vmem>>, vector<128x256xbf16>
    %cst_36 = arith.constant dense<0.000000e+00> : vector<2x256xf32>
    %66 = tpu.matmul %64, %65, %cst_36 {dimension_numbers = #tpu.dot_dimension_numbers<[1], [0], [0], [1], [0, 0, 1, 1], [], []>} : vector<2x128xbf16>, vector<128x256xbf16>, vector<2x256xf32> -> vector<2x256xf32>
    %c0_37 = arith.constant 0 : index
    %c0_38 = arith.constant 0 : index
    %67 = vector.load %arg16[%c0_37, %c0_38] : memref<1x256xf32, #tpu.memory_space<vmem>>, vector<1x256xf32>
    %68 = vector.broadcast %67 : vector<1x256xf32> to vector<2x256xf32>
    %69 = arith.addf %66, %68 : vector<2x256xf32>
    %70 = vector.extract_strided_slice %69 {offsets = [0, 0], sizes = [2, 128], strides = [1, 1]} : vector<2x256xf32> to vector<2x128xf32>
    %c0_39 = arith.constant 0 : index
    %c0_40 = arith.constant 0 : index
    %c0_41 = arith.constant 0 : index
    %71 = vector.load %arg33[%c0_39, %c0_40, %c0_41] : memref<2x6x128xf32, #tpu.memory_space<vmem>>, vector<2x1x128xf32>
    %72 = vector.shape_cast %71 : vector<2x1x128xf32> to vector<2x128xf32>
    %73 = vector.shape_cast %70 : vector<2x128xf32> to vector<2x1x128xf32>
    tpu.vector_store %arg33[%c0_39, %c0_40, %c0_41], %73 {strides = array<i32>} : memref<2x6x128xf32, #tpu.memory_space<vmem>>, vector<2x1x128xf32>,
    %74 = vector.extract_strided_slice %69 {offsets = [0, 128], sizes = [2, 128], strides = [1, 1]} : vector<2x256xf32> to vector<2x128xf32>
    %c0_42 = arith.constant 0 : index
    %c0_43 = arith.constant 0 : index
    %c0_44 = arith.constant 0 : index
    %75 = vector.load %arg34[%c0_42, %c0_43, %c0_44] : memref<2x6x128xf32, #tpu.memory_space<vmem>>, vector<2x1x128xf32>
    %76 = vector.shape_cast %75 : vector<2x1x128xf32> to vector<2x128xf32>
    %77 = vector.shape_cast %74 : vector<2x128xf32> to vector<2x1x128xf32>
    tpu.vector_store %arg34[%c0_42, %c0_43, %c0_44], %77 {strides = array<i32>} : memref<2x6x128xf32, #tpu.memory_space<vmem>>, vector<2x1x128xf32>,
    %c0_45 = arith.constant 0 : index
    %c0_46 = arith.constant 0 : index
    %c0_47 = arith.constant 0 : index
    %78 = vector.load %arg5[%c0_45, %c0_46, %c0_47] : memref<2x2x256xf32, #tpu.memory_space<vmem>>, vector<2x2x256xf32>
    %79 = arith.truncf %78 : vector<2x2x256xf32> to vector<2x2x256xbf16>
    %c0_48 = arith.constant 0 : index
    %c0_49 = arith.constant 0 : index
    %c0_50 = arith.constant 0 : index
    %80 = vector.load %arg17[%c0_48, %c0_49, %c0_50] : memref<2x256x128xbf16, #tpu.memory_space<vmem>>, vector<2x256x128xbf16>
    "tpu.trace_start"() <{level = 10 : i32, message = "pbd,pdf->pbf"}> : () -> ()
    %cst_51 = arith.constant dense<0.000000e+00> : vector<2x2x128xf32>
    %81 = tpu.matmul %79, %80, %cst_51 {dimension_numbers = #tpu.dot_dimension_numbers<[2], [1], [1], [2], [0, 0, 0, 1, 1, 2], [0], [0]>} : vector<2x2x256xbf16>, vector<2x256x128xbf16>, vector<2x2x128xf32> -> vector<2x2x128xf32>
    "tpu.trace_stop"() : () -> ()
    %c0_52 = arith.constant 0 : index
    %c0_53 = arith.constant 0 : index
    %c0_54 = arith.constant 0 : index
    %82 = vector.load %arg18[%c0_52, %c0_53, %c0_54] : memref<2x1x128xf32, #tpu.memory_space<vmem>>, vector<2x1x128xf32>
    %83 = vector.broadcast %82 : vector<2x1x128xf32> to vector<2x2x128xf32>
    %84 = arith.addf %81, %83 : vector<2x2x128xf32>
    %85 = arith.truncf %84 : vector<2x2x128xf32> to vector<2x2x128xbf16>
    %c0_55 = arith.constant 0 : index
    %c0_56 = arith.constant 0 : index
    %c0_57 = arith.constant 0 : index
    %86 = vector.load %arg21[%c0_55, %c0_56, %c0_57] : memref<2x128x256xbf16, #tpu.memory_space<vmem>>, vector<2x128x256xbf16>
    "tpu.trace_start"() <{level = 10 : i32, message = "pbf,pfe->pbe"}> : () -> ()
    %cst_58 = arith.constant dense<0.000000e+00> : vector<2x2x256xf32>
    %87 = tpu.matmul %85, %86, %cst_58 {dimension_numbers = #tpu.dot_dimension_numbers<[2], [1], [1], [2], [0, 0, 0, 1, 1, 2], [0], [0]>} : vector<2x2x128xbf16>, vector<2x128x256xbf16>, vector<2x2x256xf32> -> vector<2x2x256xf32>
    "tpu.trace_stop"() : () -> ()
    %c0_59 = arith.constant 0 : index
    %c0_60 = arith.constant 0 : index
    %c0_61 = arith.constant 0 : index
    %88 = vector.load %arg22[%c0_59, %c0_60, %c0_61] : memref<2x1x256xf32, #tpu.memory_space<vmem>>, vector<2x1x256xf32>
    %89 = vector.broadcast %88 : vector<2x1x256xf32> to vector<2x2x256xf32>
    %90 = arith.addf %87, %89 : vector<2x2x256xf32>
    %91 = vector.extract_strided_slice %90 {offsets = [0, 0, 0], sizes = [1, 2, 128], strides = [1, 1, 1]} : vector<2x2x256xf32> to vector<1x2x128xf32>
    %92 = vector.shape_cast %91 : vector<1x2x128xf32> to vector<2x128xf32>
    %c0_62 = arith.constant 0 : index
    %c1 = arith.constant 1 : index
    %c0_63 = arith.constant 0 : index
    %93 = vector.load %arg33[%c0_62, %c1, %c0_63] : memref<2x6x128xf32, #tpu.memory_space<vmem>>, vector<2x1x128xf32>
    %94 = vector.shape_cast %93 : vector<2x1x128xf32> to vector<2x128xf32>
    %95 = vector.shape_cast %92 : vector<2x128xf32> to vector<2x1x128xf32>
    tpu.vector_store %arg33[%c0_62, %c1, %c0_63], %95 {strides = array<i32>} : memref<2x6x128xf32, #tpu.memory_space<vmem>>, vector<2x1x128xf32>,
    %96 = vector.extract_strided_slice %90 {offsets = [0, 0, 128], sizes = [1, 2, 128], strides = [1, 1, 1]} : vector<2x2x256xf32> to vector<1x2x128xf32>
    %97 = vector.shape_cast %96 : vector<1x2x128xf32> to vector<2x128xf32>
    %c0_64 = arith.constant 0 : index
    %c1_65 = arith.constant 1 : index
    %c0_66 = arith.constant 0 : index
    %98 = vector.load %arg34[%c0_64, %c1_65, %c0_66] : memref<2x6x128xf32, #tpu.memory_space<vmem>>, vector<2x1x128xf32>
    %99 = vector.shape_cast %98 : vector<2x1x128xf32> to vector<2x128xf32>
    %100 = vector.shape_cast %97 : vector<2x128xf32> to vector<2x1x128xf32>
    tpu.vector_store %arg34[%c0_64, %c1_65, %c0_66], %100 {strides = array<i32>} : memref<2x6x128xf32, #tpu.memory_space<vmem>>, vector<2x1x128xf32>,
    %101 = vector.extract_strided_slice %90 {offsets = [1, 0, 0], sizes = [1, 2, 128], strides = [1, 1, 1]} : vector<2x2x256xf32> to vector<1x2x128xf32>
    %102 = vector.shape_cast %101 : vector<1x2x128xf32> to vector<2x128xf32>
    %c0_67 = arith.constant 0 : index
    %c2 = arith.constant 2 : index
    %c0_68 = arith.constant 0 : index
    %103 = vector.load %arg33[%c0_67, %c2, %c0_68] : memref<2x6x128xf32, #tpu.memory_space<vmem>>, vector<2x1x128xf32>
    %104 = vector.shape_cast %103 : vector<2x1x128xf32> to vector<2x128xf32>
    %105 = vector.shape_cast %102 : vector<2x128xf32> to vector<2x1x128xf32>
    tpu.vector_store %arg33[%c0_67, %c2, %c0_68], %105 {strides = array<i32>} : memref<2x6x128xf32, #tpu.memory_space<vmem>>, vector<2x1x128xf32>,
    %106 = vector.extract_strided_slice %90 {offsets = [1, 0, 128], sizes = [1, 2, 128], strides = [1, 1, 1]} : vector<2x2x256xf32> to vector<1x2x128xf32>
    %107 = vector.shape_cast %106 : vector<1x2x128xf32> to vector<2x128xf32>
    %c0_69 = arith.constant 0 : index
    %c2_70 = arith.constant 2 : index
    %c0_71 = arith.constant 0 : index
    %108 = vector.load %arg34[%c0_69, %c2_70, %c0_71] : memref<2x6x128xf32, #tpu.memory_space<vmem>>, vector<2x1x128xf32>
    %109 = vector.shape_cast %108 : vector<2x1x128xf32> to vector<2x128xf32>
    %110 = vector.shape_cast %107 : vector<2x128xf32> to vector<2x1x128xf32>
    tpu.vector_store %arg34[%c0_69, %c2_70, %c0_71], %110 {strides = array<i32>} : memref<2x6x128xf32, #tpu.memory_space<vmem>>, vector<2x1x128xf32>,
    %c0_72 = arith.constant 0 : index
    %c0_73 = arith.constant 0 : index
    %c0_74 = arith.constant 0 : index
    %111 = vector.load %arg6[%c0_72, %c0_73, %c0_74] : memref<3x2x256xf32, #tpu.memory_space<vmem>>, vector<3x2x256xf32>
    %112 = arith.truncf %111 : vector<3x2x256xf32> to vector<3x2x256xbf16>
    %c0_75 = arith.constant 0 : index
    %c0_76 = arith.constant 0 : index
    %c0_77 = arith.constant 0 : index
    %113 = vector.load %arg19[%c0_75, %c0_76, %c0_77] : memref<3x256x128xbf16, #tpu.memory_space<vmem>>, vector<3x256x128xbf16>
    "tpu.trace_start"() <{level = 10 : i32, message = "pbd,pdf->pbf"}> : () -> ()
    %cst_78 = arith.constant dense<0.000000e+00> : vector<3x2x128xf32>
    %114 = tpu.matmul %112, %113, %cst_78 {dimension_numbers = #tpu.dot_dimension_numbers<[2], [1], [1], [2], [0, 0, 0, 1, 1, 2], [0], [0]>} : vector<3x2x256xbf16>, vector<3x256x128xbf16>, vector<3x2x128xf32> -> vector<3x2x128xf32>
    "tpu.trace_stop"() : () -> ()
    %c0_79 = arith.constant 0 : index
    %c0_80 = arith.constant 0 : index
    %c0_81 = arith.constant 0 : index
    %115 = vector.load %arg20[%c0_79, %c0_80, %c0_81] : memref<3x1x128xf32, #tpu.memory_space<vmem>>, vector<3x1x128xf32>
    %116 = vector.broadcast %115 : vector<3x1x128xf32> to vector<3x2x128xf32>
    %117 = arith.addf %114, %116 : vector<3x2x128xf32>
    %118 = arith.truncf %117 : vector<3x2x128xf32> to vector<3x2x128xbf16>
    %c0_82 = arith.constant 0 : index
    %c0_83 = arith.constant 0 : index
    %c0_84 = arith.constant 0 : index
    %119 = vector.load %arg23[%c0_82, %c0_83, %c0_84] : memref<3x128x256xbf16, #tpu.memory_space<vmem>>, vector<3x128x256xbf16>
    "tpu.trace_start"() <{level = 10 : i32, message = "pbf,pfe->pbe"}> : () -> ()
    %cst_85 = arith.constant dense<0.000000e+00> : vector<3x2x256xf32>
    %120 = tpu.matmul %118, %119, %cst_85 {dimension_numbers = #tpu.dot_dimension_numbers<[2], [1], [1], [2], [0, 0, 0, 1, 1, 2], [0], [0]>} : vector<3x2x128xbf16>, vector<3x128x256xbf16>, vector<3x2x256xf32> -> vector<3x2x256xf32>
    "tpu.trace_stop"() : () -> ()
    %c0_86 = arith.constant 0 : index
    %c0_87 = arith.constant 0 : index
    %c0_88 = arith.constant 0 : index
    %121 = vector.load %arg24[%c0_86, %c0_87, %c0_88] : memref<3x1x256xf32, #tpu.memory_space<vmem>>, vector<3x1x256xf32>
    %122 = vector.broadcast %121 : vector<3x1x256xf32> to vector<3x2x256xf32>
    %123 = arith.addf %120, %122 : vector<3x2x256xf32>
    %124 = vector.extract_strided_slice %123 {offsets = [0, 0, 0], sizes = [1, 2, 128], strides = [1, 1, 1]} : vector<3x2x256xf32> to vector<1x2x128xf32>
    %125 = vector.shape_cast %124 : vector<1x2x128xf32> to vector<2x128xf32>
    %c0_89 = arith.constant 0 : index
    %c3 = arith.constant 3 : index
    %c0_90 = arith.constant 0 : index
    %126 = vector.load %arg33[%c0_89, %c3, %c0_90] : memref<2x6x128xf32, #tpu.memory_space<vmem>>, vector<2x1x128xf32>
    %127 = vector.shape_cast %126 : vector<2x1x128xf32> to vector<2x128xf32>
    %128 = vector.shape_cast %125 : vector<2x128xf32> to vector<2x1x128xf32>
    tpu.vector_store %arg33[%c0_89, %c3, %c0_90], %128 {strides = array<i32>} : memref<2x6x128xf32, #tpu.memory_space<vmem>>, vector<2x1x128xf32>,
    %129 = vector.extract_strided_slice %123 {offsets = [0, 0, 128], sizes = [1, 2, 128], strides = [1, 1, 1]} : vector<3x2x256xf32> to vector<1x2x128xf32>
    %130 = vector.shape_cast %129 : vector<1x2x128xf32> to vector<2x128xf32>
    %c0_91 = arith.constant 0 : index
    %c3_92 = arith.constant 3 : index
    %c0_93 = arith.constant 0 : index
    %131 = vector.load %arg34[%c0_91, %c3_92, %c0_93] : memref<2x6x128xf32, #tpu.memory_space<vmem>>, vector<2x1x128xf32>
    %132 = vector.shape_cast %131 : vector<2x1x128xf32> to vector<2x128xf32>
    %133 = vector.shape_cast %130 : vector<2x128xf32> to vector<2x1x128xf32>
    tpu.vector_store %arg34[%c0_91, %c3_92, %c0_93], %133 {strides = array<i32>} : memref<2x6x128xf32, #tpu.memory_space<vmem>>, vector<2x1x128xf32>,
    %134 = vector.extract_strided_slice %123 {offsets = [1, 0, 0], sizes = [1, 2, 128], strides = [1, 1, 1]} : vector<3x2x256xf32> to vector<1x2x128xf32>
    %135 = vector.shape_cast %134 : vector<1x2x128xf32> to vector<2x128xf32>
    %c0_94 = arith.constant 0 : index
    %c4 = arith.constant 4 : index
    %c0_95 = arith.constant 0 : index
    %136 = vector.load %arg33[%c0_94, %c4, %c0_95] : memref<2x6x128xf32, #tpu.memory_space<vmem>>, vector<2x1x128xf32>
    %137 = vector.shape_cast %136 : vector<2x1x128xf32> to vector<2x128xf32>
    %138 = vector.shape_cast %135 : vector<2x128xf32> to vector<2x1x128xf32>
    tpu.vector_store %arg33[%c0_94, %c4, %c0_95], %138 {strides = array<i32>} : memref<2x6x128xf32, #tpu.memory_space<vmem>>, vector<2x1x128xf32>,
    %139 = vector.extract_strided_slice %123 {offsets = [1, 0, 128], sizes = [1, 2, 128], strides = [1, 1, 1]} : vector<3x2x256xf32> to vector<1x2x128xf32>
    %140 = vector.shape_cast %139 : vector<1x2x128xf32> to vector<2x128xf32>
    %c0_96 = arith.constant 0 : index
    %c4_97 = arith.constant 4 : index
    %c0_98 = arith.constant 0 : index
    %141 = vector.load %arg34[%c0_96, %c4_97, %c0_98] : memref<2x6x128xf32, #tpu.memory_space<vmem>>, vector<2x1x128xf32>
    %142 = vector.shape_cast %141 : vector<2x1x128xf32> to vector<2x128xf32>
    %143 = vector.shape_cast %140 : vector<2x128xf32> to vector<2x1x128xf32>
    tpu.vector_store %arg34[%c0_96, %c4_97, %c0_98], %143 {strides = array<i32>} : memref<2x6x128xf32, #tpu.memory_space<vmem>>, vector<2x1x128xf32>,
    %144 = vector.extract_strided_slice %123 {offsets = [2, 0, 0], sizes = [1, 2, 128], strides = [1, 1, 1]} : vector<3x2x256xf32> to vector<1x2x128xf32>
    %145 = vector.shape_cast %144 : vector<1x2x128xf32> to vector<2x128xf32>
    %c0_99 = arith.constant 0 : index
    %c5 = arith.constant 5 : index
    %c0_100 = arith.constant 0 : index
    %146 = vector.load %arg33[%c0_99, %c5, %c0_100] : memref<2x6x128xf32, #tpu.memory_space<vmem>>, vector<2x1x128xf32>
    %147 = vector.shape_cast %146 : vector<2x1x128xf32> to vector<2x128xf32>
    %148 = vector.shape_cast %145 : vector<2x128xf32> to vector<2x1x128xf32>
    tpu.vector_store %arg33[%c0_99, %c5, %c0_100], %148 {strides = array<i32>} : memref<2x6x128xf32, #tpu.memory_space<vmem>>, vector<2x1x128xf32>,
    %149 = vector.extract_strided_slice %123 {offsets = [2, 0, 128], sizes = [1, 2, 128], strides = [1, 1, 1]} : vector<3x2x256xf32> to vector<1x2x128xf32>
    %150 = vector.shape_cast %149 : vector<1x2x128xf32> to vector<2x128xf32>
    %c0_101 = arith.constant 0 : index
    %c5_102 = arith.constant 5 : index
    %c0_103 = arith.constant 0 : index
    %151 = vector.load %arg34[%c0_101, %c5_102, %c0_103] : memref<2x6x128xf32, #tpu.memory_space<vmem>>, vector<2x1x128xf32>
    %152 = vector.shape_cast %151 : vector<2x1x128xf32> to vector<2x128xf32>
    %153 = vector.shape_cast %150 : vector<2x128xf32> to vector<2x1x128xf32>
    tpu.vector_store %arg34[%c0_101, %c5_102, %c0_103], %153 {strides = array<i32>} : memref<2x6x128xf32, #tpu.memory_space<vmem>>, vector<2x1x128xf32>,
    %154 = vector.extract_strided_slice %62 {offsets = [0, 0], sizes = [1, 128], strides = [1, 1]} : vector<2x128xf32> to vector<1x128xf32>
    %c0_104 = arith.constant 0 : index
    %c0_105 = arith.constant 0 : index
    %155 = vector.load %arg37[%c0_104, %c0_105] : memref<202x128xf32, #tpu.memory_space<vmem>>, vector<1x128xf32>
    tpu.vector_store %arg37[%c0_104, %c0_105], %154 {strides = array<i32>} : memref<202x128xf32, #tpu.memory_space<vmem>>, vector<1x128xf32>,
    %c0_106 = arith.constant 0 : index
    %c0_107 = arith.constant 0 : index
    %c0_108 = arith.constant 0 : index
    %156 = vector.load %arg3[%c0_106, %c0_107, %c0_108] : memref<2x2x128xf32, #tpu.memory_space<vmem>>, vector<1x2x128xf32>
    %157 = vector.shape_cast %156 : vector<1x2x128xf32> to vector<2x128xf32>
    %c1_109 = arith.constant 1 : index
    %c0_110 = arith.constant 0 : index
    %158 = vector.load %arg37[%c1_109, %c0_110] : memref<202x128xf32, #tpu.memory_space<vmem>>, vector<2x128xf32>
    tpu.vector_store %arg37[%c1_109, %c0_110], %157 {strides = array<i32>} : memref<202x128xf32, #tpu.memory_space<vmem>>, vector<2x128xf32>,
    %c0_111 = arith.constant 0 : index
    %c0_112 = arith.constant 0 : index
    %c0_113 = arith.constant 0 : index
    %159 = vector.load %arg4[%c0_111, %c0_112, %c0_113] : memref<2x98x128xf32, #tpu.memory_space<vmem>>, vector<1x98x128xf32>
    %160 = vector.shape_cast %159 : vector<1x98x128xf32> to vector<98x128xf32>
    %c3_114 = arith.constant 3 : index
    %c0_115 = arith.constant 0 : index
    %161 = vector.load %arg37[%c3_114, %c0_115] : memref<202x128xf32, #tpu.memory_space<vmem>>, vector<98x128xf32>
    tpu.vector_store %arg37[%c3_114, %c0_115], %160 {strides = array<i32>} : memref<202x128xf32, #tpu.memory_space<vmem>>, vector<98x128xf32>,
    %162 = vector.extract_strided_slice %62 {offsets = [1, 0], sizes = [1, 128], strides = [1, 1]} : vector<2x128xf32> to vector<1x128xf32>
    %c101 = arith.constant 101 : index
    %c0_116 = arith.constant 0 : index
    %163 = vector.load %arg37[%c101, %c0_116] : memref<202x128xf32, #tpu.memory_space<vmem>>, vector<1x128xf32>
    tpu.vector_store %arg37[%c101, %c0_116], %162 {strides = array<i32>} : memref<202x128xf32, #tpu.memory_space<vmem>>, vector<1x128xf32>,
    %c1_117 = arith.constant 1 : index
    %c0_118 = arith.constant 0 : index
    %c0_119 = arith.constant 0 : index
    %164 = vector.load %arg3[%c1_117, %c0_118, %c0_119] : memref<2x2x128xf32, #tpu.memory_space<vmem>>, vector<1x2x128xf32>
    %165 = vector.shape_cast %164 : vector<1x2x128xf32> to vector<2x128xf32>
    %c102 = arith.constant 102 : index
    %c0_120 = arith.constant 0 : index
    %166 = vector.load %arg37[%c102, %c0_120] : memref<202x128xf32, #tpu.memory_space<vmem>>, vector<2x128xf32>
    tpu.vector_store %arg37[%c102, %c0_120], %165 {strides = array<i32>} : memref<202x128xf32, #tpu.memory_space<vmem>>, vector<2x128xf32>,
    %c1_121 = arith.constant 1 : index
    %c0_122 = arith.constant 0 : index
    %c0_123 = arith.constant 0 : index
    %167 = vector.load %arg4[%c1_121, %c0_122, %c0_123] : memref<2x98x128xf32, #tpu.memory_space<vmem>>, vector<1x98x128xf32>
    %168 = vector.shape_cast %167 : vector<1x98x128xf32> to vector<98x128xf32>
    %c104 = arith.constant 104 : index
    %c0_124 = arith.constant 0 : index
    %169 = vector.load %arg37[%c104, %c0_124] : memref<202x128xf32, #tpu.memory_space<vmem>>, vector<98x128xf32>
    tpu.vector_store %arg37[%c104, %c0_124], %168 {strides = array<i32>} : memref<202x128xf32, #tpu.memory_space<vmem>>, vector<98x128xf32>,
    %c0_125 = arith.constant 0 : index
    %c0_126 = arith.constant 0 : index
    %170 = vector.load %arg37[%c0_125, %c0_126] : memref<202x128xf32, #tpu.memory_space<vmem>>, vector<202x128xf32>
    %171 = arith.truncf %170 : vector<202x128xf32> to vector<202x128xbf16>
    %c0_127 = arith.constant 0 : index
    %c0_128 = arith.constant 0 : index
    %172 = vector.load %arg25[%c0_127, %c0_128] : memref<128x256xbf16, #tpu.memory_space<vmem>>, vector<128x256xbf16>
    %cst_129 = arith.constant dense<0.000000e+00> : vector<202x256xf32>
    %173 = tpu.matmul %171, %172, %cst_129 {dimension_numbers = #tpu.dot_dimension_numbers<[1], [0], [0], [1], [0, 0, 1, 1], [], []>} : vector<202x128xbf16>, vector<128x256xbf16>, vector<202x256xf32> -> vector<202x256xf32>
    %c0_130 = arith.constant 0 : index
    %c0_131 = arith.constant 0 : index
    %174 = vector.load %arg26[%c0_130, %c0_131] : memref<1x256xf32, #tpu.memory_space<vmem>>, vector<1x256xf32>
    %175 = vector.broadcast %174 : vector<1x256xf32> to vector<202x256xf32>
    %176 = arith.addf %173, %175 : vector<202x256xf32>
    %c0_132 = arith.constant 0 : index
    %c0_133 = arith.constant 0 : index
    %177 = vector.load %arg27[%c0_132, %c0_133] : memref<101x128xf32, #tpu.memory_space<vmem>>, vector<101x128xf32>
    %c0_134 = arith.constant 0 : index
    %c0_135 = arith.constant 0 : index
    %178 = vector.load %arg28[%c0_134, %c0_135] : memref<101x128xf32, #tpu.memory_space<vmem>>, vector<101x128xf32>
    %c0_136 = arith.constant 0 : index
    %c0_137 = arith.constant 0 : index
    %179 = vector.load %arg29[%c0_136, %c0_137] : memref<101x128xf32, #tpu.memory_space<vmem>>, vector<101x128xf32>
    %c0_138 = arith.constant 0 : index
    %c0_139 = arith.constant 0 : index
    %180 = vector.load %arg30[%c0_138, %c0_139] : memref<101x128xf32, #tpu.memory_space<vmem>>, vector<101x128xf32>
    %181 = vector.extract_strided_slice %176 {offsets = [0, 0], sizes = [101, 256], strides = [1, 1]} : vector<202x256xf32> to vector<101x256xf32>
    %182 = vector.extract_strided_slice %181 {offsets = [0, 0], sizes = [101, 128], strides = [1, 1]} : vector<101x256xf32> to vector<101x128xf32>
    %183 = vector.extract_strided_slice %181 {offsets = [0, 128], sizes = [101, 128], strides = [1, 1]} : vector<101x256xf32> to vector<101x128xf32>
    %184 = vector.shape_cast %182 : vector<101x128xf32> to vector<1x101x128xf32>
    %cst_140 = arith.constant dense<0.000000e+00> : vector<1xf32>
    %185 = vector.multi_reduction <add>, %184, %cst_140 [1, 2] : vector<1x101x128xf32> to vector<1xf32>
    %186 = vector.shape_cast %185 : vector<1xf32> to vector<1x1x1xf32>
    %187 = vector.extract %186[0, 0, 0] : f32 from vector<1x1x1xf32>
    %188 = arith.mulf %182, %182 : vector<101x128xf32>
    %189 = vector.shape_cast %188 : vector<101x128xf32> to vector<1x101x128xf32>
    %cst_141 = arith.constant dense<0.000000e+00> : vector<1xf32>
    %190 = vector.multi_reduction <add>, %189, %cst_141 [1, 2] : vector<1x101x128xf32> to vector<1xf32>
    %191 = vector.shape_cast %190 : vector<1xf32> to vector<1x1x1xf32>
    %192 = vector.extract %191[0, 0, 0] : f32 from vector<1x1x1xf32>
    %193 = vector.shape_cast %183 : vector<101x128xf32> to vector<1x101x128xf32>
    %cst_142 = arith.constant dense<0.000000e+00> : vector<1xf32>
    %194 = vector.multi_reduction <add>, %193, %cst_142 [1, 2] : vector<1x101x128xf32> to vector<1xf32>
    %195 = vector.shape_cast %194 : vector<1xf32> to vector<1x1x1xf32>
    %196 = vector.extract %195[0, 0, 0] : f32 from vector<1x1x1xf32>
    %197 = arith.mulf %183, %183 : vector<101x128xf32>
    %198 = vector.shape_cast %197 : vector<101x128xf32> to vector<1x101x128xf32>
    %cst_143 = arith.constant dense<0.000000e+00> : vector<1xf32>
    %199 = vector.multi_reduction <add>, %198, %cst_143 [1, 2] : vector<1x101x128xf32> to vector<1xf32>
    %200 = vector.shape_cast %199 : vector<1xf32> to vector<1x1x1xf32>
    %201 = vector.extract %200[0, 0, 0] : f32 from vector<1x1x1xf32>
    %cst_144 = arith.constant 7.73514839E-5 : f32
    %202 = arith.mulf %187, %cst_144 : f32
    %cst_145 = arith.constant 7.73514839E-5 : f32
    %203 = arith.mulf %192, %cst_145 : f32
    %204 = arith.mulf %202, %202 : f32
    %205 = arith.subf %203, %204 : f32
    %cst_146 = arith.constant 0.000000e+00 : f32
    %206 = arith.maximumf %205, %cst_146 : f32
    %cst_147 = arith.constant 7.73514839E-5 : f32
    %207 = arith.mulf %196, %cst_147 : f32
    %cst_148 = arith.constant 7.73514839E-5 : f32
    %208 = arith.mulf %201, %cst_148 : f32
    %209 = arith.mulf %207, %207 : f32
    %210 = arith.subf %208, %209 : f32
    %cst_149 = arith.constant 0.000000e+00 : f32
    %211 = arith.maximumf %210, %cst_149 : f32
    %212 = vector.broadcast %202 : f32 to vector<101x128xf32>
    %213 = arith.subf %182, %212 : vector<101x128xf32>
    %cst_150 = arith.constant 9.99999974E-6 : f32
    %214 = arith.addf %206, %cst_150 : f32
    %215 = math.rsqrt %214 : f32
    %216 = vector.broadcast %215 : f32 to vector<101x128xf32>
    %217 = arith.mulf %213, %216 : vector<101x128xf32>
    %218 = arith.mulf %217, %177 : vector<101x128xf32>
    %219 = arith.addf %218, %178 : vector<101x128xf32>
    %c0_151 = arith.constant 0 : index
    %c0_152 = arith.constant 0 : index
    %c0_153 = arith.constant 0 : index
    %220 = vector.load %arg35[%c0_151, %c0_152, %c0_153] : memref<2x101x128xf32, #tpu.memory_space<vmem>>, vector<1x101x128xf32>
    %221 = vector.shape_cast %220 : vector<1x101x128xf32> to vector<101x128xf32>
    %222 = vector.shape_cast %219 : vector<101x128xf32> to vector<1x101x128xf32>
    tpu.vector_store %arg35[%c0_151, %c0_152, %c0_153], %222 {strides = array<i32>} : memref<2x101x128xf32, #tpu.memory_space<vmem>>, vector<1x101x128xf32>,
    %223 = vector.broadcast %207 : f32 to vector<101x128xf32>
    %224 = arith.subf %183, %223 : vector<101x128xf32>
    %cst_154 = arith.constant 9.99999974E-6 : f32
    %225 = arith.addf %211, %cst_154 : f32
    %226 = math.rsqrt %225 : f32
    %227 = vector.broadcast %226 : f32 to vector<101x128xf32>
    %228 = arith.mulf %224, %227 : vector<101x128xf32>
    %229 = arith.mulf %228, %179 : vector<101x128xf32>
    %230 = arith.addf %229, %180 : vector<101x128xf32>
    %c0_155 = arith.constant 0 : index
    %c0_156 = arith.constant 0 : index
    %c0_157 = arith.constant 0 : index
    %231 = vector.load %arg36[%c0_155, %c0_156, %c0_157] : memref<2x101x128xf32, #tpu.memory_space<vmem>>, vector<1x101x128xf32>
    %232 = vector.shape_cast %231 : vector<1x101x128xf32> to vector<101x128xf32>
    %233 = vector.shape_cast %230 : vector<101x128xf32> to vector<1x101x128xf32>
    tpu.vector_store %arg36[%c0_155, %c0_156, %c0_157], %233 {strides = array<i32>} : memref<2x101x128xf32, #tpu.memory_space<vmem>>, vector<1x101x128xf32>,
    %234 = vector.extract_strided_slice %176 {offsets = [101, 0], sizes = [101, 256], strides = [1, 1]} : vector<202x256xf32> to vector<101x256xf32>
    %235 = vector.extract_strided_slice %234 {offsets = [0, 0], sizes = [101, 128], strides = [1, 1]} : vector<101x256xf32> to vector<101x128xf32>
    %236 = vector.extract_strided_slice %234 {offsets = [0, 128], sizes = [101, 128], strides = [1, 1]} : vector<101x256xf32> to vector<101x128xf32>
    %237 = vector.shape_cast %235 : vector<101x128xf32> to vector<1x101x128xf32>
    %cst_158 = arith.constant dense<0.000000e+00> : vector<1xf32>
    %238 = vector.multi_reduction <add>, %237, %cst_158 [1, 2] : vector<1x101x128xf32> to vector<1xf32>
    %239 = vector.shape_cast %238 : vector<1xf32> to vector<1x1x1xf32>
    %240 = vector.extract %239[0, 0, 0] : f32 from vector<1x1x1xf32>
    %241 = arith.mulf %235, %235 : vector<101x128xf32>
    %242 = vector.shape_cast %241 : vector<101x128xf32> to vector<1x101x128xf32>
    %cst_159 = arith.constant dense<0.000000e+00> : vector<1xf32>
    %243 = vector.multi_reduction <add>, %242, %cst_159 [1, 2] : vector<1x101x128xf32> to vector<1xf32>
    %244 = vector.shape_cast %243 : vector<1xf32> to vector<1x1x1xf32>
    %245 = vector.extract %244[0, 0, 0] : f32 from vector<1x1x1xf32>
    %246 = vector.shape_cast %236 : vector<101x128xf32> to vector<1x101x128xf32>
    %cst_160 = arith.constant dense<0.000000e+00> : vector<1xf32>
    %247 = vector.multi_reduction <add>, %246, %cst_160 [1, 2] : vector<1x101x128xf32> to vector<1xf32>
    %248 = vector.shape_cast %247 : vector<1xf32> to vector<1x1x1xf32>
    %249 = vector.extract %248[0, 0, 0] : f32 from vector<1x1x1xf32>
    %250 = arith.mulf %236, %236 : vector<101x128xf32>
    %251 = vector.shape_cast %250 : vector<101x128xf32> to vector<1x101x128xf32>
    %cst_161 = arith.constant dense<0.000000e+00> : vector<1xf32>
    %252 = vector.multi_reduction <add>, %251, %cst_161 [1, 2] : vector<1x101x128xf32> to vector<1xf32>
    %253 = vector.shape_cast %252 : vector<1xf32> to vector<1x1x1xf32>
    %254 = vector.extract %253[0, 0, 0] : f32 from vector<1x1x1xf32>
    %cst_162 = arith.constant 7.73514839E-5 : f32
    %255 = arith.mulf %240, %cst_162 : f32
    %cst_163 = arith.constant 7.73514839E-5 : f32
    %256 = arith.mulf %245, %cst_163 : f32
    %257 = arith.mulf %255, %255 : f32
    %258 = arith.subf %256, %257 : f32
    %cst_164 = arith.constant 0.000000e+00 : f32
    %259 = arith.maximumf %258, %cst_164 : f32
    %cst_165 = arith.constant 7.73514839E-5 : f32
    %260 = arith.mulf %249, %cst_165 : f32
    %cst_166 = arith.constant 7.73514839E-5 : f32
    %261 = arith.mulf %254, %cst_166 : f32
    %262 = arith.mulf %260, %260 : f32
    %263 = arith.subf %261, %262 : f32
    %cst_167 = arith.constant 0.000000e+00 : f32
    %264 = arith.maximumf %263, %cst_167 : f32
    %265 = vector.broadcast %255 : f32 to vector<101x128xf32>
    %266 = arith.subf %235, %265 : vector<101x128xf32>
    %cst_168 = arith.constant 9.99999974E-6 : f32
    %267 = arith.addf %259, %cst_168 : f32
    %268 = math.rsqrt %267 : f32
    %269 = vector.broadcast %268 : f32 to vector<101x128xf32>
    %270 = arith.mulf %266, %269 : vector<101x128xf32>
    %271 = arith.mulf %270, %177 : vector<101x128xf32>
    %272 = arith.addf %271, %178 : vector<101x128xf32>
    %c1_169 = arith.constant 1 : index
    %c0_170 = arith.constant 0 : index
    %c0_171 = arith.constant 0 : index
    %273 = vector.load %arg35[%c1_169, %c0_170, %c0_171] : memref<2x101x128xf32, #tpu.memory_space<vmem>>, vector<1x101x128xf32>
    %274 = vector.shape_cast %273 : vector<1x101x128xf32> to vector<101x128xf32>
    %275 = vector.shape_cast %272 : vector<101x128xf32> to vector<1x101x128xf32>
    tpu.vector_store %arg35[%c1_169, %c0_170, %c0_171], %275 {strides = array<i32>} : memref<2x101x128xf32, #tpu.memory_space<vmem>>, vector<1x101x128xf32>,
    %276 = vector.broadcast %260 : f32 to vector<101x128xf32>
    %277 = arith.subf %236, %276 : vector<101x128xf32>
    %cst_172 = arith.constant 9.99999974E-6 : f32
    %278 = arith.addf %264, %cst_172 : f32
    %279 = math.rsqrt %278 : f32
    %280 = vector.broadcast %279 : f32 to vector<101x128xf32>
    %281 = arith.mulf %277, %280 : vector<101x128xf32>
    %282 = arith.mulf %281, %179 : vector<101x128xf32>
    %283 = arith.addf %282, %180 : vector<101x128xf32>
    %c1_173 = arith.constant 1 : index
    %c0_174 = arith.constant 0 : index
    %c0_175 = arith.constant 0 : index
    %284 = vector.load %arg36[%c1_173, %c0_174, %c0_175] : memref<2x101x128xf32, #tpu.memory_space<vmem>>, vector<1x101x128xf32>
    %285 = vector.shape_cast %284 : vector<1x101x128xf32> to vector<101x128xf32>
    %286 = vector.shape_cast %283 : vector<101x128xf32> to vector<1x101x128xf32>
    tpu.vector_store %arg36[%c1_173, %c0_174, %c0_175], %286 {strides = array<i32>} : memref<2x101x128xf32, #tpu.memory_space<vmem>>, vector<1x101x128xf32>,
    return
  }
  func.func @transform_0(%arg0: i32) -> (i32, i32) {
    %c0_i32 = arith.constant 0 : i32
    %c0_i32_0 = arith.constant 0 : i32
    %c0_i32_1 = arith.constant 0 : i32
    return %c0_i32, %c0_i32_0 : i32, i32
  }
  func.func @transform_1(%arg0: i32) -> (i32, i32) {
    %c0_i32 = arith.constant 0 : i32
    %c0_i32_0 = arith.constant 0 : i32
    %c0_i32_1 = arith.constant 0 : i32
    return %c0_i32, %c0_i32_0 : i32, i32
  }
  func.func @transform_2(%arg0: i32) -> (i32, i32, i32) {
    %c0_i32 = arith.constant 0 : i32
    %c0_i32_0 = arith.constant 0 : i32
    %c0_i32_1 = arith.constant 0 : i32
    %c0_i32_2 = arith.constant 0 : i32
    return %c0_i32, %c0_i32_0, %c0_i32_1 : i32, i32, i32
  }
  func.func @transform_3(%arg0: i32) -> (i32, i32, i32) {
    %c0_i32 = arith.constant 0 : i32
    %c0_i32_0 = arith.constant 0 : i32
    %c0_i32_1 = arith.constant 0 : i32
    %c0_i32_2 = arith.constant 0 : i32
    return %c0_i32, %c0_i32_0, %c0_i32_1 : i32, i32, i32
  }
  func.func @transform_4(%arg0: i32) -> (i32, i32, i32) {
    %c0_i32 = arith.constant 0 : i32
    %c0_i32_0 = arith.constant 0 : i32
    %c0_i32_1 = arith.constant 0 : i32
    %c0_i32_2 = arith.constant 0 : i32
    return %c0_i32, %c0_i32_0, %c0_i32_1 : i32, i32, i32
  }
  func.func @transform_5(%arg0: i32) -> (i32, i32, i32) {
    %c0_i32 = arith.constant 0 : i32
    %c0_i32_0 = arith.constant 0 : i32
    %c0_i32_1 = arith.constant 0 : i32
    %c0_i32_2 = arith.constant 0 : i32
    return %c0_i32, %c0_i32_0, %c0_i32_1 : i32, i32, i32
  }
  func.func @transform_6(%arg0: i32) -> (i32, i32) {
    %c0_i32 = arith.constant 0 : i32
    %c0_i32_0 = arith.constant 0 : i32
    %c0_i32_1 = arith.constant 0 : i32
    return %c0_i32, %c0_i32_0 : i32, i32
  }
  func.func @transform_7(%arg0: i32) -> (i32, i32) {
    %c0_i32 = arith.constant 0 : i32
    %c0_i32_0 = arith.constant 0 : i32
    %c0_i32_1 = arith.constant 0 : i32
    return %c0_i32, %c0_i32_0 : i32, i32
  }
  func.func @transform_8(%arg0: i32) -> (i32, i32) {
    %c0_i32 = arith.constant 0 : i32
    %c0_i32_0 = arith.constant 0 : i32
    %c0_i32_1 = arith.constant 0 : i32
    return %c0_i32, %c0_i32_0 : i32, i32
  }
  func.func @transform_9(%arg0: i32) -> (i32, i32) {
    %c0_i32 = arith.constant 0 : i32
    %c0_i32_0 = arith.constant 0 : i32
    %c0_i32_1 = arith.constant 0 : i32
    return %c0_i32, %c0_i32_0 : i32, i32
  }
  func.func @transform_10(%arg0: i32) -> (i32, i32) {
    %c0_i32 = arith.constant 0 : i32
    %c0_i32_0 = arith.constant 0 : i32
    %c0_i32_1 = arith.constant 0 : i32
    return %c0_i32, %c0_i32_0 : i32, i32
  }
  func.func @transform_11(%arg0: i32) -> (i32, i32) {
    %c0_i32 = arith.constant 0 : i32
    %c0_i32_0 = arith.constant 0 : i32
    %c0_i32_1 = arith.constant 0 : i32
    return %c0_i32, %c0_i32_0 : i32, i32
  }
  func.func @transform_12(%arg0: i32) -> (i32, i32) {
    %c0_i32 = arith.constant 0 : i32
    %c0_i32_0 = arith.constant 0 : i32
    %c0_i32_1 = arith.constant 0 : i32
    return %c0_i32, %c0_i32_0 : i32, i32
  }
  func.func @transform_13(%arg0: i32) -> (i32, i32) {
    %c0_i32 = arith.constant 0 : i32
    %c0_i32_0 = arith.constant 0 : i32
    %c0_i32_1 = arith.constant 0 : i32
    return %c0_i32, %c0_i32_0 : i32, i32
  }
  func.func @transform_14(%arg0: i32) -> (i32, i32) {
    %c0_i32 = arith.constant 0 : i32
    %c0_i32_0 = arith.constant 0 : i32
    %c0_i32_1 = arith.constant 0 : i32
    return %c0_i32, %c0_i32_0 : i32, i32
  }
  func.func @transform_15(%arg0: i32) -> (i32, i32) {
    %c0_i32 = arith.constant 0 : i32
    %c0_i32_0 = arith.constant 0 : i32
    %c0_i32_1 = arith.constant 0 : i32
    return %c0_i32, %c0_i32_0 : i32, i32
  }
  func.func @transform_16(%arg0: i32) -> (i32, i32, i32) {
    %c0_i32 = arith.constant 0 : i32
    %c0_i32_0 = arith.constant 0 : i32
    %c0_i32_1 = arith.constant 0 : i32
    %c0_i32_2 = arith.constant 0 : i32
    return %c0_i32, %c0_i32_0, %c0_i32_1 : i32, i32, i32
  }
  func.func @transform_17(%arg0: i32) -> (i32, i32, i32) {
    %c0_i32 = arith.constant 0 : i32
    %c0_i32_0 = arith.constant 0 : i32
    %c0_i32_1 = arith.constant 0 : i32
    %c0_i32_2 = arith.constant 0 : i32
    return %c0_i32, %c0_i32_0, %c0_i32_1 : i32, i32, i32
  }
  func.func @transform_18(%arg0: i32) -> (i32, i32, i32) {
    %c0_i32 = arith.constant 0 : i32
    %c0_i32_0 = arith.constant 0 : i32
    %c0_i32_1 = arith.constant 0 : i32
    %c0_i32_2 = arith.constant 0 : i32
    return %c0_i32, %c0_i32_0, %c0_i32_1 : i32, i32, i32
  }
  func.func @transform_19(%arg0: i32) -> (i32, i32, i32) {
    %c0_i32 = arith.constant 0 : i32
    %c0_i32_0 = arith.constant 0 : i32
    %c0_i32_1 = arith.constant 0 : i32
    %c0_i32_2 = arith.constant 0 : i32
    return %c0_i32, %c0_i32_0, %c0_i32_1 : i32, i32, i32
  }
  func.func @transform_20(%arg0: i32) -> (i32, i32, i32) {
    %c0_i32 = arith.constant 0 : i32
    %c0_i32_0 = arith.constant 0 : i32
    %c0_i32_1 = arith.constant 0 : i32
    %c0_i32_2 = arith.constant 0 : i32
    return %c0_i32, %c0_i32_0, %c0_i32_1 : i32, i32, i32
  }
  func.func @transform_21(%arg0: i32) -> (i32, i32, i32) {
    %c0_i32 = arith.constant 0 : i32
    %c0_i32_0 = arith.constant 0 : i32
    %c0_i32_1 = arith.constant 0 : i32
    %c0_i32_2 = arith.constant 0 : i32
    return %c0_i32, %c0_i32_0, %c0_i32_1 : i32, i32, i32
  }
  func.func @transform_22(%arg0: i32) -> (i32, i32, i32) {
    %c0_i32 = arith.constant 0 : i32
    %c0_i32_0 = arith.constant 0 : i32
    %c0_i32_1 = arith.constant 0 : i32
    %c0_i32_2 = arith.constant 0 : i32
    return %c0_i32, %c0_i32_0, %c0_i32_1 : i32, i32, i32
  }
  func.func @transform_23(%arg0: i32) -> (i32, i32, i32) {
    %c0_i32 = arith.constant 0 : i32
    %c0_i32_0 = arith.constant 0 : i32
    %c0_i32_1 = arith.constant 0 : i32
    %c0_i32_2 = arith.constant 0 : i32
    return %c0_i32, %c0_i32_0, %c0_i32_1 : i32, i32, i32
  }
  func.func @transform_24(%arg0: i32) -> (i32, i32) {
    %c0_i32 = arith.constant 0 : i32
    %c0_i32_0 = arith.constant 0 : i32
    %c0_i32_1 = arith.constant 0 : i32
    return %c0_i32, %c0_i32_0 : i32, i32
  }
  func.func @transform_25(%arg0: i32) -> (i32, i32) {
    %c0_i32 = arith.constant 0 : i32
    %c0_i32_0 = arith.constant 0 : i32
    %c0_i32_1 = arith.constant 0 : i32
    return %c0_i32, %c0_i32_0 : i32, i32
  }
  func.func @transform_26(%arg0: i32) -> (i32, i32) {
    %c0_i32 = arith.constant 0 : i32
    %c0_i32_0 = arith.constant 0 : i32
    %c0_i32_1 = arith.constant 0 : i32
    return %c0_i32, %c0_i32_0 : i32, i32
  }
  func.func @transform_27(%arg0: i32) -> (i32, i32) {
    %c0_i32 = arith.constant 0 : i32
    %c0_i32_0 = arith.constant 0 : i32
    %c0_i32_1 = arith.constant 0 : i32
    return %c0_i32, %c0_i32_0 : i32, i32
  }
  func.func @transform_28(%arg0: i32) -> (i32, i32) {
    %c0_i32 = arith.constant 0 : i32
    %c0_i32_0 = arith.constant 0 : i32
    %c0_i32_1 = arith.constant 0 : i32
    return %c0_i32, %c0_i32_0 : i32, i32
  }
  func.func @transform_29(%arg0: i32) -> (i32, i32) {
    %c0_i32 = arith.constant 0 : i32
    %c0_i32_0 = arith.constant 0 : i32
    %c0_i32_1 = arith.constant 0 : i32
    return %c0_i32, %c0_i32_0 : i32, i32
  }
  func.func @transform_30(%arg0: i32) -> (i32, i32) {
    %c0_i32 = arith.constant 0 : i32
    %c0_i32_0 = arith.constant 0 : i32
    %c0_i32_1 = arith.constant 0 : i32
    return %c0_i32, %c0_i32_0 : i32, i32
  }
  func.func @transform_31(%arg0: i32) -> (i32, i32) {
    %c0_i32 = arith.constant 0 : i32
    %c0_i32_0 = arith.constant 0 : i32
    %c0_i32_1 = arith.constant 0 : i32
    return %c0_i32, %c0_i32_0 : i32, i32
  }
  func.func @transform_32(%arg0: i32) -> (i32, i32, i32) {
    %c0_i32 = arith.constant 0 : i32
    %c0_i32_0 = arith.constant 0 : i32
    %c0_i32_1 = arith.constant 0 : i32
    %c0_i32_2 = arith.constant 0 : i32
    return %c0_i32, %c0_i32_0, %c0_i32_1 : i32, i32, i32
  }
  func.func @transform_33(%arg0: i32) -> (i32, i32, i32) {
    %c0_i32 = arith.constant 0 : i32
    %c0_i32_0 = arith.constant 0 : i32
    %c0_i32_1 = arith.constant 0 : i32
    %c0_i32_2 = arith.constant 0 : i32
    return %c0_i32, %c0_i32_0, %c0_i32_1 : i32, i32, i32
  }
  func.func @transform_34(%arg0: i32) -> (i32, i32, i32) {
    %c0_i32 = arith.constant 0 : i32
    %c0_i32_0 = arith.constant 0 : i32
    %c0_i32_1 = arith.constant 0 : i32
    %c0_i32_2 = arith.constant 0 : i32
    return %c0_i32, %c0_i32_0, %c0_i32_1 : i32, i32, i32
  }
  func.func @transform_35(%arg0: i32) -> (i32, i32, i32) {
    %c0_i32 = arith.constant 0 : i32
    %c0_i32_0 = arith.constant 0 : i32
    %c0_i32_1 = arith.constant 0 : i32
    %c0_i32_2 = arith.constant 0 : i32
    return %c0_i32, %c0_i32_0, %c0_i32_1 : i32, i32, i32
  }
}

</mosaic_0001>

<llo_original>
// kernel: forward.1
$region0: #{forward.1}
  #allocation0 [shape = 'u32[]', space=smem, size = 0x4, offset = 0x4, fixed_abs, tag = 'smem constant byte address 0x4 - core index']
  #allocation1 [shape = 'u32[72,128]{1,0:T(1,128)}', space=vmem, size = 0x9000, scoped, tag = 'internal scratch']
  #allocation2 [shape = 'f32[202,128]{1,0:T(8,128)}', space=vmem, size = 0x1a000, scoped, tag = 'scratch operand']
  %s0 = inlined_call_operand.smem [shape: u32[36], index: -1, kind: input, shape index: {}]
  %s1 = sld [smem:[%s0]]
  %s2 = scalar_lea.smem %s0, 1
  %s3 = sld [smem:[%s2]]
  %s4 = scalar_lea.smem %s0, 2
  %s5 = sld [smem:[%s4]]
  %s6 = scalar_lea.smem %s0, 3
  %s7 = sld [smem:[%s6]]
  %s8 = scalar_lea.smem %s0, 4
  %s9 = sld [smem:[%s8]]
  %s10 = scalar_lea.smem %s0, 5
  %s11 = sld [smem:[%s10]]
  %s12 = scalar_lea.smem %s0, 6
  %s13 = sld [smem:[%s12]]
  %s14 = scalar_lea.smem %s0, 7
  %s15 = sld [smem:[%s14]]
  %s16 = scalar_lea.smem %s0, 8
  %s17 = sld [smem:[%s16]]
  %s18 = scalar_lea.smem %s0, 9
  %s19 = sld [smem:[%s18]]
  %s20 = scalar_lea.smem %s0, 10
  %s21 = sld [smem:[%s20]]
  %s22 = scalar_lea.smem %s0, 11
  %s23 = sld [smem:[%s22]]
  %s24 = scalar_lea.smem %s0, 12
  %s25 = sld [smem:[%s24]]
  %s26 = scalar_lea.smem %s0, 13
  %s27 = sld [smem:[%s26]]
  %s28 = scalar_lea.smem %s0, 14
  %s29 = sld [smem:[%s28]]
  %s30 = scalar_lea.smem %s0, 15
  %s31 = sld [smem:[%s30]]
  %s32 = scalar_lea.smem %s0, 16
  %s33 = sld [smem:[%s32]]
  %s34 = scalar_lea.smem %s0, 17
  %s35 = sld [smem:[%s34]]
  %s36 = scalar_lea.smem %s0, 18
  %s37 = sld [smem:[%s36]]
  %s38 = scalar_lea.smem %s0, 19
  %s39 = sld [smem:[%s38]]
  %s40 = scalar_lea.smem %s0, 20
  %s41 = sld [smem:[%s40]]
  %s42 = scalar_lea.smem %s0, 21
  %s43 = sld [smem:[%s42]]
  %s44 = scalar_lea.smem %s0, 22
  %s45 = sld [smem:[%s44]]
  %s46 = scalar_lea.smem %s0, 23
  %s47 = sld [smem:[%s46]]
  %s48 = scalar_lea.smem %s0, 24
  %s49 = sld [smem:[%s48]]
  %s50 = scalar_lea.smem %s0, 25
  %s51 = sld [smem:[%s50]]
  %s52 = scalar_lea.smem %s0, 26
  %s53 = sld [smem:[%s52]]
  %s54 = scalar_lea.smem %s0, 27
  %s55 = sld [smem:[%s54]]
  %s56 = scalar_lea.smem %s0, 28
  %s57 = sld [smem:[%s56]]
  %s58 = scalar_lea.smem %s0, 29
  %s59 = sld [smem:[%s58]]
  %s60 = scalar_lea.smem %s0, 30
  %s61 = sld [smem:[%s60]]
  %s62 = scalar_lea.smem %s0, 31
  %s63 = sld [smem:[%s62]]
  %s64 = scalar_lea.smem %s0, 32
  %s65 = sld [smem:[%s64]]
  %s66 = scalar_lea.smem %s0, 33
  %s67 = sld [smem:[%s66]]
  %s68 = scalar_lea.smem %s0, 34
  %s69 = sld [smem:[%s68]]
  %s70 = scalar_lea.smem %s0, 35
  %s71 = sld [smem:[%s70]]
  %72 = xla_tuple %s61, %s63, %s65, %s67, %s69, %s71
  %s73 = sld [smem:[#allocation0]]
  $region254: #{forward.1} parent=0
    _
  %s75 = ssub.s32 1, %s73
  %s76 = scalar_select 0, %s75, %s73
  $region1: #{forward.1} parent=0
    #allocation3 [shape = 'u8[65536]{0}', space=vmem, size = 0x10000, scoped, tag = 'input window, operand 6, single buffered']
    #allocation4 [shape = 's32[1]{0}', space=sflag, size = 0x4, scoped, tag = 'scoped memory for forward.1']
    #allocation5 [shape = 's32[1]{0}', space=sflag, size = 0x4, scoped, tag = 'scoped memory for forward.1']
    #allocation6 [shape = 'u8[32768]{0}', space=vmem, size = 0x8000, scoped, tag = 'input window, operand 8, single buffered']
    #allocation7 [shape = 's32[1]{0}', space=sflag, size = 0x4, scoped, tag = 'scoped memory for forward.1']
    #allocation8 [shape = 'u8[512]{0}', space=vmem, size = 0x400, scoped, tag = 'input window, operand 9, single buffered']
    #allocation9 [shape = 'u8[512]{0}', space=vmem, size = 0x400, scoped, tag = 'input window, operand 10, single buffered']
    #allocation10 [shape = 's32[1]{0}', space=sflag, size = 0x4, scoped, tag = 'scoped memory for forward.1']
    #allocation11 [shape = 'u8[512]{0}', space=vmem, size = 0x400, scoped, tag = 'input window, operand 11, single buffered']
    #allocation12 [shape = 'u8[512]{0}', space=vmem, size = 0x400, scoped, tag = 'input window, operand 12, single buffered']
    #allocation13 [shape = 's32[1]{0}', space=sflag, size = 0x4, scoped, tag = 'scoped memory for forward.1']
    #allocation14 [shape = 'u8[512]{0}', space=vmem, size = 0x400, scoped, tag = 'input window, operand 13, single buffered']
    #allocation15 [shape = 'u8[65536]{0}', space=vmem, size = 0x10000, scoped, tag = 'input window, operand 14, single buffered']
    #allocation16 [shape = 's32[1]{0}', space=sflag, size = 0x4, scoped, tag = 'scoped memory for forward.1']
    #allocation17 [shape = 'u8[1024]{0}', space=vmem, size = 0x400, scoped, tag = 'input window, operand 15, single buffered']
    #allocation18 [shape = 'u8[131072]{0}', space=vmem, size = 0x20000, scoped, tag = 'input window, operand 16, single buffered']
    #allocation19 [shape = 's32[1]{0}', space=sflag, size = 0x4, scoped, tag = 'scoped memory for forward.1']
    #allocation20 [shape = 'u8[1024]{0}', space=vmem, size = 0x400, scoped, tag = 'input window, operand 17, single buffered']
    #allocation21 [shape = 'u8[1536]{0}', space=vmem, size = 0x800, scoped, tag = 'input window, operand 19, single buffered']
    #allocation22 [shape = 's32[1]{0}', space=sflag, size = 0x4, scoped, tag = 'scoped memory for forward.1']
    #allocation23 [shape = 'u8[131072]{0}', space=vmem, size = 0x20000, scoped, tag = 'input window, operand 20, single buffered']
    #allocation24 [shape = 'u8[2048]{0}', space=vmem, size = 0x800, scoped, tag = 'input window, operand 21, single buffered']
    #allocation25 [shape = 's32[1]{0}', space=sflag, size = 0x4, scoped, tag = 'scoped memory for forward.1']
    #allocation26 [shape = 'u8[196608]{0}', space=vmem, size = 0x30000, scoped, tag = 'input window, operand 22, single buffered']
    #allocation27 [shape = 'u8[65536]{0}', space=vmem, size = 0x10000, scoped, tag = 'input window, operand 24, single buffered']
    #allocation28 [shape = 's32[1]{0}', space=sflag, size = 0x4, scoped, tag = 'scoped memory for forward.1']
    #allocation29 [shape = 'u8[1024]{0}', space=vmem, size = 0x400, scoped, tag = 'input window, operand 25, single buffered']
    #allocation30 [shape = 'u8[53248]{0}', space=vmem, size = 0xd000, scoped, tag = 'input window, operand 26, single buffered']
    #allocation31 [shape = 's32[1]{0}', space=sflag, size = 0x4, scoped, tag = 'scoped memory for forward.1']
    #allocation32 [shape = 'u8[53248]{0}', space=vmem, size = 0xd000, scoped, tag = 'input window, operand 27, single buffered']
    #allocation33 [shape = 'u8[53248]{0}', space=vmem, size = 0xd000, scoped, tag = 'input window, operand 28, single buffered']
    #allocation34 [shape = 's32[1]{0}', space=sflag, size = 0x4, scoped, tag = 'scoped memory for forward.1']
    #allocation35 [shape = 'u8[53248]{0}', space=vmem, size = 0xd000, scoped, tag = 'input window, operand 29, single buffered']
    #allocation36 [shape = 'u8[1024]{0}', space=vmem, size = 0x400, scoped, tag = 'output window, operand 0, single buffered']
    #allocation37 [shape = 'u8[1024]{0}', space=vmem, size = 0x400, scoped, tag = 'output window, operand 1, single buffered']
    #allocation38 [shape = 's32[1]{0}', space=sflag, size = 0x4, scoped, tag = 'scoped memory for forward.1']
    %77 = vsyncpa [#allocation4], 0
    %78 = vsyncpa [#allocation7], 0
    %79 = vsyncpa [#allocation10], 0
    %80 = vsyncpa [#allocation13], 0
    %81 = vsyncpa [#allocation16], 0
    %82 = vsyncpa [#allocation19], 0
    %83 = vsyncpa [#allocation22], 0
    %84 = vsyncpa [#allocation25], 0
    %85 = vsyncpa [#allocation28], 0
    %86 = vsyncpa [#allocation31], 0
    %87 = vsyncpa [#allocation34], 0
    %88 = vsyncpa [#allocation5], 0
    %89 = vsyncpa [#allocation38], 0
    // Predicated region
    $region2: #{forward.1} parent=1 // pred_check
      _
    $region3: #{forward.1} parent=1 // pred_check_branch
      %91 = sbr.rel (0) target = $region5
    $region4: #{forward.1} parent=1 // pred_region
      _
    $region5: #{forward.1} parent=1 // pred_fallthru
      _
    // Predicated region
    $region6: #{forward.1} parent=1 // pred_check
      _
    $region7: #{forward.1} parent=1 // pred_check_branch
      %93 = sbr.rel (0) target = $region9
    $region8: #{forward.1} parent=1 // pred_region
      _
    $region9: #{forward.1} parent=1 // pred_fallthru
      _
    // Predicated region
    $region10: #{forward.1} parent=1 // pred_check
      _
    $region11: #{forward.1} parent=1 // pred_check_branch
      %95 = sbr.rel (0) target = $region13
    $region12: #{forward.1} parent=1 // pred_region
      _
    $region13: #{forward.1} parent=1 // pred_fallthru
      _
    // Predicated region
    $region14: #{forward.1} parent=1 // pred_check
      _
    $region15: #{forward.1} parent=1 // pred_check_branch
      %97 = sbr.rel (0) target = $region17
    $region16: #{forward.1} parent=1 // pred_region
      _
    $region17: #{forward.1} parent=1 // pred_fallthru
      _
    // Predicated region
    $region18: #{forward.1} parent=1 // pred_check
      _
    $region19: #{forward.1} parent=1 // pred_check_branch
      %99 = sbr.rel (0) target = $region21
    $region20: #{forward.1} parent=1 // pred_region
      _
    $region21: #{forward.1} parent=1 // pred_fallthru
      _
    // Predicated region
    $region22: #{forward.1} parent=1 // pred_check
      _
    $region23: #{forward.1} parent=1 // pred_check_branch
      %101 = sbr.rel (0) target = $region25
    $region24: #{forward.1} parent=1 // pred_region
      _
    $region25: #{forward.1} parent=1 // pred_fallthru
      _
    // Predicated region
    $region26: #{forward.1} parent=1 // pred_check
      _
    $region27: #{forward.1} parent=1 // pred_check_branch
      %103 = sbr.rel (0) target = $region29
    $region28: #{forward.1} parent=1 // pred_region
      %105 = vsyncadd [#allocation4], 0
      %s106 = sshll.u32 %s13, 4
      %s107 = int_to_ptr.hbm [resolvable:$true] %s106
      %s108 = sshll.u32 [#allocation3], 4
      %s109 = int_to_ptr.vmem [resolvable:$true] %s108
      %114 = dma.hbm_to_vmem [thread:$0]  %s107, 2048, %s109, [#allocation4], 64, 64, 4
    $region29: #{forward.1} parent=1 // pred_fallthru
      _
    // Predicated region
    $region30: #{forward.1} parent=1 // pred_check
      _
    $region31: #{forward.1} parent=1 // pred_check_branch
      %116 = sbr.rel (0) target = $region33
    $region32: #{forward.1} parent=1 // pred_region
      _
    $region33: #{forward.1} parent=1 // pred_fallthru
      _
    // Predicated region
    $region34: #{forward.1} parent=1 // pred_check
      _
    $region35: #{forward.1} parent=1 // pred_check_branch
      %118 = sbr.rel (0) target = $region37
    $region36: #{forward.1} parent=1 // pred_region
      %120 = vsyncadd [#allocation7], 0
      %s121 = sshll.u32 %s17, 4
      %s122 = int_to_ptr.hbm [resolvable:$true] %s121
      %s123 = sshll.u32 [#allocation6], 4
      %s124 = int_to_ptr.vmem [resolvable:$true] %s123
      %129 = dma.hbm_to_vmem [thread:$0]  %s122, 1024, %s124, [#allocation7], 64, 64, 4
    $region37: #{forward.1} parent=1 // pred_fallthru
      _
    // Predicated region
    $region38: #{forward.1} parent=1 // pred_check
      _
    $region39: #{forward.1} parent=1 // pred_check_branch
      %131 = sbr.rel (0) target = $region41
    $region40: #{forward.1} parent=1 // pred_region
      %133 = vsyncadd [#allocation7], 0
      %s135 = sshll.u32 %s19, 4
      %s136 = int_to_ptr.hbm [resolvable:$true] %s135
      %s137 = sshll.u32 [#allocation8], 4
      %s138 = int_to_ptr.vmem [resolvable:$true] %s137
      %140 = dma.hbm_to_vmem [thread:$0]  %s136, 16, %s138, [#allocation7]
    $region41: #{forward.1} parent=1 // pred_fallthru
      _
    // Predicated region
    $region42: #{forward.1} parent=1 // pred_check
      _
    $region43: #{forward.1} parent=1 // pred_check_branch
      %142 = sbr.rel (0) target = $region45
    $region44: #{forward.1} parent=1 // pred_region
      %144 = vsyncadd [#allocation10], 0
      %s146 = sshll.u32 %s21, 4
      %s147 = int_to_ptr.hbm [resolvable:$true] %s146
      %s148 = sshll.u32 [#allocation9], 4
      %s149 = int_to_ptr.vmem [resolvable:$true] %s148
      %151 = dma.hbm_to_vmem [thread:$0]  %s147, 16, %s149, [#allocation10]
    $region45: #{forward.1} parent=1 // pred_fallthru
      _
    // Predicated region
    $region46: #{forward.1} parent=1 // pred_check
      _
    $region47: #{forward.1} parent=1 // pred_check_branch
      %153 = sbr.rel (0) target = $region49
    $region48: #{forward.1} parent=1 // pred_region
      %155 = vsyncadd [#allocation10], 0
      %s157 = sshll.u32 %s23, 4
      %s158 = int_to_ptr.hbm [resolvable:$true] %s157
      %s159 = sshll.u32 [#allocation11], 4
      %s160 = int_to_ptr.vmem [resolvable:$true] %s159
      %162 = dma.hbm_to_vmem [thread:$0]  %s158, 16, %s160, [#allocation10]
    $region49: #{forward.1} parent=1 // pred_fallthru
      _
    // Predicated region
    $region50: #{forward.1} parent=1 // pred_check
      _
    $region51: #{forward.1} parent=1 // pred_check_branch
      %164 = sbr.rel (0) target = $region53
    $region52: #{forward.1} parent=1 // pred_region
      %166 = vsyncadd [#allocation13], 0
      %s168 = sshll.u32 %s25, 4
      %s169 = int_to_ptr.hbm [resolvable:$true] %s168
      %s170 = sshll.u32 [#allocation12], 4
      %s171 = int_to_ptr.vmem [resolvable:$true] %s170
      %173 = dma.hbm_to_vmem [thread:$0]  %s169, 16, %s171, [#allocation13]
    $region53: #{forward.1} parent=1 // pred_fallthru
      _
    // Predicated region
    $region54: #{forward.1} parent=1 // pred_check
      _
    $region55: #{forward.1} parent=1 // pred_check_branch
      %175 = sbr.rel (0) target = $region57
    $region56: #{forward.1} parent=1 // pred_region
      %177 = vsyncadd [#allocation13], 0
      %s179 = sshll.u32 %s27, 4
      %s180 = int_to_ptr.hbm [resolvable:$true] %s179
      %s181 = sshll.u32 [#allocation14], 4
      %s182 = int_to_ptr.vmem [resolvable:$true] %s181
      %184 = dma.hbm_to_vmem [thread:$0]  %s180, 16, %s182, [#allocation13]
    $region57: #{forward.1} parent=1 // pred_fallthru
      _
    // Predicated region
    $region58: #{forward.1} parent=1 // pred_check
      _
    $region59: #{forward.1} parent=1 // pred_check_branch
      %186 = sbr.rel (0) target = $region61
    $region60: #{forward.1} parent=1 // pred_region
      %188 = vsyncadd [#allocation16], 0
      %s189 = sshll.u32 %s29, 4
      %s190 = int_to_ptr.hbm [resolvable:$true] %s189
      %s191 = sshll.u32 [#allocation15], 4
      %s192 = int_to_ptr.vmem [resolvable:$true] %s191
      %197 = dma.hbm_to_vmem [thread:$0]  %s190, 2048, %s192, [#allocation16], 128, 128, 8
    $region61: #{forward.1} parent=1 // pred_fallthru
      _
    // Predicated region
    $region62: #{forward.1} parent=1 // pred_check
      _
    $region63: #{forward.1} parent=1 // pred_check_branch
      %199 = sbr.rel (0) target = $region65
    $region64: #{forward.1} parent=1 // pred_region
      %201 = vsyncadd [#allocation16], 0
      %s203 = sshll.u32 %s31, 4
      %s204 = int_to_ptr.hbm [resolvable:$true] %s203
      %s205 = sshll.u32 [#allocation17], 4
      %s206 = int_to_ptr.vmem [resolvable:$true] %s205
      %208 = dma.hbm_to_vmem [thread:$0]  %s204, 32, %s206, [#allocation16]
    $region65: #{forward.1} parent=1 // pred_fallthru
      _
    // Predicated region
    $region66: #{forward.1} parent=1 // pred_check
      _
    $region67: #{forward.1} parent=1 // pred_check_branch
      %210 = sbr.rel (0) target = $region69
    $region68: #{forward.1} parent=1 // pred_region
      %212 = vsyncadd [#allocation19], 0
      %s213 = sshll.u32 %s33, 4
      %s214 = int_to_ptr.hbm [resolvable:$true] %s213
      %s215 = sshll.u32 [#allocation18], 4
      %s216 = int_to_ptr.vmem [resolvable:$true] %s215
      %221 = dma.hbm_to_vmem [thread:$0]  %s214, 4096, %s216, [#allocation19], 64, 64, 4
    $region69: #{forward.1} parent=1 // pred_fallthru
      _
    // Predicated region
    $region70: #{forward.1} parent=1 // pred_check
      _
    $region71: #{forward.1} parent=1 // pred_check_branch
      %223 = sbr.rel (0) target = $region73
    $region72: #{forward.1} parent=1 // pred_region
      %225 = vsyncadd [#allocation19], 0
      %s226 = sshll.u32 %s35, 4
      %s227 = int_to_ptr.hbm [resolvable:$true] %s226
      %s228 = sshll.u32 [#allocation20], 4
      %s229 = int_to_ptr.vmem [resolvable:$true] %s228
      %234 = dma.hbm_to_vmem [thread:$0]  %s227, 32, %s229, [#allocation19], 16, 16, 1
    $region73: #{forward.1} parent=1 // pred_fallthru
      _
    // Predicated region
    $region74: #{forward.1} parent=1 // pred_check
      _
    $region75: #{forward.1} parent=1 // pred_check_branch
      %236 = sbr.rel (0) target = $region77
    $region76: #{forward.1} parent=1 // pred_region
      _
    $region77: #{forward.1} parent=1 // pred_fallthru
      _
    // Predicated region
    $region78: #{forward.1} parent=1 // pred_check
      _
    $region79: #{forward.1} parent=1 // pred_check_branch
      %238 = sbr.rel (0) target = $region81
    $region80: #{forward.1} parent=1 // pred_region
      %240 = vsyncadd [#allocation22], 0
      %s241 = sshll.u32 %s39, 4
      %s242 = int_to_ptr.hbm [resolvable:$true] %s241
      %s243 = sshll.u32 [#allocation21], 4
      %s244 = int_to_ptr.vmem [resolvable:$true] %s243
      %249 = dma.hbm_to_vmem [thread:$0]  %s242, 48, %s244, [#allocation22], 16, 16, 1
    $region81: #{forward.1} parent=1 // pred_fallthru
      _
    // Predicated region
    $region82: #{forward.1} parent=1 // pred_check
      _
    $region83: #{forward.1} parent=1 // pred_check_branch
      %251 = sbr.rel (0) target = $region85
    $region84: #{forward.1} parent=1 // pred_region
      %253 = vsyncadd [#allocation22], 0
      %s254 = sshll.u32 %s41, 4
      %s255 = int_to_ptr.hbm [resolvable:$true] %s254
      %s256 = sshll.u32 [#allocation23], 4
      %s257 = int_to_ptr.vmem [resolvable:$true] %s256
      %262 = dma.hbm_to_vmem [thread:$0]  %s255, 4096, %s257, [#allocation22], 128, 128, 8
    $region85: #{forward.1} parent=1 // pred_fallthru
      _
    // Predicated region
    $region86: #{forward.1} parent=1 // pred_check
      _
    $region87: #{forward.1} parent=1 // pred_check_branch
      %264 = sbr.rel (0) target = $region89
    $region88: #{forward.1} parent=1 // pred_region
      %266 = vsyncadd [#allocation25], 0
      %s267 = sshll.u32 %s43, 4
      %s268 = int_to_ptr.hbm [resolvable:$true] %s267
      %s269 = sshll.u32 [#allocation24], 4
      %s270 = int_to_ptr.vmem [resolvable:$true] %s269
      %275 = dma.hbm_to_vmem [thread:$0]  %s268, 64, %s270, [#allocation25], 32, 32, 2
    $region89: #{forward.1} parent=1 // pred_fallthru
      _
    // Predicated region
    $region90: #{forward.1} parent=1 // pred_check
      _
    $region91: #{forward.1} parent=1 // pred_check_branch
      %277 = sbr.rel (0) target = $region93
    $region92: #{forward.1} parent=1 // pred_region
      %279 = vsyncadd [#allocation25], 0
      %s280 = sshll.u32 %s45, 4
      %s281 = int_to_ptr.hbm [resolvable:$true] %s280
      %s282 = sshll.u32 [#allocation26], 4
      %s283 = int_to_ptr.vmem [resolvable:$true] %s282
      %288 = dma.hbm_to_vmem [thread:$0]  %s281, 6144, %s283, [#allocation25], 128, 128, 8
    $region93: #{forward.1} parent=1 // pred_fallthru
      _
    // Predicated region
    $region94: #{forward.1} parent=1 // pred_check
      _
    $region95: #{forward.1} parent=1 // pred_check_branch
      %290 = sbr.rel (0) target = $region97
    $region96: #{forward.1} parent=1 // pred_region
      _
    $region97: #{forward.1} parent=1 // pred_fallthru
      _
    // Predicated region
    $region98: #{forward.1} parent=1 // pred_check
      _
    $region99: #{forward.1} parent=1 // pred_check_branch
      %292 = sbr.rel (0) target = $region101
    $region100: #{forward.1} parent=1 // pred_region
      %294 = vsyncadd [#allocation28], 0
      %s295 = sshll.u32 %s49, 4
      %s296 = int_to_ptr.hbm [resolvable:$true] %s295
      %s297 = sshll.u32 [#allocation27], 4
      %s298 = int_to_ptr.vmem [resolvable:$true] %s297
      %303 = dma.hbm_to_vmem [thread:$0]  %s296, 2048, %s298, [#allocation28], 128, 128, 8
    $region101: #{forward.1} parent=1 // pred_fallthru
      _
    // Predicated region
    $region102: #{forward.1} parent=1 // pred_check
      _
    $region103: #{forward.1} parent=1 // pred_check_branch
      %305 = sbr.rel (0) target = $region105
    $region104: #{forward.1} parent=1 // pred_region
      %307 = vsyncadd [#allocation28], 0
      %s309 = sshll.u32 %s51, 4
      %s310 = int_to_ptr.hbm [resolvable:$true] %s309
      %s311 = sshll.u32 [#allocation29], 4
      %s312 = int_to_ptr.vmem [resolvable:$true] %s311
      %314 = dma.hbm_to_vmem [thread:$0]  %s310, 32, %s312, [#allocation28]
    $region105: #{forward.1} parent=1 // pred_fallthru
      _
    // Predicated region
    $region106: #{forward.1} parent=1 // pred_check
      _
    $region107: #{forward.1} parent=1 // pred_check_branch
      %316 = sbr.rel (0) target = $region109
    $region108: #{forward.1} parent=1 // pred_region
      %318 = vsyncadd [#allocation31], 0
      %s319 = sshll.u32 %s53, 4
      %s320 = int_to_ptr.hbm [resolvable:$true] %s319
      %s321 = sshll.u32 [#allocation30], 4
      %s322 = int_to_ptr.vmem [resolvable:$true] %s321
      %327 = dma.hbm_to_vmem [thread:$0]  %s320, 1664, %s322, [#allocation31], 128, 128, 8
    $region109: #{forward.1} parent=1 // pred_fallthru
      _
    // Predicated region
    $region110: #{forward.1} parent=1 // pred_check
      _
    $region111: #{forward.1} parent=1 // pred_check_branch
      %329 = sbr.rel (0) target = $region113
    $region112: #{forward.1} parent=1 // pred_region
      %331 = vsyncadd [#allocation31], 0
      %s332 = sshll.u32 %s55, 4
      %s333 = int_to_ptr.hbm [resolvable:$true] %s332
      %s334 = sshll.u32 [#allocation32], 4
      %s335 = int_to_ptr.vmem [resolvable:$true] %s334
      %340 = dma.hbm_to_vmem [thread:$0]  %s333, 1664, %s335, [#allocation31], 128, 128, 8
    $region113: #{forward.1} parent=1 // pred_fallthru
      _
    // Predicated region
    $region114: #{forward.1} parent=1 // pred_check
      _
    $region115: #{forward.1} parent=1 // pred_check_branch
      %342 = sbr.rel (0) target = $region117
    $region116: #{forward.1} parent=1 // pred_region
      %344 = vsyncadd [#allocation34], 0
      %s345 = sshll.u32 %s57, 4
      %s346 = int_to_ptr.hbm [resolvable:$true] %s345
      %s347 = sshll.u32 [#allocation33], 4
      %s348 = int_to_ptr.vmem [resolvable:$true] %s347
      %353 = dma.hbm_to_vmem [thread:$0]  %s346, 1664, %s348, [#allocation34], 128, 128, 8
    $region117: #{forward.1} parent=1 // pred_fallthru
      _
    // Predicated region
    $region118: #{forward.1} parent=1 // pred_check
      _
    $region119: #{forward.1} parent=1 // pred_check_branch
      %355 = sbr.rel (0) target = $region121
    $region120: #{forward.1} parent=1 // pred_region
      %357 = vsyncadd [#allocation34], 0
      %s358 = sshll.u32 %s59, 4
      %s359 = int_to_ptr.hbm [resolvable:$true] %s358
      %s360 = sshll.u32 [#allocation35], 4
      %s361 = int_to_ptr.vmem [resolvable:$true] %s360
      %366 = dma.hbm_to_vmem [thread:$0]  %s359, 1664, %s361, [#allocation34], 128, 128, 8
    $region121: #{forward.1} parent=1 // pred_fallthru
      _
    // Predicated region
    $region122: #{forward.1} parent=1 // pred_check
      _
    $region123: #{forward.1} parent=1 // pred_check_branch
      %368 = sbr.rel (0) target = $region125
    $region124: #{forward.1} parent=1 // pred_region
      %370 = dma.done [#allocation4], 2048
    $region125: #{forward.1} parent=1 // pred_fallthru
      _
    // Predicated region
    $region126: #{forward.1} parent=1 // pred_check
      _
    $region127: #{forward.1} parent=1 // pred_check_branch
      %372 = sbr.rel (0) target = $region129
    $region128: #{forward.1} parent=1 // pred_region
      %374 = dma.done [#allocation7], 1024
    $region129: #{forward.1} parent=1 // pred_fallthru
      _
    // Predicated region
    $region130: #{forward.1} parent=1 // pred_check
      _
    $region131: #{forward.1} parent=1 // pred_check_branch
      %376 = sbr.rel (0) target = $region133
    $region132: #{forward.1} parent=1 // pred_region
      %378 = dma.done [#allocation7], 16
    $region133: #{forward.1} parent=1 // pred_fallthru
      _
    // Predicated region
    $region134: #{forward.1} parent=1 // pred_check
      _
    $region135: #{forward.1} parent=1 // pred_check_branch
      %380 = sbr.rel (0) target = $region137
    $region136: #{forward.1} parent=1 // pred_region
      %382 = dma.done [#allocation10], 16
    $region137: #{forward.1} parent=1 // pred_fallthru
      _
    // Predicated region
    $region138: #{forward.1} parent=1 // pred_check
      _
    $region139: #{forward.1} parent=1 // pred_check_branch
      %384 = sbr.rel (0) target = $region141
    $region140: #{forward.1} parent=1 // pred_region
      %386 = dma.done [#allocation10], 16
    $region141: #{forward.1} parent=1 // pred_fallthru
      _
    // Predicated region
    $region142: #{forward.1} parent=1 // pred_check
      _
    $region143: #{forward.1} parent=1 // pred_check_branch
      %388 = sbr.rel (0) target = $region145
    $region144: #{forward.1} parent=1 // pred_region
      %390 = dma.done [#allocation13], 16
    $region145: #{forward.1} parent=1 // pred_fallthru
      _
    // Predicated region
    $region146: #{forward.1} parent=1 // pred_check
      _
    $region147: #{forward.1} parent=1 // pred_check_branch
      %392 = sbr.rel (0) target = $region149
    $region148: #{forward.1} parent=1 // pred_region
      %394 = dma.done [#allocation13], 16
    $region149: #{forward.1} parent=1 // pred_fallthru
      _
    // Predicated region
    $region150: #{forward.1} parent=1 // pred_check
      _
    $region151: #{forward.1} parent=1 // pred_check_branch
      %396 = sbr.rel (0) target = $region153
    $region152: #{forward.1} parent=1 // pred_region
      %398 = dma.done [#allocation16], 2048
    $region153: #{forward.1} parent=1 // pred_fallthru
      _
    // Predicated region
    $region154: #{forward.1} parent=1 // pred_check
      _
    $region155: #{forward.1} parent=1 // pred_check_branch
      %400 = sbr.rel (0) target = $region157
    $region156: #{forward.1} parent=1 // pred_region
      %402 = dma.done [#allocation16], 32
    $region157: #{forward.1} parent=1 // pred_fallthru
      _
    // Predicated region
    $region158: #{forward.1} parent=1 // pred_check
      _
    $region159: #{forward.1} parent=1 // pred_check_branch
      %404 = sbr.rel (0) target = $region161
    $region160: #{forward.1} parent=1 // pred_region
      %406 = dma.done [#allocation19], 4096
    $region161: #{forward.1} parent=1 // pred_fallthru
      _
    // Predicated region
    $region162: #{forward.1} parent=1 // pred_check
      _
    $region163: #{forward.1} parent=1 // pred_check_branch
      %408 = sbr.rel (0) target = $region165
    $region164: #{forward.1} parent=1 // pred_region
      %410 = dma.done [#allocation19], 32
    $region165: #{forward.1} parent=1 // pred_fallthru
      _
    // Predicated region
    $region166: #{forward.1} parent=1 // pred_check
      _
    $region167: #{forward.1} parent=1 // pred_check_branch
      %412 = sbr.rel (0) target = $region169
    $region168: #{forward.1} parent=1 // pred_region
      %414 = dma.done [#allocation22], 48
    $region169: #{forward.1} parent=1 // pred_fallthru
      _
    // Predicated region
    $region170: #{forward.1} parent=1 // pred_check
      _
    $region171: #{forward.1} parent=1 // pred_check_branch
      %416 = sbr.rel (0) target = $region173
    $region172: #{forward.1} parent=1 // pred_region
      %418 = dma.done [#allocation22], 4096
    $region173: #{forward.1} parent=1 // pred_fallthru
      _
    // Predicated region
    $region174: #{forward.1} parent=1 // pred_check
      _
    $region175: #{forward.1} parent=1 // pred_check_branch
      %420 = sbr.rel (0) target = $region177
    $region176: #{forward.1} parent=1 // pred_region
      %422 = dma.done [#allocation25], 64
    $region177: #{forward.1} parent=1 // pred_fallthru
      _
    // Predicated region
    $region178: #{forward.1} parent=1 // pred_check
      _
    $region179: #{forward.1} parent=1 // pred_check_branch
      %424 = sbr.rel (0) target = $region181
    $region180: #{forward.1} parent=1 // pred_region
      %426 = dma.done [#allocation25], 6144
    $region181: #{forward.1} parent=1 // pred_fallthru
      _
    // Predicated region
    $region182: #{forward.1} parent=1 // pred_check
      _
    $region183: #{forward.1} parent=1 // pred_check_branch
      %428 = sbr.rel (0) target = $region185
    $region184: #{forward.1} parent=1 // pred_region
      %430 = dma.done [#allocation28], 2048
    $region185: #{forward.1} parent=1 // pred_fallthru
      _
    // Predicated region
    $region186: #{forward.1} parent=1 // pred_check
      _
    $region187: #{forward.1} parent=1 // pred_check_branch
      %432 = sbr.rel (0) target = $region189
    $region188: #{forward.1} parent=1 // pred_region
      %434 = dma.done [#allocation28], 32
    $region189: #{forward.1} parent=1 // pred_fallthru
      _
    // Predicated region
    $region190: #{forward.1} parent=1 // pred_check
      _
    $region191: #{forward.1} parent=1 // pred_check_branch
      %436 = sbr.rel (0) target = $region193
    $region192: #{forward.1} parent=1 // pred_region
      %438 = dma.done [#allocation31], 1664
    $region193: #{forward.1} parent=1 // pred_fallthru
      _
    // Predicated region
    $region194: #{forward.1} parent=1 // pred_check
      _
    $region195: #{forward.1} parent=1 // pred_check_branch
      %440 = sbr.rel (0) target = $region197
    $region196: #{forward.1} parent=1 // pred_region
      %442 = dma.done [#allocation31], 1664
    $region197: #{forward.1} parent=1 // pred_fallthru
      _
    // Predicated region
    $region198: #{forward.1} parent=1 // pred_check
      _
    $region199: #{forward.1} parent=1 // pred_check_branch
      %444 = sbr.rel (0) target = $region201
    $region200: #{forward.1} parent=1 // pred_region
      %446 = dma.done [#allocation34], 1664
    $region201: #{forward.1} parent=1 // pred_fallthru
      _
    // Predicated region
    $region202: #{forward.1} parent=1 // pred_check
      _
    $region203: #{forward.1} parent=1 // pred_check_branch
      %448 = sbr.rel (0) target = $region205
    $region204: #{forward.1} parent=1 // pred_region
      %450 = dma.done [#allocation34], 1664
    $region205: #{forward.1} parent=1 // pred_fallthru
      _
    %v451 = vld [vmem:[%s1] sm:$0xf]
    %453 = vst [vmem:[#allocation1] ss:$4 sm:$0xff] %v451
    %v454 = vld.sshfl [vmem:[#allocation1] sm:$0xff pattern:$0x73625140]
    %v455 = vld.sshfl [vmem:[#allocation1 + $0x8] sm:$0xff pattern:$0x73625140]
    %v458 = vpack.c.bf16 %v454, %v454
    %v459 = vpack.c.bf16 %v455, %v455
    %v460 = vld [vmem:[#allocation3] sm:$0xf]
    %v461 = vld [vmem:[#allocation3 + $0x4] sm:$0xf]
    %v462 = vld [vmem:[#allocation3 + $0x8] sm:$0xf]
    %v463 = vld [vmem:[#allocation3 + $0xc] sm:$0xf]
    %v464 = vld [vmem:[#allocation3 + $0x10] sm:$0xf]
    %v465 = vld [vmem:[#allocation3 + $0x14] sm:$0xf]
    %v466 = vld [vmem:[#allocation3 + $0x18] sm:$0xf]
    %v467 = vld [vmem:[#allocation3 + $0x1c] sm:$0xf]
    %v468 = vld [vmem:[#allocation3 + $0x20] sm:$0xf]
    %v469 = vld [vmem:[#allocation3 + $0x24] sm:$0xf]
    %v470 = vld [vmem:[#allocation3 + $0x28] sm:$0xf]
    %v471 = vld [vmem:[#allocation3 + $0x2c] sm:$0xf]
    %v472 = vld [vmem:[#allocation3 + $0x30] sm:$0xf]
    %v473 = vld [vmem:[#allocation3 + $0x34] sm:$0xf]
    %v474 = vld [vmem:[#allocation3 + $0x38] sm:$0xf]
    %v475 = vld [vmem:[#allocation3 + $0x3c] sm:$0xf]
    %v476 = vld [vmem:[#allocation3 + $0x40] sm:$0xf]
    %v477 = vld [vmem:[#allocation3 + $0x44] sm:$0xf]
    %v478 = vld [vmem:[#allocation3 + $0x48] sm:$0xf]
    %v479 = vld [vmem:[#allocation3 + $0x4c] sm:$0xf]
    %v480 = vld [vmem:[#allocation3 + $0x50] sm:$0xf]
    %v481 = vld [vmem:[#allocation3 + $0x54] sm:$0xf]
    %v482 = vld [vmem:[#allocation3 + $0x58] sm:$0xf]
    %v483 = vld [vmem:[#allocation3 + $0x5c] sm:$0xf]
    %v484 = vld [vmem:[#allocation3 + $0x60] sm:$0xf]
    %v485 = vld [vmem:[#allocation3 + $0x64] sm:$0xf]
    %v486 = vld [vmem:[#allocation3 + $0x68] sm:$0xf]
    %v487 = vld [vmem:[#allocation3 + $0x6c] sm:$0xf]
    %v488 = vld [vmem:[#allocation3 + $0x70] sm:$0xf]
    %v489 = vld [vmem:[#allocation3 + $0x74] sm:$0xf]
    %v490 = vld [vmem:[#allocation3 + $0x78] sm:$0xf]
    %v491 = vld [vmem:[#allocation3 + $0x7c] sm:$0xf]
    %v492 = vld [vmem:[%s15] sm:$0x1]
    %v494 = vperm.slane %v492, 0
    %v528 = vunpack.c.l.b16 %v460
    %v529 = vunpack.c.l.b16 %v461
    %v530 = vunpack.c.l.b16 %v462
    %v531 = vunpack.c.l.b16 %v463
    %v532 = vunpack.c.l.b16 %v464
    %v533 = vunpack.c.l.b16 %v465
    %v534 = vunpack.c.l.b16 %v466
    %v535 = vunpack.c.l.b16 %v467
    %v536 = vunpack.c.l.b16 %v468
    %v537 = vunpack.c.l.b16 %v469
    %v538 = vunpack.c.l.b16 %v470
    %v539 = vunpack.c.l.b16 %v471
    %v540 = vunpack.c.l.b16 %v472
    %v541 = vunpack.c.l.b16 %v473
    %v542 = vunpack.c.l.b16 %v474
    %v543 = vunpack.c.l.b16 %v475
    %v544 = vunpack.c.l.b16 %v476
    %v545 = vunpack.c.l.b16 %v477
    %v546 = vunpack.c.l.b16 %v478
    %v547 = vunpack.c.l.b16 %v479
    %v548 = vunpack.c.l.b16 %v480
    %v549 = vunpack.c.l.b16 %v481
    %v550 = vunpack.c.l.b16 %v482
    %v551 = vunpack.c.l.b16 %v483
    %v552 = vunpack.c.l.b16 %v484
    %v553 = vunpack.c.l.b16 %v485
    %v554 = vunpack.c.l.b16 %v486
    %v555 = vunpack.c.l.b16 %v487
    %v556 = vunpack.c.l.b16 %v488
    %v557 = vunpack.c.l.b16 %v489
    %v558 = vunpack.c.l.b16 %v490
    %v559 = vunpack.c.l.b16 %v491
    %v560 = vpack.c.b16 %v529, %v528
    %v561 = vpack.c.b16 %v531, %v530
    %v562 = vpack.c.b16 %v533, %v532
    %v563 = vpack.c.b16 %v535, %v534
    %v564 = vpack.c.b16 %v537, %v536
    %v565 = vpack.c.b16 %v539, %v538
    %v566 = vpack.c.b16 %v541, %v540
    %v567 = vpack.c.b16 %v543, %v542
    %v568 = vpack.c.b16 %v545, %v544
    %v569 = vpack.c.b16 %v547, %v546
    %v570 = vpack.c.b16 %v549, %v548
    %v571 = vpack.c.b16 %v551, %v550
    %v572 = vpack.c.b16 %v553, %v552
    %v573 = vpack.c.b16 %v555, %v554
    %v574 = vpack.c.b16 %v557, %v556
    %v575 = vpack.c.b16 %v559, %v558
    %592 = vmatpush.bf16.msra.mxu0 %v567
    %593 = vmatpush.bf16.msra.mxu0 %v566
    %594 = vmatpush.bf16.msra.mxu0 %v565
    %595 = vmatpush.bf16.msra.mxu0 %v564
    %596 = vmatpush.bf16.msra.mxu0 %v563
    %597 = vmatpush.bf16.msra.mxu0 %v562
    %598 = vmatpush.bf16.msra.mxu0 %v561
    %599 = vmatpush.bf16.msra.mxu0 %v560
    %600 = vmatmul.bf16.gmra.mxu0 %v458
    %v601 = vpop.f32.mrf.mxu0
    %v602 = vadd.f32 %v494, %v601
    %v603 = vpop.f32.mrf.mxu0
    %604 = vdwg.mxu0
    %605 = vmatpush.bf16.msra.mxu0 %v575
    %606 = vmatpush.bf16.msra.mxu0 %v574
    %607 = vmatpush.bf16.msra.mxu0 %v573
    %608 = vmatpush.bf16.msra.mxu0 %v572
    %609 = vmatpush.bf16.msra.mxu0 %v571
    %610 = vmatpush.bf16.msra.mxu0 %v570
    %611 = vmatpush.bf16.msra.mxu0 %v569
    %612 = vmatpush.bf16.msra.mxu0 %v568
    %613 = vmatmul.bf16.gmra.mxu0 %v459
    %v614 = vpop.f32.mrf.mxu0
    %v615 = vadd.f32 %v602, %v614
    %v616 = vpop.f32.mrf.mxu0
    %617 = vdwg.mxu0
    %v618 = vld [vmem:[#allocation9] sm:$0x1]
    %v619 = vld [vmem:[#allocation11] sm:$0x1]
    %vm620 = vcmask 1041408
    %v621 = vsel %vm620, %v615, 0.0
    %v622 = vrot.slane %v621, 4
    %v623 = vadd.f32 %v621, %v622
    %v624 = vrot.slane %v623, 2
    %v625 = vadd.f32 %v623, %v624
    %v626 = vrot.slane %v625, 1
    %v627 = vadd.f32 %v625, %v626
    %v628 = vrcp.pop 2.0
    %v629 = vmul.f32 2.0, %v628
    %v630 = vsub.f32 1.0, %v629
    %v631 = vmul.f32 %v628, %v630
    %v632 = vadd.f32 %v628, %v631
    %vm633 = vweird.f32 %v628
    %v634 = vsel %vm633, %v628, %v632
    %v635 = vmul.f32 %v627, %v634
    %v636 = vsub.f32 %v615, %v635
    %v637 = vmul.f32 %v636, %v636
    %v638 = vsel %vm620, %v637, 0.0
    %v639 = vrot.slane %v638, 4
    %v640 = vadd.f32 %v638, %v639
    %v641 = vrot.slane %v640, 2
    %v642 = vadd.f32 %v640, %v641
    %v643 = vrot.slane %v642, 1
    %v644 = vadd.f32 %v642, %v643
    %v645 = vmul.f32 %v644, %v634
    %v646 = vadd.f32 %v645, 1e-05
    %v647 = vrsqrt.pop %v646
    %v648 = vmul.f32 %v647, %v646
    %v649 = vmul.f32 %v648, %v647
    %v650 = vmul.f32 0.5, %v649
    %v651 = vsub.f32 1.5, %v650
    %v652 = vmul.f32 %v647, %v651
    %vm653 = vweird.f32 %v646
    %vm654 = vweird.f32 %v647
    %vm655 = vmor %vm653, %vm654
    %v656 = vsel %vm655, %v647, %v652
    %v657 = vmul.f32 %v636, %v656
    %v659 = vperm.slane %v618, 0
    %v661 = vmul.f32 %v657, %v659
    %v663 = vperm.slane %v619, 0
    %v665 = vadd.f32 %v661, %v663
    %666 = vst [vmem:[#allocation36] sm:$0x3] %v665
    %v667 = vld [vmem:[%s3] sm:$0x3]
    %v668 = vpack.c.bf16 %v667, %v667
    %v669 = vld [vmem:[#allocation6] sm:$0xf]
    %v670 = vld [vmem:[#allocation6 + $0x4] sm:$0xf]
    %v671 = vld [vmem:[#allocation6 + $0x8] sm:$0xf]
    %v672 = vld [vmem:[#allocation6 + $0xc] sm:$0xf]
    %v673 = vld [vmem:[#allocation6 + $0x10] sm:$0xf]
    %v674 = vld [vmem:[#allocation6 + $0x14] sm:$0xf]
    %v675 = vld [vmem:[#allocation6 + $0x18] sm:$0xf]
    %v676 = vld [vmem:[#allocation6 + $0x1c] sm:$0xf]
    %v677 = vld [vmem:[#allocation6 + $0x20] sm:$0xf]
    %v678 = vld [vmem:[#allocation6 + $0x24] sm:$0xf]
    %v679 = vld [vmem:[#allocation6 + $0x28] sm:$0xf]
    %v680 = vld [vmem:[#allocation6 + $0x2c] sm:$0xf]
    %v681 = vld [vmem:[#allocation6 + $0x30] sm:$0xf]
    %v682 = vld [vmem:[#allocation6 + $0x34] sm:$0xf]
    %v683 = vld [vmem:[#allocation6 + $0x38] sm:$0xf]
    %v684 = vld [vmem:[#allocation6 + $0x3c] sm:$0xf]
    %v685 = vld [vmem:[#allocation8] sm:$0x1]
    %v687 = vperm.slane %v685, 0
    %v705 = vunpack.c.l.b16 %v669
    %v706 = vunpack.c.l.b16 %v670
    %v707 = vunpack.c.l.b16 %v671
    %v708 = vunpack.c.l.b16 %v672
    %v709 = vunpack.c.l.b16 %v673
    %v710 = vunpack.c.l.b16 %v674
    %v711 = vunpack.c.l.b16 %v675
    %v712 = vunpack.c.l.b16 %v676
    %v713 = vunpack.c.l.b16 %v677
    %v714 = vunpack.c.l.b16 %v678
    %v715 = vunpack.c.l.b16 %v679
    %v716 = vunpack.c.l.b16 %v680
    %v717 = vunpack.c.l.b16 %v681
    %v718 = vunpack.c.l.b16 %v682
    %v719 = vunpack.c.l.b16 %v683
    %v720 = vunpack.c.l.b16 %v684
    %v721 = vpack.c.b16 %v706, %v705
    %v722 = vpack.c.b16 %v708, %v707
    %v723 = vpack.c.b16 %v710, %v709
    %v724 = vpack.c.b16 %v712, %v711
    %v725 = vpack.c.b16 %v714, %v713
    %v726 = vpack.c.b16 %v716, %v715
    %v727 = vpack.c.b16 %v718, %v717
    %v728 = vpack.c.b16 %v720, %v719
    %737 = vmatpush.bf16.msra.mxu0 %v728
    %738 = vmatpush.bf16.msra.mxu0 %v727
    %739 = vmatpush.bf16.msra.mxu0 %v726
    %740 = vmatpush.bf16.msra.mxu0 %v725
    %741 = vmatpush.bf16.msra.mxu0 %v724
    %742 = vmatpush.bf16.msra.mxu0 %v723
    %743 = vmatpush.bf16.msra.mxu0 %v722
    %744 = vmatpush.bf16.msra.mxu0 %v721
    %745 = vmatmul.bf16.gmra.mxu0 %v668
    %v746 = vpop.f32.mrf.mxu0
    %v747 = vadd.f32 %v687, %v746
    %v748 = vpop.f32.mrf.mxu0
    %749 = vdwg.mxu0
    %v750 = vld [vmem:[#allocation12] sm:$0x1]
    %v751 = vld [vmem:[#allocation14] sm:$0x1]
    %v752 = vsel %vm620, %v747, 0.0
    %v753 = vrot.slane %v752, 4
    %v754 = vadd.f32 %v752, %v753
    %v755 = vrot.slane %v754, 2
    %v756 = vadd.f32 %v754, %v755
    %v757 = vrot.slane %v756, 1
    %v758 = vadd.f32 %v756, %v757
    %v759 = vmul.f32 %v758, %v634
    %v760 = vsub.f32 %v747, %v759
    %v761 = vmul.f32 %v760, %v760
    %v762 = vsel %vm620, %v761, 0.0
    %v763 = vrot.slane %v762, 4
    %v764 = vadd.f32 %v762, %v763
    %v765 = vrot.slane %v764, 2
    %v766 = vadd.f32 %v764, %v765
    %v767 = vrot.slane %v766, 1
    %v768 = vadd.f32 %v766, %v767
    %v769 = vmul.f32 %v768, %v634
    %v770 = vadd.f32 %v769, 1e-05
    %v771 = vrsqrt.pop %v770
    %v772 = vmul.f32 %v771, %v770
    %v773 = vmul.f32 %v772, %v771
    %v774 = vmul.f32 0.5, %v773
    %v775 = vsub.f32 1.5, %v774
    %v776 = vmul.f32 %v771, %v775
    %vm777 = vweird.f32 %v770
    %vm778 = vweird.f32 %v771
    %vm779 = vmor %vm777, %vm778
    %v780 = vsel %vm779, %v771, %v776
    %v781 = vmul.f32 %v760, %v780
    %v783 = vperm.slane %v750, 0
    %v785 = vmul.f32 %v781, %v783
    %v787 = vperm.slane %v751, 0
    %v789 = vadd.f32 %v785, %v787
    %790 = vst [vmem:[#allocation37] sm:$0x3] %v789
    %v791 = vpack.c.bf16 %v665, %v665
    %v792 = vld [vmem:[#allocation15] sm:$0xff]
    %v793 = vld [vmem:[#allocation15 + $0x8] sm:$0xff]
    %v794 = vld [vmem:[#allocation15 + $0x10] sm:$0xff]
    %v795 = vld [vmem:[#allocation15 + $0x18] sm:$0xff]
    %v796 = vld [vmem:[#allocation15 + $0x20] sm:$0xff]
    %v797 = vld [vmem:[#allocation15 + $0x28] sm:$0xff]
    %v798 = vld [vmem:[#allocation15 + $0x30] sm:$0xff]
    %v799 = vld [vmem:[#allocation15 + $0x38] sm:$0xff]
    %v800 = vld [vmem:[#allocation15 + $0x40] sm:$0xff]
    %v801 = vld [vmem:[#allocation15 + $0x48] sm:$0xff]
    %v802 = vld [vmem:[#allocation15 + $0x50] sm:$0xff]
    %v803 = vld [vmem:[#allocation15 + $0x58] sm:$0xff]
    %v804 = vld [vmem:[#allocation15 + $0x60] sm:$0xff]
    %v805 = vld [vmem:[#allocation15 + $0x68] sm:$0xff]
    %v806 = vld [vmem:[#allocation15 + $0x70] sm:$0xff]
    %v807 = vld [vmem:[#allocation15 + $0x78] sm:$0xff]
    %v808 = vld [vmem:[#allocation17] sm:$0x3]
    %v810 = vperm.slane %v808, 0
    %v811 = vperm.slane %v808, 1
    %v830 = vunpack.c.l.b16 %v792
    %v831 = vunpack.c.h.b16 %v792
    %v832 = vunpack.c.l.b16 %v793
    %v833 = vunpack.c.h.b16 %v793
    %v834 = vunpack.c.l.b16 %v794
    %v835 = vunpack.c.h.b16 %v794
    %v836 = vunpack.c.l.b16 %v795
    %v837 = vunpack.c.h.b16 %v795
    %v838 = vunpack.c.l.b16 %v796
    %v839 = vunpack.c.h.b16 %v796
    %v840 = vunpack.c.l.b16 %v797
    %v841 = vunpack.c.h.b16 %v797
    %v842 = vunpack.c.l.b16 %v798
    %v843 = vunpack.c.h.b16 %v798
    %v844 = vunpack.c.l.b16 %v799
    %v845 = vunpack.c.h.b16 %v799
    %v846 = vunpack.c.l.b16 %v800
    %v847 = vunpack.c.h.b16 %v800
    %v848 = vunpack.c.l.b16 %v801
    %v849 = vunpack.c.h.b16 %v801
    %v850 = vunpack.c.l.b16 %v802
    %v851 = vunpack.c.h.b16 %v802
    %v852 = vunpack.c.l.b16 %v803
    %v853 = vunpack.c.h.b16 %v803
    %v854 = vunpack.c.l.b16 %v804
    %v855 = vunpack.c.h.b16 %v804
    %v856 = vunpack.c.l.b16 %v805
    %v857 = vunpack.c.h.b16 %v805
    %v858 = vunpack.c.l.b16 %v806
    %v859 = vunpack.c.h.b16 %v806
    %v860 = vunpack.c.l.b16 %v807
    %v861 = vunpack.c.h.b16 %v807
    %v862 = vpack.c.b16 %v832, %v830
    %v863 = vpack.c.b16 %v833, %v831
    %v864 = vpack.c.b16 %v836, %v834
    %v865 = vpack.c.b16 %v837, %v835
    %v866 = vpack.c.b16 %v840, %v838
    %v867 = vpack.c.b16 %v841, %v839
    %v868 = vpack.c.b16 %v844, %v842
    %v869 = vpack.c.b16 %v845, %v843
    %v870 = vpack.c.b16 %v848, %v846
    %v871 = vpack.c.b16 %v849, %v847
    %v872 = vpack.c.b16 %v852, %v850
    %v873 = vpack.c.b16 %v853, %v851
    %v874 = vpack.c.b16 %v856, %v854
    %v875 = vpack.c.b16 %v857, %v855
    %v876 = vpack.c.b16 %v860, %v858
    %v877 = vpack.c.b16 %v861, %v859
    %894 = vmatpush.bf16.msra.mxu0 %v876
    %895 = vmatpush.bf16.msra.mxu0 %v874
    %896 = vmatpush.bf16.msra.mxu0 %v872
    %897 = vmatpush.bf16.msra.mxu0 %v870
    %898 = vmatpush.bf16.msra.mxu0 %v868
    %899 = vmatpush.bf16.msra.mxu0 %v866
    %900 = vmatpush.bf16.msra.mxu0 %v864
    %901 = vmatpush.bf16.msra.mxu0 %v862
    %902 = vmatmul.bf16.gmra.mxu0 %v791
    %v903 = vpop.f32.mrf.mxu0
    %v904 = vadd.f32 %v810, %v903
    %v905 = vpop.f32.mrf.mxu0
    %906 = vdwg.mxu0
    %907 = vmatpush.bf16.msra.mxu0 %v877
    %908 = vmatpush.bf16.msra.mxu0 %v875
    %909 = vmatpush.bf16.msra.mxu0 %v873
    %910 = vmatpush.bf16.msra.mxu0 %v871
    %911 = vmatpush.bf16.msra.mxu0 %v869
    %912 = vmatpush.bf16.msra.mxu0 %v867
    %913 = vmatpush.bf16.msra.mxu0 %v865
    %914 = vmatpush.bf16.msra.mxu0 %v863
    %915 = vmatmul.bf16.gmra.mxu0 %v791
    %v916 = vpop.f32.mrf.mxu0
    %v917 = vadd.f32 %v811, %v916
    %v918 = vpop.f32.mrf.mxu0
    %919 = vdwg.mxu0
    %v921 = vrot.slane %v904, 1
    %923 = vst [vmem:[%s65] sm:$0x1] %v904
    %924 = vst [vmem:[%s65 + $0x8] sm:$0x1] %v921
    %v926 = vrot.slane %v917, 1
    %928 = vst [vmem:[%s67] sm:$0x1] %v917
    %929 = vst [vmem:[%s67 + $0x8] sm:$0x1] %v926
    %v930 = vld [vmem:[%s9] sm:$0xf]
    %v931 = vld [vmem:[%s9 + $0x4] sm:$0xf]
    %934 = vst [vmem:[#allocation1] ss:$4 sm:$0xff] %v930
    %v935 = vld.sshfl [vmem:[#allocation1] sm:$0xff pattern:$0x73625140]
    %v936 = vld.sshfl [vmem:[#allocation1 + $0x8] sm:$0xff pattern:$0x73625140]
    %s937 = scalar_lea.vmem [#allocation1], 32
    %938 = vst [vmem:[%s937] ss:$4 sm:$0xff] %v931
    %v939 = vld.sshfl [vmem:[#allocation1 + $0x20] sm:$0xff pattern:$0x73625140]
    %v940 = vld.sshfl [vmem:[#allocation1 + $0x28] sm:$0xff pattern:$0x73625140]
    %v945 = vpack.c.bf16 %v936, %v935
    %v946 = vpack.c.bf16 %v940, %v939
    %v947 = vld [vmem:[#allocation18] sm:$0xf]
    %v948 = vld [vmem:[#allocation18 + $0x4] sm:$0xf]
    %v949 = vld [vmem:[#allocation18 + $0x8] sm:$0xf]
    %v950 = vld [vmem:[#allocation18 + $0xc] sm:$0xf]
    %v951 = vld [vmem:[#allocation18 + $0x10] sm:$0xf]
    %v952 = vld [vmem:[#allocation18 + $0x14] sm:$0xf]
    %v953 = vld [vmem:[#allocation18 + $0x18] sm:$0xf]
    %v954 = vld [vmem:[#allocation18 + $0x1c] sm:$0xf]
    %v955 = vld [vmem:[#allocation18 + $0x20] sm:$0xf]
    %v956 = vld [vmem:[#allocation18 + $0x24] sm:$0xf]
    %v957 = vld [vmem:[#allocation18 + $0x28] sm:$0xf]
    %v958 = vld [vmem:[#allocation18 + $0x2c] sm:$0xf]
    %v959 = vld [vmem:[#allocation18 + $0x30] sm:$0xf]
    %v960 = vld [vmem:[#allocation18 + $0x34] sm:$0xf]
    %v961 = vld [vmem:[#allocation18 + $0x38] sm:$0xf]
    %v962 = vld [vmem:[#allocation18 + $0x3c] sm:$0xf]
    %v963 = vld [vmem:[#allocation18 + $0x40] sm:$0xf]
    %v964 = vld [vmem:[#allocation18 + $0x44] sm:$0xf]
    %v965 = vld [vmem:[#allocation18 + $0x48] sm:$0xf]
    %v966 = vld [vmem:[#allocation18 + $0x4c] sm:$0xf]
    %v967 = vld [vmem:[#allocation18 + $0x50] sm:$0xf]
    %v968 = vld [vmem:[#allocation18 + $0x54] sm:$0xf]
    %v969 = vld [vmem:[#allocation18 + $0x58] sm:$0xf]
    %v970 = vld [vmem:[#allocation18 + $0x5c] sm:$0xf]
    %v971 = vld [vmem:[#allocation18 + $0x60] sm:$0xf]
    %v972 = vld [vmem:[#allocation18 + $0x64] sm:$0xf]
    %v973 = vld [vmem:[#allocation18 + $0x68] sm:$0xf]
    %v974 = vld [vmem:[#allocation18 + $0x6c] sm:$0xf]
    %v975 = vld [vmem:[#allocation18 + $0x70] sm:$0xf]
    %v976 = vld [vmem:[#allocation18 + $0x74] sm:$0xf]
    %v977 = vld [vmem:[#allocation18 + $0x78] sm:$0xf]
    %v978 = vld [vmem:[#allocation18 + $0x7c] sm:$0xf]
    %v979 = vld [vmem:[#allocation18 + $0x80] sm:$0xf]
    %v980 = vld [vmem:[#allocation18 + $0x84] sm:$0xf]
    %v981 = vld [vmem:[#allocation18 + $0x88] sm:$0xf]
    %v982 = vld [vmem:[#allocation18 + $0x8c] sm:$0xf]
    %v983 = vld [vmem:[#allocation18 + $0x90] sm:$0xf]
    %v984 = vld [vmem:[#allocation18 + $0x94] sm:$0xf]
    %v985 = vld [vmem:[#allocation18 + $0x98] sm:$0xf]
    %v986 = vld [vmem:[#allocation18 + $0x9c] sm:$0xf]
    %v987 = vld [vmem:[#allocation18 + $0xa0] sm:$0xf]
    %v988 = vld [vmem:[#allocation18 + $0xa4] sm:$0xf]
    %v989 = vld [vmem:[#allocation18 + $0xa8] sm:$0xf]
    %v990 = vld [vmem:[#allocation18 + $0xac] sm:$0xf]
    %v991 = vld [vmem:[#allocation18 + $0xb0] sm:$0xf]
    %v992 = vld [vmem:[#allocation18 + $0xb4] sm:$0xf]
    %v993 = vld [vmem:[#allocation18 + $0xb8] sm:$0xf]
    %v994 = vld [vmem:[#allocation18 + $0xbc] sm:$0xf]
    %v995 = vld [vmem:[#allocation18 + $0xc0] sm:$0xf]
    %v996 = vld [vmem:[#allocation18 + $0xc4] sm:$0xf]
    %v997 = vld [vmem:[#allocation18 + $0xc8] sm:$0xf]
    %v998 = vld [vmem:[#allocation18 + $0xcc] sm:$0xf]
    %v999 = vld [vmem:[#allocation18 + $0xd0] sm:$0xf]
    %v1000 = vld [vmem:[#allocation18 + $0xd4] sm:$0xf]
    %v1001 = vld [vmem:[#allocation18 + $0xd8] sm:$0xf]
    %v1002 = vld [vmem:[#allocation18 + $0xdc] sm:$0xf]
    %v1003 = vld [vmem:[#allocation18 + $0xe0] sm:$0xf]
    %v1004 = vld [vmem:[#allocation18 + $0xe4] sm:$0xf]
    %v1005 = vld [vmem:[#allocation18 + $0xe8] sm:$0xf]
    %v1006 = vld [vmem:[#allocation18 + $0xec] sm:$0xf]
    %v1007 = vld [vmem:[#allocation18 + $0xf0] sm:$0xf]
    %v1008 = vld [vmem:[#allocation18 + $0xf4] sm:$0xf]
    %v1009 = vld [vmem:[#allocation18 + $0xf8] sm:$0xf]
    %v1010 = vld [vmem:[#allocation18 + $0xfc] sm:$0xf]
    %v1011 = vld [vmem:[#allocation20] sm:$0x1]
    %v1012 = vld [vmem:[#allocation20 + $0x1] sm:$0x1]
    %v1015 = vperm.slane %v1011, 0
    %v1016 = vperm.slane %v1012, 0
    %v1020 = vunpack.c.l.b16 %v945
    %v1021 = vunpack.c.h.b16 %v945
    %v1022 = vpack.c.b16 %v1020, %v1020
    %v1023 = vpack.c.b16 %v1021, %v1021
    %v1058 = vunpack.c.l.b16 %v947
    %v1059 = vunpack.c.l.b16 %v948
    %v1060 = vunpack.c.l.b16 %v949
    %v1061 = vunpack.c.l.b16 %v950
    %v1062 = vunpack.c.l.b16 %v951
    %v1063 = vunpack.c.l.b16 %v952
    %v1064 = vunpack.c.l.b16 %v953
    %v1065 = vunpack.c.l.b16 %v954
    %v1066 = vunpack.c.l.b16 %v955
    %v1067 = vunpack.c.l.b16 %v956
    %v1068 = vunpack.c.l.b16 %v957
    %v1069 = vunpack.c.l.b16 %v958
    %v1070 = vunpack.c.l.b16 %v959
    %v1071 = vunpack.c.l.b16 %v960
    %v1072 = vunpack.c.l.b16 %v961
    %v1073 = vunpack.c.l.b16 %v962
    %v1074 = vunpack.c.l.b16 %v963
    %v1075 = vunpack.c.l.b16 %v964
    %v1076 = vunpack.c.l.b16 %v965
    %v1077 = vunpack.c.l.b16 %v966
    %v1078 = vunpack.c.l.b16 %v967
    %v1079 = vunpack.c.l.b16 %v968
    %v1080 = vunpack.c.l.b16 %v969
    %v1081 = vunpack.c.l.b16 %v970
    %v1082 = vunpack.c.l.b16 %v971
    %v1083 = vunpack.c.l.b16 %v972
    %v1084 = vunpack.c.l.b16 %v973
    %v1085 = vunpack.c.l.b16 %v974
    %v1086 = vunpack.c.l.b16 %v975
    %v1087 = vunpack.c.l.b16 %v976
    %v1088 = vunpack.c.l.b16 %v977
    %v1089 = vunpack.c.l.b16 %v978
    %v1090 = vpack.c.b16 %v1059, %v1058
    %v1091 = vpack.c.b16 %v1061, %v1060
    %v1092 = vpack.c.b16 %v1063, %v1062
    %v1093 = vpack.c.b16 %v1065, %v1064
    %v1094 = vpack.c.b16 %v1067, %v1066
    %v1095 = vpack.c.b16 %v1069, %v1068
    %v1096 = vpack.c.b16 %v1071, %v1070
    %v1097 = vpack.c.b16 %v1073, %v1072
    %v1098 = vpack.c.b16 %v1075, %v1074
    %v1099 = vpack.c.b16 %v1077, %v1076
    %v1100 = vpack.c.b16 %v1079, %v1078
    %v1101 = vpack.c.b16 %v1081, %v1080
    %v1102 = vpack.c.b16 %v1083, %v1082
    %v1103 = vpack.c.b16 %v1085, %v1084
    %v1104 = vpack.c.b16 %v1087, %v1086
    %v1105 = vpack.c.b16 %v1089, %v1088
    %1122 = vmatpush.bf16.msra.mxu0 %v1097
    %1123 = vmatpush.bf16.msra.mxu0 %v1096
    %1124 = vmatpush.bf16.msra.mxu0 %v1095
    %1125 = vmatpush.bf16.msra.mxu0 %v1094
    %1126 = vmatpush.bf16.msra.mxu0 %v1093
    %1127 = vmatpush.bf16.msra.mxu0 %v1092
    %1128 = vmatpush.bf16.msra.mxu0 %v1091
    %1129 = vmatpush.bf16.msra.mxu0 %v1090
    %1130 = vmatmul.bf16.gmra.mxu0 %v1022
    %v1131 = vpop.f32.mrf.mxu0
    %v1132 = vadd.f32 %v1015, %v1131
    %v1133 = vpop.f32.mrf.mxu0
    %1134 = vdwg.mxu0
    %1135 = vmatpush.bf16.msra.mxu0 %v1105
    %1136 = vmatpush.bf16.msra.mxu0 %v1104
    %1137 = vmatpush.bf16.msra.mxu0 %v1103
    %1138 = vmatpush.bf16.msra.mxu0 %v1102
    %1139 = vmatpush.bf16.msra.mxu0 %v1101
    %1140 = vmatpush.bf16.msra.mxu0 %v1100
    %1141 = vmatpush.bf16.msra.mxu0 %v1099
    %1142 = vmatpush.bf16.msra.mxu0 %v1098
    %1143 = vmatmul.bf16.gmra.mxu0 %v1023
    %v1144 = vpop.f32.mrf.mxu0
    %v1145 = vadd.f32 %v1132, %v1144
    %v1146 = vpop.f32.mrf.mxu0
    %1147 = vdwg.mxu0
    %v1149 = vunpack.c.l.b16 %v946
    %v1150 = vunpack.c.h.b16 %v946
    %v1151 = vpack.c.b16 %v1149, %v1149
    %v1152 = vpack.c.b16 %v1150, %v1150
    %v1187 = vunpack.c.l.b16 %v979
    %v1188 = vunpack.c.l.b16 %v980
    %v1189 = vunpack.c.l.b16 %v981
    %v1190 = vunpack.c.l.b16 %v982
    %v1191 = vunpack.c.l.b16 %v983
    %v1192 = vunpack.c.l.b16 %v984
    %v1193 = vunpack.c.l.b16 %v985
    %v1194 = vunpack.c.l.b16 %v986
    %v1195 = vunpack.c.l.b16 %v987
    %v1196 = vunpack.c.l.b16 %v988
    %v1197 = vunpack.c.l.b16 %v989
    %v1198 = vunpack.c.l.b16 %v990
    %v1199 = vunpack.c.l.b16 %v991
    %v1200 = vunpack.c.l.b16 %v992
    %v1201 = vunpack.c.l.b16 %v993
    %v1202 = vunpack.c.l.b16 %v994
    %v1203 = vunpack.c.l.b16 %v995
    %v1204 = vunpack.c.l.b16 %v996
    %v1205 = vunpack.c.l.b16 %v997
    %v1206 = vunpack.c.l.b16 %v998
    %v1207 = vunpack.c.l.b16 %v999
    %v1208 = vunpack.c.l.b16 %v1000
    %v1209 = vunpack.c.l.b16 %v1001
    %v1210 = vunpack.c.l.b16 %v1002
    %v1211 = vunpack.c.l.b16 %v1003
    %v1212 = vunpack.c.l.b16 %v1004
    %v1213 = vunpack.c.l.b16 %v1005
    %v1214 = vunpack.c.l.b16 %v1006
    %v1215 = vunpack.c.l.b16 %v1007
    %v1216 = vunpack.c.l.b16 %v1008
    %v1217 = vunpack.c.l.b16 %v1009
    %v1218 = vunpack.c.l.b16 %v1010
    %v1219 = vpack.c.b16 %v1188, %v1187
    %v1220 = vpack.c.b16 %v1190, %v1189
    %v1221 = vpack.c.b16 %v1192, %v1191
    %v1222 = vpack.c.b16 %v1194, %v1193
    %v1223 = vpack.c.b16 %v1196, %v1195
    %v1224 = vpack.c.b16 %v1198, %v1197
    %v1225 = vpack.c.b16 %v1200, %v1199
    %v1226 = vpack.c.b16 %v1202, %v1201
    %v1227 = vpack.c.b16 %v1204, %v1203
    %v1228 = vpack.c.b16 %v1206, %v1205
    %v1229 = vpack.c.b16 %v1208, %v1207
    %v1230 = vpack.c.b16 %v1210, %v1209
    %v1231 = vpack.c.b16 %v1212, %v1211
    %v1232 = vpack.c.b16 %v1214, %v1213
    %v1233 = vpack.c.b16 %v1216, %v1215
    %v1234 = vpack.c.b16 %v1218, %v1217
    %1251 = vmatpush.bf16.msra.mxu0 %v1226
    %1252 = vmatpush.bf16.msra.mxu0 %v1225
    %1253 = vmatpush.bf16.msra.mxu0 %v1224
    %1254 = vmatpush.bf16.msra.mxu0 %v1223
    %1255 = vmatpush.bf16.msra.mxu0 %v1222
    %1256 = vmatpush.bf16.msra.mxu0 %v1221
    %1257 = vmatpush.bf16.msra.mxu0 %v1220
    %1258 = vmatpush.bf16.msra.mxu0 %v1219
    %1259 = vmatmul.bf16.gmra.mxu0 %v1151
    %v1260 = vpop.f32.mrf.mxu0
    %v1261 = vadd.f32 %v1016, %v1260
    %v1262 = vpop.f32.mrf.mxu0
    %1263 = vdwg.mxu0
    %1264 = vmatpush.bf16.msra.mxu0 %v1234
    %1265 = vmatpush.bf16.msra.mxu0 %v1233
    %1266 = vmatpush.bf16.msra.mxu0 %v1232
    %1267 = vmatpush.bf16.msra.mxu0 %v1231
    %1268 = vmatpush.bf16.msra.mxu0 %v1230
    %1269 = vmatpush.bf16.msra.mxu0 %v1229
    %1270 = vmatpush.bf16.msra.mxu0 %v1228
    %1271 = vmatpush.bf16.msra.mxu0 %v1227
    %1272 = vmatmul.bf16.gmra.mxu0 %v1152
    %v1273 = vpop.f32.mrf.mxu0
    %v1274 = vadd.f32 %v1261, %v1273
    %v1275 = vpop.f32.mrf.mxu0
    %1276 = vdwg.mxu0
    %v1277 = vpack.c.bf16 %v1145, %v1145
    %v1278 = vpack.c.bf16 %v1274, %v1274
    %v1279 = vld [vmem:[#allocation23] sm:$0xff]
    %v1280 = vld [vmem:[#allocation23 + $0x8] sm:$0xff]
    %v1281 = vld [vmem:[#allocation23 + $0x10] sm:$0xff]
    %v1282 = vld [vmem:[#allocation23 + $0x18] sm:$0xff]
    %v1283 = vld [vmem:[#allocation23 + $0x20] sm:$0xff]
    %v1284 = vld [vmem:[#allocation23 + $0x28] sm:$0xff]
    %v1285 = vld [vmem:[#allocation23 + $0x30] sm:$0xff]
    %v1286 = vld [vmem:[#allocation23 + $0x38] sm:$0xff]
    %v1287 = vld [vmem:[#allocation23 + $0x40] sm:$0xff]
    %v1288 = vld [vmem:[#allocation23 + $0x48] sm:$0xff]
    %v1289 = vld [vmem:[#allocation23 + $0x50] sm:$0xff]
    %v1290 = vld [vmem:[#allocation23 + $0x58] sm:$0xff]
    %v1291 = vld [vmem:[#allocation23 + $0x60] sm:$0xff]
    %v1292 = vld [vmem:[#allocation23 + $0x68] sm:$0xff]
    %v1293 = vld [vmem:[#allocation23 + $0x70] sm:$0xff]
    %v1294 = vld [vmem:[#allocation23 + $0x78] sm:$0xff]
    %v1295 = vld [vmem:[#allocation23 + $0x80] sm:$0xff]
    %v1296 = vld [vmem:[#allocation23 + $0x88] sm:$0xff]
    %v1297 = vld [vmem:[#allocation23 + $0x90] sm:$0xff]
    %v1298 = vld [vmem:[#allocation23 + $0x98] sm:$0xff]
    %v1299 = vld [vmem:[#allocation23 + $0xa0] sm:$0xff]
    %v1300 = vld [vmem:[#allocation23 + $0xa8] sm:$0xff]
    %v1301 = vld [vmem:[#allocation23 + $0xb0] sm:$0xff]
    %v1302 = vld [vmem:[#allocation23 + $0xb8] sm:$0xff]
    %v1303 = vld [vmem:[#allocation23 + $0xc0] sm:$0xff]
    %v1304 = vld [vmem:[#allocation23 + $0xc8] sm:$0xff]
    %v1305 = vld [vmem:[#allocation23 + $0xd0] sm:$0xff]
    %v1306 = vld [vmem:[#allocation23 + $0xd8] sm:$0xff]
    %v1307 = vld [vmem:[#allocation23 + $0xe0] sm:$0xff]
    %v1308 = vld [vmem:[#allocation23 + $0xe8] sm:$0xff]
    %v1309 = vld [vmem:[#allocation23 + $0xf0] sm:$0xff]
    %v1310 = vld [vmem:[#allocation23 + $0xf8] sm:$0xff]
    %v1311 = vld [vmem:[#allocation24] sm:$0x3]
    %v1312 = vld [vmem:[#allocation24 + $0x2] sm:$0x3]
    %v1315 = vperm.slane %v1311, 0
    %v1316 = vperm.slane %v1311, 1
    %v1317 = vperm.slane %v1312, 0
    %v1318 = vperm.slane %v1312, 1
    %v1339 = vunpack.c.l.b16 %v1279
    %v1340 = vunpack.c.h.b16 %v1279
    %v1341 = vunpack.c.l.b16 %v1280
    %v1342 = vunpack.c.h.b16 %v1280
    %v1343 = vunpack.c.l.b16 %v1281
    %v1344 = vunpack.c.h.b16 %v1281
    %v1345 = vunpack.c.l.b16 %v1282
    %v1346 = vunpack.c.h.b16 %v1282
    %v1347 = vunpack.c.l.b16 %v1283
    %v1348 = vunpack.c.h.b16 %v1283
    %v1349 = vunpack.c.l.b16 %v1284
    %v1350 = vunpack.c.h.b16 %v1284
    %v1351 = vunpack.c.l.b16 %v1285
    %v1352 = vunpack.c.h.b16 %v1285
    %v1353 = vunpack.c.l.b16 %v1286
    %v1354 = vunpack.c.h.b16 %v1286
    %v1355 = vunpack.c.l.b16 %v1287
    %v1356 = vunpack.c.h.b16 %v1287
    %v1357 = vunpack.c.l.b16 %v1288
    %v1358 = vunpack.c.h.b16 %v1288
    %v1359 = vunpack.c.l.b16 %v1289
    %v1360 = vunpack.c.h.b16 %v1289
    %v1361 = vunpack.c.l.b16 %v1290
    %v1362 = vunpack.c.h.b16 %v1290
    %v1363 = vunpack.c.l.b16 %v1291
    %v1364 = vunpack.c.h.b16 %v1291
    %v1365 = vunpack.c.l.b16 %v1292
    %v1366 = vunpack.c.h.b16 %v1292
    %v1367 = vunpack.c.l.b16 %v1293
    %v1368 = vunpack.c.h.b16 %v1293
    %v1369 = vunpack.c.l.b16 %v1294
    %v1370 = vunpack.c.h.b16 %v1294
    %v1371 = vpack.c.b16 %v1341, %v1339
    %v1372 = vpack.c.b16 %v1342, %v1340
    %v1373 = vpack.c.b16 %v1345, %v1343
    %v1374 = vpack.c.b16 %v1346, %v1344
    %v1375 = vpack.c.b16 %v1349, %v1347
    %v1376 = vpack.c.b16 %v1350, %v1348
    %v1377 = vpack.c.b16 %v1353, %v1351
    %v1378 = vpack.c.b16 %v1354, %v1352
    %v1379 = vpack.c.b16 %v1357, %v1355
    %v1380 = vpack.c.b16 %v1358, %v1356
    %v1381 = vpack.c.b16 %v1361, %v1359
    %v1382 = vpack.c.b16 %v1362, %v1360
    %v1383 = vpack.c.b16 %v1365, %v1363
    %v1384 = vpack.c.b16 %v1366, %v1364
    %v1385 = vpack.c.b16 %v1369, %v1367
    %v1386 = vpack.c.b16 %v1370, %v1368
    %1403 = vmatpush.bf16.msra.mxu0 %v1385
    %1404 = vmatpush.bf16.msra.mxu0 %v1383
    %1405 = vmatpush.bf16.msra.mxu0 %v1381
    %1406 = vmatpush.bf16.msra.mxu0 %v1379
    %1407 = vmatpush.bf16.msra.mxu0 %v1377
    %1408 = vmatpush.bf16.msra.mxu0 %v1375
    %1409 = vmatpush.bf16.msra.mxu0 %v1373
    %1410 = vmatpush.bf16.msra.mxu0 %v1371
    %1411 = vmatmul.bf16.gmra.mxu0 %v1277
    %v1412 = vpop.f32.mrf.mxu0
    %v1413 = vadd.f32 %v1315, %v1412
    %v1414 = vpop.f32.mrf.mxu0
    %1415 = vdwg.mxu0
    %1416 = vmatpush.bf16.msra.mxu0 %v1386
    %1417 = vmatpush.bf16.msra.mxu0 %v1384
    %1418 = vmatpush.bf16.msra.mxu0 %v1382
    %1419 = vmatpush.bf16.msra.mxu0 %v1380
    %1420 = vmatpush.bf16.msra.mxu0 %v1378
    %1421 = vmatpush.bf16.msra.mxu0 %v1376
    %1422 = vmatpush.bf16.msra.mxu0 %v1374
    %1423 = vmatpush.bf16.msra.mxu0 %v1372
    %1424 = vmatmul.bf16.gmra.mxu0 %v1277
    %v1425 = vpop.f32.mrf.mxu0
    %v1426 = vadd.f32 %v1316, %v1425
    %v1427 = vpop.f32.mrf.mxu0
    %1428 = vdwg.mxu0
    %v1445 = vunpack.c.l.b16 %v1295
    %v1446 = vunpack.c.h.b16 %v1295
    %v1447 = vunpack.c.l.b16 %v1296
    %v1448 = vunpack.c.h.b16 %v1296
    %v1449 = vunpack.c.l.b16 %v1297
    %v1450 = vunpack.c.h.b16 %v1297
    %v1451 = vunpack.c.l.b16 %v1298
    %v1452 = vunpack.c.h.b16 %v1298
    %v1453 = vunpack.c.l.b16 %v1299
    %v1454 = vunpack.c.h.b16 %v1299
    %v1455 = vunpack.c.l.b16 %v1300
    %v1456 = vunpack.c.h.b16 %v1300
    %v1457 = vunpack.c.l.b16 %v1301
    %v1458 = vunpack.c.h.b16 %v1301
    %v1459 = vunpack.c.l.b16 %v1302
    %v1460 = vunpack.c.h.b16 %v1302
    %v1461 = vunpack.c.l.b16 %v1303
    %v1462 = vunpack.c.h.b16 %v1303
    %v1463 = vunpack.c.l.b16 %v1304
    %v1464 = vunpack.c.h.b16 %v1304
    %v1465 = vunpack.c.l.b16 %v1305
    %v1466 = vunpack.c.h.b16 %v1305
    %v1467 = vunpack.c.l.b16 %v1306
    %v1468 = vunpack.c.h.b16 %v1306
    %v1469 = vunpack.c.l.b16 %v1307
    %v1470 = vunpack.c.h.b16 %v1307
    %v1471 = vunpack.c.l.b16 %v1308
    %v1472 = vunpack.c.h.b16 %v1308
    %v1473 = vunpack.c.l.b16 %v1309
    %v1474 = vunpack.c.h.b16 %v1309
    %v1475 = vunpack.c.l.b16 %v1310
    %v1476 = vunpack.c.h.b16 %v1310
    %v1477 = vpack.c.b16 %v1447, %v1445
    %v1478 = vpack.c.b16 %v1448, %v1446
    %v1479 = vpack.c.b16 %v1451, %v1449
    %v1480 = vpack.c.b16 %v1452, %v1450
    %v1481 = vpack.c.b16 %v1455, %v1453
    %v1482 = vpack.c.b16 %v1456, %v1454
    %v1483 = vpack.c.b16 %v1459, %v1457
    %v1484 = vpack.c.b16 %v1460, %v1458
    %v1485 = vpack.c.b16 %v1463, %v1461
    %v1486 = vpack.c.b16 %v1464, %v1462
    %v1487 = vpack.c.b16 %v1467, %v1465
    %v1488 = vpack.c.b16 %v1468, %v1466
    %v1489 = vpack.c.b16 %v1471, %v1469
    %v1490 = vpack.c.b16 %v1472, %v1470
    %v1491 = vpack.c.b16 %v1475, %v1473
    %v1492 = vpack.c.b16 %v1476, %v1474
    %1509 = vmatpush.bf16.msra.mxu0 %v1491
    %1510 = vmatpush.bf16.msra.mxu0 %v1489
    %1511 = vmatpush.bf16.msra.mxu0 %v1487
    %1512 = vmatpush.bf16.msra.mxu0 %v1485
    %1513 = vmatpush.bf16.msra.mxu0 %v1483
    %1514 = vmatpush.bf16.msra.mxu0 %v1481
    %1515 = vmatpush.bf16.msra.mxu0 %v1479
    %1516 = vmatpush.bf16.msra.mxu0 %v1477
    %1517 = vmatmul.bf16.gmra.mxu0 %v1278
    %v1518 = vpop.f32.mrf.mxu0
    %v1519 = vadd.f32 %v1317, %v1518
    %v1520 = vpop.f32.mrf.mxu0
    %1521 = vdwg.mxu0
    %1522 = vmatpush.bf16.msra.mxu0 %v1492
    %1523 = vmatpush.bf16.msra.mxu0 %v1490
    %1524 = vmatpush.bf16.msra.mxu0 %v1488
    %1525 = vmatpush.bf16.msra.mxu0 %v1486
    %1526 = vmatpush.bf16.msra.mxu0 %v1484
    %1527 = vmatpush.bf16.msra.mxu0 %v1482
    %1528 = vmatpush.bf16.msra.mxu0 %v1480
    %1529 = vmatpush.bf16.msra.mxu0 %v1478
    %1530 = vmatmul.bf16.gmra.mxu0 %v1278
    %v1531 = vpop.f32.mrf.mxu0
    %v1532 = vadd.f32 %v1318, %v1531
    %v1533 = vpop.f32.mrf.mxu0
    %1534 = vdwg.mxu0
    %v1536 = vrot.slane %v1413, 1
    %1538 = vst [vmem:[%s65 + $0x1] sm:$0x1] %v1413
    %1539 = vst [vmem:[%s65 + $0x9] sm:$0x1] %v1536
    %v1541 = vrot.slane %v1426, 1
    %1543 = vst [vmem:[%s67 + $0x1] sm:$0x1] %v1426
    %1544 = vst [vmem:[%s67 + $0x9] sm:$0x1] %v1541
    %v1546 = vrot.slane %v1519, 1
    %1548 = vst [vmem:[%s65 + $0x2] sm:$0x1] %v1519
    %1549 = vst [vmem:[%s65 + $0xa] sm:$0x1] %v1546
    %v1551 = vrot.slane %v1532, 1
    %1553 = vst [vmem:[%s67 + $0x2] sm:$0x1] %v1532
    %1554 = vst [vmem:[%s67 + $0xa] sm:$0x1] %v1551
    %v1555 = vld [vmem:[%s11] sm:$0xf]
    %v1556 = vld [vmem:[%s11 + $0x4] sm:$0xf]
    %v1557 = vld [vmem:[%s11 + $0x8] sm:$0xf]
    %1561 = vst [vmem:[#allocation1] ss:$4 sm:$0xff] %v1555
    %v1562 = vld.sshfl [vmem:[#allocation1] sm:$0xff pattern:$0x73625140]
    %v1563 = vld.sshfl [vmem:[#allocation1 + $0x8] sm:$0xff pattern:$0x73625140]
    %s1564 = scalar_lea.vmem [#allocation1], 32
    %1565 = vst [vmem:[%s1564] ss:$4 sm:$0xff] %v1556
    %v1566 = vld.sshfl [vmem:[#allocation1 + $0x20] sm:$0xff pattern:$0x73625140]
    %v1567 = vld.sshfl [vmem:[#allocation1 + $0x28] sm:$0xff pattern:$0x73625140]
    %1568 = vst [vmem:[#allocation1] ss:$4 sm:$0xff] %v1557
    %v1569 = vld.sshfl [vmem:[#allocation1] sm:$0xff pattern:$0x73625140]
    %v1570 = vld.sshfl [vmem:[#allocation1 + $0x8] sm:$0xff pattern:$0x73625140]
    %v1577 = vpack.c.bf16 %v1563, %v1562
    %v1578 = vpack.c.bf16 %v1567, %v1566
    %v1579 = vpack.c.bf16 %v1570, %v1569
    %v1580 = vld [vmem:[%s37] sm:$0xf]
    %v1581 = vld [vmem:[%s37 + $0x4] sm:$0xf]
    %v1582 = vld [vmem:[%s37 + $0x8] sm:$0xf]
    %v1583 = vld [vmem:[%s37 + $0xc] sm:$0xf]
    %v1584 = vld [vmem:[%s37 + $0x10] sm:$0xf]
    %v1585 = vld [vmem:[%s37 + $0x14] sm:$0xf]
    %v1586 = vld [vmem:[%s37 + $0x18] sm:$0xf]
    %v1587 = vld [vmem:[%s37 + $0x1c] sm:$0xf]
    %v1588 = vld [vmem:[%s37 + $0x20] sm:$0xf]
    %v1589 = vld [vmem:[%s37 + $0x24] sm:$0xf]
    %v1590 = vld [vmem:[%s37 + $0x28] sm:$0xf]
    %v1591 = vld [vmem:[%s37 + $0x2c] sm:$0xf]
    %v1592 = vld [vmem:[%s37 + $0x30] sm:$0xf]
    %v1593 = vld [vmem:[%s37 + $0x34] sm:$0xf]
    %v1594 = vld [vmem:[%s37 + $0x38] sm:$0xf]
    %v1595 = vld [vmem:[%s37 + $0x3c] sm:$0xf]
    %v1596 = vld [vmem:[%s37 + $0x40] sm:$0xf]
    %v1597 = vld [vmem:[%s37 + $0x44] sm:$0xf]
    %v1598 = vld [vmem:[%s37 + $0x48] sm:$0xf]
    %v1599 = vld [vmem:[%s37 + $0x4c] sm:$0xf]
    %v1600 = vld [vmem:[%s37 + $0x50] sm:$0xf]
    %v1601 = vld [vmem:[%s37 + $0x54] sm:$0xf]
    %v1602 = vld [vmem:[%s37 + $0x58] sm:$0xf]
    %v1603 = vld [vmem:[%s37 + $0x5c] sm:$0xf]
    %v1604 = vld [vmem:[%s37 + $0x60] sm:$0xf]
    %v1605 = vld [vmem:[%s37 + $0x64] sm:$0xf]
    %v1606 = vld [vmem:[%s37 + $0x68] sm:$0xf]
    %v1607 = vld [vmem:[%s37 + $0x6c] sm:$0xf]
    %v1608 = vld [vmem:[%s37 + $0x70] sm:$0xf]
    %v1609 = vld [vmem:[%s37 + $0x74] sm:$0xf]
    %v1610 = vld [vmem:[%s37 + $0x78] sm:$0xf]
    %v1611 = vld [vmem:[%s37 + $0x7c] sm:$0xf]
    %v1612 = vld [vmem:[%s37 + $0x80] sm:$0xf]
    %v1613 = vld [vmem:[%s37 + $0x84] sm:$0xf]
    %v1614 = vld [vmem:[%s37 + $0x88] sm:$0xf]
    %v1615 = vld [vmem:[%s37 + $0x8c] sm:$0xf]
    %v1616 = vld [vmem:[%s37 + $0x90] sm:$0xf]
    %v1617 = vld [vmem:[%s37 + $0x94] sm:$0xf]
    %v1618 = vld [vmem:[%s37 + $0x98] sm:$0xf]
    %v1619 = vld [vmem:[%s37 + $0x9c] sm:$0xf]
    %v1620 = vld [vmem:[%s37 + $0xa0] sm:$0xf]
    %v1621 = vld [vmem:[%s37 + $0xa4] sm:$0xf]
    %v1622 = vld [vmem:[%s37 + $0xa8] sm:$0xf]
    %v1623 = vld [vmem:[%s37 + $0xac] sm:$0xf]
    %v1624 = vld [vmem:[%s37 + $0xb0] sm:$0xf]
    %v1625 = vld [vmem:[%s37 + $0xb4] sm:$0xf]
    %v1626 = vld [vmem:[%s37 + $0xb8] sm:$0xf]
    %v1627 = vld [vmem:[%s37 + $0xbc] sm:$0xf]
    %v1628 = vld [vmem:[%s37 + $0xc0] sm:$0xf]
    %v1629 = vld [vmem:[%s37 + $0xc4] sm:$0xf]
    %v1630 = vld [vmem:[%s37 + $0xc8] sm:$0xf]
    %v1631 = vld [vmem:[%s37 + $0xcc] sm:$0xf]
    %v1632 = vld [vmem:[%s37 + $0xd0] sm:$0xf]
    %v1633 = vld [vmem:[%s37 + $0xd4] sm:$0xf]
    %v1634 = vld [vmem:[%s37 + $0xd8] sm:$0xf]
    %v1635 = vld [vmem:[%s37 + $0xdc] sm:$0xf]
    %v1636 = vld [vmem:[%s37 + $0xe0] sm:$0xf]
    %v1637 = vld [vmem:[%s37 + $0xe4] sm:$0xf]
    %v1638 = vld [vmem:[%s37 + $0xe8] sm:$0xf]
    %v1639 = vld [vmem:[%s37 + $0xec] sm:$0xf]
    %v1640 = vld [vmem:[%s37 + $0xf0] sm:$0xf]
    %v1641 = vld [vmem:[%s37 + $0xf4] sm:$0xf]
    %v1642 = vld [vmem:[%s37 + $0xf8] sm:$0xf]
    %v1643 = vld [vmem:[%s37 + $0xfc] sm:$0xf]
    %v1644 = vld [vmem:[%s37 + $0x100] sm:$0xf]
    %v1645 = vld [vmem:[%s37 + $0x104] sm:$0xf]
    %v1646 = vld [vmem:[%s37 + $0x108] sm:$0xf]
    %v1647 = vld [vmem:[%s37 + $0x10c] sm:$0xf]
    %v1648 = vld [vmem:[%s37 + $0x110] sm:$0xf]
    %v1649 = vld [vmem:[%s37 + $0x114] sm:$0xf]
    %v1650 = vld [vmem:[%s37 + $0x118] sm:$0xf]
    %v1651 = vld [vmem:[%s37 + $0x11c] sm:$0xf]
    %v1652 = vld [vmem:[%s37 + $0x120] sm:$0xf]
    %v1653 = vld [vmem:[%s37 + $0x124] sm:$0xf]
    %v1654 = vld [vmem:[%s37 + $0x128] sm:$0xf]
    %v1655 = vld [vmem:[%s37 + $0x12c] sm:$0xf]
    %v1656 = vld [vmem:[%s37 + $0x130] sm:$0xf]
    %v1657 = vld [vmem:[%s37 + $0x134] sm:$0xf]
    %v1658 = vld [vmem:[%s37 + $0x138] sm:$0xf]
    %v1659 = vld [vmem:[%s37 + $0x13c] sm:$0xf]
    %v1660 = vld [vmem:[%s37 + $0x140] sm:$0xf]
    %v1661 = vld [vmem:[%s37 + $0x144] sm:$0xf]
    %v1662 = vld [vmem:[%s37 + $0x148] sm:$0xf]
    %v1663 = vld [vmem:[%s37 + $0x14c] sm:$0xf]
    %v1664 = vld [vmem:[%s37 + $0x150] sm:$0xf]
    %v1665 = vld [vmem:[%s37 + $0x154] sm:$0xf]
    %v1666 = vld [vmem:[%s37 + $0x158] sm:$0xf]
    %v1667 = vld [vmem:[%s37 + $0x15c] sm:$0xf]
    %v1668 = vld [vmem:[%s37 + $0x160] sm:$0xf]
    %v1669 = vld [vmem:[%s37 + $0x164] sm:$0xf]
    %v1670 = vld [vmem:[%s37 + $0x168] sm:$0xf]
    %v1671 = vld [vmem:[%s37 + $0x16c] sm:$0xf]
    %v1672 = vld [vmem:[%s37 + $0x170] sm:$0xf]
    %v1673 = vld [vmem:[%s37 + $0x174] sm:$0xf]
    %v1674 = vld [vmem:[%s37 + $0x178] sm:$0xf]
    %v1675 = vld [vmem:[%s37 + $0x17c] sm:$0xf]
    %v1676 = vld [vmem:[#allocation21] sm:$0x1]
    %v1677 = vld [vmem:[#allocation21 + $0x1] sm:$0x1]
    %v1678 = vld [vmem:[#allocation21 + $0x2] sm:$0x1]
    %v1682 = vperm.slane %v1676, 0
    %v1683 = vperm.slane %v1677, 0
    %v1684 = vperm.slane %v1678, 0
    %v1689 = vunpack.c.l.b16 %v1577
    %v1690 = vunpack.c.h.b16 %v1577
    %v1691 = vpack.c.b16 %v1689, %v1689
    %v1692 = vpack.c.b16 %v1690, %v1690
    %v1727 = vunpack.c.l.b16 %v1580
    %v1728 = vunpack.c.l.b16 %v1581
    %v1729 = vunpack.c.l.b16 %v1582
    %v1730 = vunpack.c.l.b16 %v1583
    %v1731 = vunpack.c.l.b16 %v1584
    %v1732 = vunpack.c.l.b16 %v1585
    %v1733 = vunpack.c.l.b16 %v1586
    %v1734 = vunpack.c.l.b16 %v1587
    %v1735 = vunpack.c.l.b16 %v1588
    %v1736 = vunpack.c.l.b16 %v1589
    %v1737 = vunpack.c.l.b16 %v1590
    %v1738 = vunpack.c.l.b16 %v1591
    %v1739 = vunpack.c.l.b16 %v1592
    %v1740 = vunpack.c.l.b16 %v1593
    %v1741 = vunpack.c.l.b16 %v1594
    %v1742 = vunpack.c.l.b16 %v1595
    %v1743 = vunpack.c.l.b16 %v1596
    %v1744 = vunpack.c.l.b16 %v1597
    %v1745 = vunpack.c.l.b16 %v1598
    %v1746 = vunpack.c.l.b16 %v1599
    %v1747 = vunpack.c.l.b16 %v1600
    %v1748 = vunpack.c.l.b16 %v1601
    %v1749 = vunpack.c.l.b16 %v1602
    %v1750 = vunpack.c.l.b16 %v1603
    %v1751 = vunpack.c.l.b16 %v1604
    %v1752 = vunpack.c.l.b16 %v1605
    %v1753 = vunpack.c.l.b16 %v1606
    %v1754 = vunpack.c.l.b16 %v1607
    %v1755 = vunpack.c.l.b16 %v1608
    %v1756 = vunpack.c.l.b16 %v1609
    %v1757 = vunpack.c.l.b16 %v1610
    %v1758 = vunpack.c.l.b16 %v1611
    %v1759 = vpack.c.b16 %v1728, %v1727
    %v1760 = vpack.c.b16 %v1730, %v1729
    %v1761 = vpack.c.b16 %v1732, %v1731
    %v1762 = vpack.c.b16 %v1734, %v1733
    %v1763 = vpack.c.b16 %v1736, %v1735
    %v1764 = vpack.c.b16 %v1738, %v1737
    %v1765 = vpack.c.b16 %v1740, %v1739
    %v1766 = vpack.c.b16 %v1742, %v1741
    %v1767 = vpack.c.b16 %v1744, %v1743
    %v1768 = vpack.c.b16 %v1746, %v1745
    %v1769 = vpack.c.b16 %v1748, %v1747
    %v1770 = vpack.c.b16 %v1750, %v1749
    %v1771 = vpack.c.b16 %v1752, %v1751
    %v1772 = vpack.c.b16 %v1754, %v1753
    %v1773 = vpack.c.b16 %v1756, %v1755
    %v1774 = vpack.c.b16 %v1758, %v1757
    %1791 = vmatpush.bf16.msra.mxu0 %v1766
    %1792 = vmatpush.bf16.msra.mxu0 %v1765
    %1793 = vmatpush.bf16.msra.mxu0 %v1764
    %1794 = vmatpush.bf16.msra.mxu0 %v1763
    %1795 = vmatpush.bf16.msra.mxu0 %v1762
    %1796 = vmatpush.bf16.msra.mxu0 %v1761
    %1797 = vmatpush.bf16.msra.mxu0 %v1760
    %1798 = vmatpush.bf16.msra.mxu0 %v1759
    %1799 = vmatmul.bf16.gmra.mxu0 %v1691
    %v1800 = vpop.f32.mrf.mxu0
    %v1801 = vadd.f32 %v1682, %v1800
    %v1802 = vpop.f32.mrf.mxu0
    %1803 = vdwg.mxu0
    %1804 = vmatpush.bf16.msra.mxu0 %v1774
    %1805 = vmatpush.bf16.msra.mxu0 %v1773
    %1806 = vmatpush.bf16.msra.mxu0 %v1772
    %1807 = vmatpush.bf16.msra.mxu0 %v1771
    %1808 = vmatpush.bf16.msra.mxu0 %v1770
    %1809 = vmatpush.bf16.msra.mxu0 %v1769
    %1810 = vmatpush.bf16.msra.mxu0 %v1768
    %1811 = vmatpush.bf16.msra.mxu0 %v1767
    %1812 = vmatmul.bf16.gmra.mxu0 %v1692
    %v1813 = vpop.f32.mrf.mxu0
    %v1814 = vadd.f32 %v1801, %v1813
    %v1815 = vpop.f32.mrf.mxu0
    %1816 = vdwg.mxu0
    %v1818 = vunpack.c.l.b16 %v1578
    %v1819 = vunpack.c.h.b16 %v1578
    %v1820 = vpack.c.b16 %v1818, %v1818
    %v1821 = vpack.c.b16 %v1819, %v1819
    %v1856 = vunpack.c.l.b16 %v1612
    %v1857 = vunpack.c.l.b16 %v1613
    %v1858 = vunpack.c.l.b16 %v1614
    %v1859 = vunpack.c.l.b16 %v1615
    %v1860 = vunpack.c.l.b16 %v1616
    %v1861 = vunpack.c.l.b16 %v1617
    %v1862 = vunpack.c.l.b16 %v1618
    %v1863 = vunpack.c.l.b16 %v1619
    %v1864 = vunpack.c.l.b16 %v1620
    %v1865 = vunpack.c.l.b16 %v1621
    %v1866 = vunpack.c.l.b16 %v1622
    %v1867 = vunpack.c.l.b16 %v1623
    %v1868 = vunpack.c.l.b16 %v1624
    %v1869 = vunpack.c.l.b16 %v1625
    %v1870 = vunpack.c.l.b16 %v1626
    %v1871 = vunpack.c.l.b16 %v1627
    %v1872 = vunpack.c.l.b16 %v1628
    %v1873 = vunpack.c.l.b16 %v1629
    %v1874 = vunpack.c.l.b16 %v1630
    %v1875 = vunpack.c.l.b16 %v1631
    %v1876 = vunpack.c.l.b16 %v1632
    %v1877 = vunpack.c.l.b16 %v1633
    %v1878 = vunpack.c.l.b16 %v1634
    %v1879 = vunpack.c.l.b16 %v1635
    %v1880 = vunpack.c.l.b16 %v1636
    %v1881 = vunpack.c.l.b16 %v1637
    %v1882 = vunpack.c.l.b16 %v1638
    %v1883 = vunpack.c.l.b16 %v1639
    %v1884 = vunpack.c.l.b16 %v1640
    %v1885 = vunpack.c.l.b16 %v1641
    %v1886 = vunpack.c.l.b16 %v1642
    %v1887 = vunpack.c.l.b16 %v1643
    %v1888 = vpack.c.b16 %v1857, %v1856
    %v1889 = vpack.c.b16 %v1859, %v1858
    %v1890 = vpack.c.b16 %v1861, %v1860
    %v1891 = vpack.c.b16 %v1863, %v1862
    %v1892 = vpack.c.b16 %v1865, %v1864
    %v1893 = vpack.c.b16 %v1867, %v1866
    %v1894 = vpack.c.b16 %v1869, %v1868
    %v1895 = vpack.c.b16 %v1871, %v1870
    %v1896 = vpack.c.b16 %v1873, %v1872
    %v1897 = vpack.c.b16 %v1875, %v1874
    %v1898 = vpack.c.b16 %v1877, %v1876
    %v1899 = vpack.c.b16 %v1879, %v1878
    %v1900 = vpack.c.b16 %v1881, %v1880
    %v1901 = vpack.c.b16 %v1883, %v1882
    %v1902 = vpack.c.b16 %v1885, %v1884
    %v1903 = vpack.c.b16 %v1887, %v1886
    %1920 = vmatpush.bf16.msra.mxu0 %v1895
    %1921 = vmatpush.bf16.msra.mxu0 %v1894
    %1922 = vmatpush.bf16.msra.mxu0 %v1893
    %1923 = vmatpush.bf16.msra.mxu0 %v1892
    %1924 = vmatpush.bf16.msra.mxu0 %v1891
    %1925 = vmatpush.bf16.msra.mxu0 %v1890
    %1926 = vmatpush.bf16.msra.mxu0 %v1889
    %1927 = vmatpush.bf16.msra.mxu0 %v1888
    %1928 = vmatmul.bf16.gmra.mxu0 %v1820
    %v1929 = vpop.f32.mrf.mxu0
    %v1930 = vadd.f32 %v1683, %v1929
    %v1931 = vpop.f32.mrf.mxu0
    %1932 = vdwg.mxu0
    %1933 = vmatpush.bf16.msra.mxu0 %v1903
    %1934 = vmatpush.bf16.msra.mxu0 %v1902
    %1935 = vmatpush.bf16.msra.mxu0 %v1901
    %1936 = vmatpush.bf16.msra.mxu0 %v1900
    %1937 = vmatpush.bf16.msra.mxu0 %v1899
    %1938 = vmatpush.bf16.msra.mxu0 %v1898
    %1939 = vmatpush.bf16.msra.mxu0 %v1897
    %1940 = vmatpush.bf16.msra.mxu0 %v1896
    %1941 = vmatmul.bf16.gmra.mxu0 %v1821
    %v1942 = vpop.f32.mrf.mxu0
    %v1943 = vadd.f32 %v1930, %v1942
    %v1944 = vpop.f32.mrf.mxu0
    %1945 = vdwg.mxu0
    %v1947 = vunpack.c.l.b16 %v1579
    %v1948 = vunpack.c.h.b16 %v1579
    %v1949 = vpack.c.b16 %v1947, %v1947
    %v1950 = vpack.c.b16 %v1948, %v1948
    %v1985 = vunpack.c.l.b16 %v1644
    %v1986 = vunpack.c.l.b16 %v1645
    %v1987 = vunpack.c.l.b16 %v1646
    %v1988 = vunpack.c.l.b16 %v1647
    %v1989 = vunpack.c.l.b16 %v1648
    %v1990 = vunpack.c.l.b16 %v1649
    %v1991 = vunpack.c.l.b16 %v1650
    %v1992 = vunpack.c.l.b16 %v1651
    %v1993 = vunpack.c.l.b16 %v1652
    %v1994 = vunpack.c.l.b16 %v1653
    %v1995 = vunpack.c.l.b16 %v1654
    %v1996 = vunpack.c.l.b16 %v1655
    %v1997 = vunpack.c.l.b16 %v1656
    %v1998 = vunpack.c.l.b16 %v1657
    %v1999 = vunpack.c.l.b16 %v1658
    %v2000 = vunpack.c.l.b16 %v1659
    %v2001 = vunpack.c.l.b16 %v1660
    %v2002 = vunpack.c.l.b16 %v1661
    %v2003 = vunpack.c.l.b16 %v1662
    %v2004 = vunpack.c.l.b16 %v1663
    %v2005 = vunpack.c.l.b16 %v1664
    %v2006 = vunpack.c.l.b16 %v1665
    %v2007 = vunpack.c.l.b16 %v1666
    %v2008 = vunpack.c.l.b16 %v1667
    %v2009 = vunpack.c.l.b16 %v1668
    %v2010 = vunpack.c.l.b16 %v1669
    %v2011 = vunpack.c.l.b16 %v1670
    %v2012 = vunpack.c.l.b16 %v1671
    %v2013 = vunpack.c.l.b16 %v1672
    %v2014 = vunpack.c.l.b16 %v1673
    %v2015 = vunpack.c.l.b16 %v1674
    %v2016 = vunpack.c.l.b16 %v1675
    %v2017 = vpack.c.b16 %v1986, %v1985
    %v2018 = vpack.c.b16 %v1988, %v1987
    %v2019 = vpack.c.b16 %v1990, %v1989
    %v2020 = vpack.c.b16 %v1992, %v1991
    %v2021 = vpack.c.b16 %v1994, %v1993
    %v2022 = vpack.c.b16 %v1996, %v1995
    %v2023 = vpack.c.b16 %v1998, %v1997
    %v2024 = vpack.c.b16 %v2000, %v1999
    %v2025 = vpack.c.b16 %v2002, %v2001
    %v2026 = vpack.c.b16 %v2004, %v2003
    %v2027 = vpack.c.b16 %v2006, %v2005
    %v2028 = vpack.c.b16 %v2008, %v2007
    %v2029 = vpack.c.b16 %v2010, %v2009
    %v2030 = vpack.c.b16 %v2012, %v2011
    %v2031 = vpack.c.b16 %v2014, %v2013
    %v2032 = vpack.c.b16 %v2016, %v2015
    %2049 = vmatpush.bf16.msra.mxu0 %v2024
    %2050 = vmatpush.bf16.msra.mxu0 %v2023
    %2051 = vmatpush.bf16.msra.mxu0 %v2022
    %2052 = vmatpush.bf16.msra.mxu0 %v2021
    %2053 = vmatpush.bf16.msra.mxu0 %v2020
    %2054 = vmatpush.bf16.msra.mxu0 %v2019
    %2055 = vmatpush.bf16.msra.mxu0 %v2018
    %2056 = vmatpush.bf16.msra.mxu0 %v2017
    %2057 = vmatmul.bf16.gmra.mxu0 %v1949
    %v2058 = vpop.f32.mrf.mxu0
    %v2059 = vadd.f32 %v1684, %v2058
    %v2060 = vpop.f32.mrf.mxu0
    %2061 = vdwg.mxu0
    %2062 = vmatpush.bf16.msra.mxu0 %v2032
    %2063 = vmatpush.bf16.msra.mxu0 %v2031
    %2064 = vmatpush.bf16.msra.mxu0 %v2030
    %2065 = vmatpush.bf16.msra.mxu0 %v2029
    %2066 = vmatpush.bf16.msra.mxu0 %v2028
    %2067 = vmatpush.bf16.msra.mxu0 %v2027
    %2068 = vmatpush.bf16.msra.mxu0 %v2026
    %2069 = vmatpush.bf16.msra.mxu0 %v2025
    %2070 = vmatmul.bf16.gmra.mxu0 %v1950
    %v2071 = vpop.f32.mrf.mxu0
    %v2072 = vadd.f32 %v2059, %v2071
    %v2073 = vpop.f32.mrf.mxu0
    %2074 = vdwg.mxu0
    %v2075 = vpack.c.bf16 %v1814, %v1814
    %v2076 = vpack.c.bf16 %v1943, %v1943
    %v2077 = vpack.c.bf16 %v2072, %v2072
    %v2078 = vld [vmem:[#allocation26] sm:$0xff]
    %v2079 = vld [vmem:[#allocation26 + $0x8] sm:$0xff]
    %v2080 = vld [vmem:[#allocation26 + $0x10] sm:$0xff]
    %v2081 = vld [vmem:[#allocation26 + $0x18] sm:$0xff]
    %v2082 = vld [vmem:[#allocation26 + $0x20] sm:$0xff]
    %v2083 = vld [vmem:[#allocation26 + $0x28] sm:$0xff]
    %v2084 = vld [vmem:[#allocation26 + $0x30] sm:$0xff]
    %v2085 = vld [vmem:[#allocation26 + $0x38] sm:$0xff]
    %v2086 = vld [vmem:[#allocation26 + $0x40] sm:$0xff]
    %v2087 = vld [vmem:[#allocation26 + $0x48] sm:$0xff]
    %v2088 = vld [vmem:[#allocation26 + $0x50] sm:$0xff]
    %v2089 = vld [vmem:[#allocation26 + $0x58] sm:$0xff]
    %v2090 = vld [vmem:[#allocation26 + $0x60] sm:$0xff]
    %v2091 = vld [vmem:[#allocation26 + $0x68] sm:$0xff]
    %v2092 = vld [vmem:[#allocation26 + $0x70] sm:$0xff]
    %v2093 = vld [vmem:[#allocation26 + $0x78] sm:$0xff]
    %v2094 = vld [vmem:[#allocation26 + $0x80] sm:$0xff]
    %v2095 = vld [vmem:[#allocation26 + $0x88] sm:$0xff]
    %v2096 = vld [vmem:[#allocation26 + $0x90] sm:$0xff]
    %v2097 = vld [vmem:[#allocation26 + $0x98] sm:$0xff]
    %v2098 = vld [vmem:[#allocation26 + $0xa0] sm:$0xff]
    %v2099 = vld [vmem:[#allocation26 + $0xa8] sm:$0xff]
    %v2100 = vld [vmem:[#allocation26 + $0xb0] sm:$0xff]
    %v2101 = vld [vmem:[#allocation26 + $0xb8] sm:$0xff]
    %v2102 = vld [vmem:[#allocation26 + $0xc0] sm:$0xff]
    %v2103 = vld [vmem:[#allocation26 + $0xc8] sm:$0xff]
    %v2104 = vld [vmem:[#allocation26 + $0xd0] sm:$0xff]
    %v2105 = vld [vmem:[#allocation26 + $0xd8] sm:$0xff]
    %v2106 = vld [vmem:[#allocation26 + $0xe0] sm:$0xff]
    %v2107 = vld [vmem:[#allocation26 + $0xe8] sm:$0xff]
    %v2108 = vld [vmem:[#allocation26 + $0xf0] sm:$0xff]
    %v2109 = vld [vmem:[#allocation26 + $0xf8] sm:$0xff]
    %v2110 = vld [vmem:[#allocation26 + $0x100] sm:$0xff]
    %v2111 = vld [vmem:[#allocation26 + $0x108] sm:$0xff]
    %v2112 = vld [vmem:[#allocation26 + $0x110] sm:$0xff]
    %v2113 = vld [vmem:[#allocation26 + $0x118] sm:$0xff]
    %v2114 = vld [vmem:[#allocation26 + $0x120] sm:$0xff]
    %v2115 = vld [vmem:[#allocation26 + $0x128] sm:$0xff]
    %v2116 = vld [vmem:[#allocation26 + $0x130] sm:$0xff]
    %v2117 = vld [vmem:[#allocation26 + $0x138] sm:$0xff]
    %v2118 = vld [vmem:[#allocation26 + $0x140] sm:$0xff]
    %v2119 = vld [vmem:[#allocation26 + $0x148] sm:$0xff]
    %v2120 = vld [vmem:[#allocation26 + $0x150] sm:$0xff]
    %v2121 = vld [vmem:[#allocation26 + $0x158] sm:$0xff]
    %v2122 = vld [vmem:[#allocation26 + $0x160] sm:$0xff]
    %v2123 = vld [vmem:[#allocation26 + $0x168] sm:$0xff]
    %v2124 = vld [vmem:[#allocation26 + $0x170] sm:$0xff]
    %v2125 = vld [vmem:[#allocation26 + $0x178] sm:$0xff]
    %v2126 = vld [vmem:[%s47] sm:$0x3]
    %v2127 = vld [vmem:[%s47 + $0x2] sm:$0x3]
    %v2128 = vld [vmem:[%s47 + $0x4] sm:$0x3]
    %v2132 = vperm.slane %v2126, 0
    %v2133 = vperm.slane %v2126, 1
    %v2134 = vperm.slane %v2127, 0
    %v2135 = vperm.slane %v2127, 1
    %v2136 = vperm.slane %v2128, 0
    %v2137 = vperm.slane %v2128, 1
    %v2160 = vunpack.c.l.b16 %v2078
    %v2161 = vunpack.c.h.b16 %v2078
    %v2162 = vunpack.c.l.b16 %v2079
    %v2163 = vunpack.c.h.b16 %v2079
    %v2164 = vunpack.c.l.b16 %v2080
    %v2165 = vunpack.c.h.b16 %v2080
    %v2166 = vunpack.c.l.b16 %v2081
    %v2167 = vunpack.c.h.b16 %v2081
    %v2168 = vunpack.c.l.b16 %v2082
    %v2169 = vunpack.c.h.b16 %v2082
    %v2170 = vunpack.c.l.b16 %v2083
    %v2171 = vunpack.c.h.b16 %v2083
    %v2172 = vunpack.c.l.b16 %v2084
    %v2173 = vunpack.c.h.b16 %v2084
    %v2174 = vunpack.c.l.b16 %v2085
    %v2175 = vunpack.c.h.b16 %v2085
    %v2176 = vunpack.c.l.b16 %v2086
    %v2177 = vunpack.c.h.b16 %v2086
    %v2178 = vunpack.c.l.b16 %v2087
    %v2179 = vunpack.c.h.b16 %v2087
    %v2180 = vunpack.c.l.b16 %v2088
    %v2181 = vunpack.c.h.b16 %v2088
    %v2182 = vunpack.c.l.b16 %v2089
    %v2183 = vunpack.c.h.b16 %v2089
    %v2184 = vunpack.c.l.b16 %v2090
    %v2185 = vunpack.c.h.b16 %v2090
    %v2186 = vunpack.c.l.b16 %v2091
    %v2187 = vunpack.c.h.b16 %v2091
    %v2188 = vunpack.c.l.b16 %v2092
    %v2189 = vunpack.c.h.b16 %v2092
    %v2190 = vunpack.c.l.b16 %v2093
    %v2191 = vunpack.c.h.b16 %v2093
    %v2192 = vpack.c.b16 %v2162, %v2160
    %v2193 = vpack.c.b16 %v2163, %v2161
    %v2194 = vpack.c.b16 %v2166, %v2164
    %v2195 = vpack.c.b16 %v2167, %v2165
    %v2196 = vpack.c.b16 %v2170, %v2168
    %v2197 = vpack.c.b16 %v2171, %v2169
    %v2198 = vpack.c.b16 %v2174, %v2172
    %v2199 = vpack.c.b16 %v2175, %v2173
    %v2200 = vpack.c.b16 %v2178, %v2176
    %v2201 = vpack.c.b16 %v2179, %v2177
    %v2202 = vpack.c.b16 %v2182, %v2180
    %v2203 = vpack.c.b16 %v2183, %v2181
    %v2204 = vpack.c.b16 %v2186, %v2184
    %v2205 = vpack.c.b16 %v2187, %v2185
    %v2206 = vpack.c.b16 %v2190, %v2188
    %v2207 = vpack.c.b16 %v2191, %v2189
    %2224 = vmatpush.bf16.msra.mxu0 %v2206
    %2225 = vmatpush.bf16.msra.mxu0 %v2204
    %2226 = vmatpush.bf16.msra.mxu0 %v2202
    %2227 = vmatpush.bf16.msra.mxu0 %v2200
    %2228 = vmatpush.bf16.msra.mxu0 %v2198
    %2229 = vmatpush.bf16.msra.mxu0 %v2196
    %2230 = vmatpush.bf16.msra.mxu0 %v2194
    %2231 = vmatpush.bf16.msra.mxu0 %v2192
    %2232 = vmatmul.bf16.gmra.mxu0 %v2075
    %v2233 = vpop.f32.mrf.mxu0
    %v2234 = vadd.f32 %v2132, %v2233
    %v2235 = vpop.f32.mrf.mxu0
    %2236 = vdwg.mxu0
    %2237 = vmatpush.bf16.msra.mxu0 %v2207
    %2238 = vmatpush.bf16.msra.mxu0 %v2205
    %2239 = vmatpush.bf16.msra.mxu0 %v2203
    %2240 = vmatpush.bf16.msra.mxu0 %v2201
    %2241 = vmatpush.bf16.msra.mxu0 %v2199
    %2242 = vmatpush.bf16.msra.mxu0 %v2197
    %2243 = vmatpush.bf16.msra.mxu0 %v2195
    %2244 = vmatpush.bf16.msra.mxu0 %v2193
    %2245 = vmatmul.bf16.gmra.mxu0 %v2075
    %v2246 = vpop.f32.mrf.mxu0
    %v2247 = vadd.f32 %v2133, %v2246
    %v2248 = vpop.f32.mrf.mxu0
    %2249 = vdwg.mxu0
    %v2266 = vunpack.c.l.b16 %v2094
    %v2267 = vunpack.c.h.b16 %v2094
    %v2268 = vunpack.c.l.b16 %v2095
    %v2269 = vunpack.c.h.b16 %v2095
    %v2270 = vunpack.c.l.b16 %v2096
    %v2271 = vunpack.c.h.b16 %v2096
    %v2272 = vunpack.c.l.b16 %v2097
    %v2273 = vunpack.c.h.b16 %v2097
    %v2274 = vunpack.c.l.b16 %v2098
    %v2275 = vunpack.c.h.b16 %v2098
    %v2276 = vunpack.c.l.b16 %v2099
    %v2277 = vunpack.c.h.b16 %v2099
    %v2278 = vunpack.c.l.b16 %v2100
    %v2279 = vunpack.c.h.b16 %v2100
    %v2280 = vunpack.c.l.b16 %v2101
    %v2281 = vunpack.c.h.b16 %v2101
    %v2282 = vunpack.c.l.b16 %v2102
    %v2283 = vunpack.c.h.b16 %v2102
    %v2284 = vunpack.c.l.b16 %v2103
    %v2285 = vunpack.c.h.b16 %v2103
    %v2286 = vunpack.c.l.b16 %v2104
    %v2287 = vunpack.c.h.b16 %v2104
    %v2288 = vunpack.c.l.b16 %v2105
    %v2289 = vunpack.c.h.b16 %v2105
    %v2290 = vunpack.c.l.b16 %v2106
    %v2291 = vunpack.c.h.b16 %v2106
    %v2292 = vunpack.c.l.b16 %v2107
    %v2293 = vunpack.c.h.b16 %v2107
    %v2294 = vunpack.c.l.b16 %v2108
    %v2295 = vunpack.c.h.b16 %v2108
    %v2296 = vunpack.c.l.b16 %v2109
    %v2297 = vunpack.c.h.b16 %v2109
    %v2298 = vpack.c.b16 %v2268, %v2266
    %v2299 = vpack.c.b16 %v2269, %v2267
    %v2300 = vpack.c.b16 %v2272, %v2270
    %v2301 = vpack.c.b16 %v2273, %v2271
    %v2302 = vpack.c.b16 %v2276, %v2274
    %v2303 = vpack.c.b16 %v2277, %v2275
    %v2304 = vpack.c.b16 %v2280, %v2278
    %v2305 = vpack.c.b16 %v2281, %v2279
    %v2306 = vpack.c.b16 %v2284, %v2282
    %v2307 = vpack.c.b16 %v2285, %v2283
    %v2308 = vpack.c.b16 %v2288, %v2286
    %v2309 = vpack.c.b16 %v2289, %v2287
    %v2310 = vpack.c.b16 %v2292, %v2290
    %v2311 = vpack.c.b16 %v2293, %v2291
    %v2312 = vpack.c.b16 %v2296, %v2294
    %v2313 = vpack.c.b16 %v2297, %v2295
    %2330 = vmatpush.bf16.msra.mxu0 %v2312
    %2331 = vmatpush.bf16.msra.mxu0 %v2310
    %2332 = vmatpush.bf16.msra.mxu0 %v2308
    %2333 = vmatpush.bf16.msra.mxu0 %v2306
    %2334 = vmatpush.bf16.msra.mxu0 %v2304
    %2335 = vmatpush.bf16.msra.mxu0 %v2302
    %2336 = vmatpush.bf16.msra.mxu0 %v2300
    %2337 = vmatpush.bf16.msra.mxu0 %v2298
    %2338 = vmatmul.bf16.gmra.mxu0 %v2076
    %v2339 = vpop.f32.mrf.mxu0
    %v2340 = vadd.f32 %v2134, %v2339
    %v2341 = vpop.f32.mrf.mxu0
    %2342 = vdwg.mxu0
    %2343 = vmatpush.bf16.msra.mxu0 %v2313
    %2344 = vmatpush.bf16.msra.mxu0 %v2311
    %2345 = vmatpush.bf16.msra.mxu0 %v2309
    %2346 = vmatpush.bf16.msra.mxu0 %v2307
    %2347 = vmatpush.bf16.msra.mxu0 %v2305
    %2348 = vmatpush.bf16.msra.mxu0 %v2303
    %2349 = vmatpush.bf16.msra.mxu0 %v2301
    %2350 = vmatpush.bf16.msra.mxu0 %v2299
    %2351 = vmatmul.bf16.gmra.mxu0 %v2076
    %v2352 = vpop.f32.mrf.mxu0
    %v2353 = vadd.f32 %v2135, %v2352
    %v2354 = vpop.f32.mrf.mxu0
    %2355 = vdwg.mxu0
    %v2372 = vunpack.c.l.b16 %v2110
    %v2373 = vunpack.c.h.b16 %v2110
    %v2374 = vunpack.c.l.b16 %v2111
    %v2375 = vunpack.c.h.b16 %v2111
    %v2376 = vunpack.c.l.b16 %v2112
    %v2377 = vunpack.c.h.b16 %v2112
    %v2378 = vunpack.c.l.b16 %v2113
    %v2379 = vunpack.c.h.b16 %v2113
    %v2380 = vunpack.c.l.b16 %v2114
    %v2381 = vunpack.c.h.b16 %v2114
    %v2382 = vunpack.c.l.b16 %v2115
    %v2383 = vunpack.c.h.b16 %v2115
    %v2384 = vunpack.c.l.b16 %v2116
    %v2385 = vunpack.c.h.b16 %v2116
    %v2386 = vunpack.c.l.b16 %v2117
    %v2387 = vunpack.c.h.b16 %v2117
    %v2388 = vunpack.c.l.b16 %v2118
    %v2389 = vunpack.c.h.b16 %v2118
    %v2390 = vunpack.c.l.b16 %v2119
    %v2391 = vunpack.c.h.b16 %v2119
    %v2392 = vunpack.c.l.b16 %v2120
    %v2393 = vunpack.c.h.b16 %v2120
    %v2394 = vunpack.c.l.b16 %v2121
    %v2395 = vunpack.c.h.b16 %v2121
    %v2396 = vunpack.c.l.b16 %v2122
    %v2397 = vunpack.c.h.b16 %v2122
    %v2398 = vunpack.c.l.b16 %v2123
    %v2399 = vunpack.c.h.b16 %v2123
    %v2400 = vunpack.c.l.b16 %v2124
    %v2401 = vunpack.c.h.b16 %v2124
    %v2402 = vunpack.c.l.b16 %v2125
    %v2403 = vunpack.c.h.b16 %v2125
    %v2404 = vpack.c.b16 %v2374, %v2372
    %v2405 = vpack.c.b16 %v2375, %v2373
    %v2406 = vpack.c.b16 %v2378, %v2376
    %v2407 = vpack.c.b16 %v2379, %v2377
    %v2408 = vpack.c.b16 %v2382, %v2380
    %v2409 = vpack.c.b16 %v2383, %v2381
    %v2410 = vpack.c.b16 %v2386, %v2384
    %v2411 = vpack.c.b16 %v2387, %v2385
    %v2412 = vpack.c.b16 %v2390, %v2388
    %v2413 = vpack.c.b16 %v2391, %v2389
    %v2414 = vpack.c.b16 %v2394, %v2392
    %v2415 = vpack.c.b16 %v2395, %v2393
    %v2416 = vpack.c.b16 %v2398, %v2396
    %v2417 = vpack.c.b16 %v2399, %v2397
    %v2418 = vpack.c.b16 %v2402, %v2400
    %v2419 = vpack.c.b16 %v2403, %v2401
    %2436 = vmatpush.bf16.msra.mxu0 %v2418
    %2437 = vmatpush.bf16.msra.mxu0 %v2416
    %2438 = vmatpush.bf16.msra.mxu0 %v2414
    %2439 = vmatpush.bf16.msra.mxu0 %v2412
    %2440 = vmatpush.bf16.msra.mxu0 %v2410
    %2441 = vmatpush.bf16.msra.mxu0 %v2408
    %2442 = vmatpush.bf16.msra.mxu0 %v2406
    %2443 = vmatpush.bf16.msra.mxu0 %v2404
    %2444 = vmatmul.bf16.gmra.mxu0 %v2077
    %v2445 = vpop.f32.mrf.mxu0
    %v2446 = vadd.f32 %v2136, %v2445
    %v2447 = vpop.f32.mrf.mxu0
    %2448 = vdwg.mxu0
    %2449 = vmatpush.bf16.msra.mxu0 %v2419
    %2450 = vmatpush.bf16.msra.mxu0 %v2417
    %2451 = vmatpush.bf16.msra.mxu0 %v2415
    %2452 = vmatpush.bf16.msra.mxu0 %v2413
    %2453 = vmatpush.bf16.msra.mxu0 %v2411
    %2454 = vmatpush.bf16.msra.mxu0 %v2409
    %2455 = vmatpush.bf16.msra.mxu0 %v2407
    %2456 = vmatpush.bf16.msra.mxu0 %v2405
    %2457 = vmatmul.bf16.gmra.mxu0 %v2077
    %v2458 = vpop.f32.mrf.mxu0
    %v2459 = vadd.f32 %v2137, %v2458
    %v2460 = vpop.f32.mrf.mxu0
    %2461 = vdwg.mxu0
    %v2463 = vrot.slane %v2234, 1
    %2465 = vst [vmem:[%s65 + $0x3] sm:$0x1] %v2234
    %2466 = vst [vmem:[%s65 + $0xb] sm:$0x1] %v2463
    %v2468 = vrot.slane %v2247, 1
    %2470 = vst [vmem:[%s67 + $0x3] sm:$0x1] %v2247
    %2471 = vst [vmem:[%s67 + $0xb] sm:$0x1] %v2468
    %v2473 = vrot.slane %v2340, 1
    %2475 = vst [vmem:[%s65 + $0x4] sm:$0x1] %v2340
    %2476 = vst [vmem:[%s65 + $0xc] sm:$0x1] %v2473
    %v2478 = vrot.slane %v2353, 1
    %2480 = vst [vmem:[%s67 + $0x4] sm:$0x1] %v2353
    %2481 = vst [vmem:[%s67 + $0xc] sm:$0x1] %v2478
    %v2483 = vrot.slane %v2446, 1
    %2485 = vst [vmem:[%s65 + $0x5] sm:$0x1] %v2446
    %2486 = vst [vmem:[%s65 + $0xd] sm:$0x1] %v2483
    %v2488 = vrot.slane %v2459, 1
    %2490 = vst [vmem:[%s67 + $0x5] sm:$0x1] %v2459
    %2491 = vst [vmem:[%s67 + $0xd] sm:$0x1] %v2488
    %2492 = vst [vmem:[#allocation2] sm:$0x1] %v789
    %v2493 = vld [vmem:[%s5] sm:$0x3]
    %2494 = vst [vmem:[#allocation2 + $0x1] sm:$0x3] %v2493
    %v2495 = vld [vmem:[%s7] sm:$0xff]
    %v2496 = vld [vmem:[%s7 + $0x8] sm:$0xff]
    %v2497 = vld [vmem:[%s7 + $0x10] sm:$0xff]
    %v2498 = vld [vmem:[%s7 + $0x18] sm:$0xff]
    %v2499 = vld [vmem:[%s7 + $0x20] sm:$0xff]
    %v2500 = vld [vmem:[%s7 + $0x28] sm:$0xff]
    %v2501 = vld [vmem:[%s7 + $0x30] sm:$0xff]
    %v2502 = vld [vmem:[%s7 + $0x38] sm:$0xff]
    %v2503 = vld [vmem:[%s7 + $0x40] sm:$0xff]
    %v2504 = vld [vmem:[%s7 + $0x48] sm:$0xff]
    %v2505 = vld [vmem:[%s7 + $0x50] sm:$0xff]
    %v2506 = vld [vmem:[%s7 + $0x58] sm:$0xff]
    %v2507 = vld [vmem:[%s7 + $0x60] sm:$0x3]
    %2508 = vst [vmem:[#allocation2 + $0x3] sm:$0xff] %v2495
    %2509 = vst [vmem:[#allocation2 + $0xb] sm:$0xff] %v2496
    %2510 = vst [vmem:[#allocation2 + $0x13] sm:$0xff] %v2497
    %2511 = vst [vmem:[#allocation2 + $0x1b] sm:$0xff] %v2498
    %2512 = vst [vmem:[#allocation2 + $0x23] sm:$0xff] %v2499
    %2513 = vst [vmem:[#allocation2 + $0x2b] sm:$0xff] %v2500
    %2514 = vst [vmem:[#allocation2 + $0x33] sm:$0xff] %v2501
    %2515 = vst [vmem:[#allocation2 + $0x3b] sm:$0xff] %v2502
    %2516 = vst [vmem:[#allocation2 + $0x43] sm:$0xff] %v2503
    %2517 = vst [vmem:[#allocation2 + $0x4b] sm:$0xff] %v2504
    %2518 = vst [vmem:[#allocation2 + $0x53] sm:$0xff] %v2505
    %2519 = vst [vmem:[#allocation2 + $0x5b] sm:$0xff] %v2506
    %2520 = vst [vmem:[#allocation2 + $0x63] sm:$0x3] %v2507
    %2521 = vst [vmem:[#allocation2 + $0x64] sm:$0x2] %v789
    %s2522 = scalar_lea.vmem %s5, 2
    %v2523 = vld [vmem:[%s2522] sm:$0x3]
    %2524 = vst [vmem:[#allocation2 + $0x66] sm:$0x3] %v2523
    %s2525 = scalar_lea.vmem %s7, 104
    %v2526 = vld [vmem:[%s2525] sm:$0xff]
    %v2527 = vld [vmem:[%s2525 + $0x8] sm:$0xff]
    %v2528 = vld [vmem:[%s2525 + $0x10] sm:$0xff]
    %v2529 = vld [vmem:[%s2525 + $0x18] sm:$0xff]
    %v2530 = vld [vmem:[%s2525 + $0x20] sm:$0xff]
    %v2531 = vld [vmem:[%s2525 + $0x28] sm:$0xff]
    %v2532 = vld [vmem:[%s2525 + $0x30] sm:$0xff]
    %v2533 = vld [vmem:[%s2525 + $0x38] sm:$0xff]
    %v2534 = vld [vmem:[%s2525 + $0x40] sm:$0xff]
    %v2535 = vld [vmem:[%s2525 + $0x48] sm:$0xff]
    %v2536 = vld [vmem:[%s2525 + $0x50] sm:$0xff]
    %v2537 = vld [vmem:[%s2525 + $0x58] sm:$0xff]
    %v2538 = vld [vmem:[%s2525 + $0x60] sm:$0x3]
    %2539 = vst [vmem:[#allocation2 + $0x68] sm:$0xff] %v2526
    %2540 = vst [vmem:[#allocation2 + $0x70] sm:$0xff] %v2527
    %2541 = vst [vmem:[#allocation2 + $0x78] sm:$0xff] %v2528
    %2542 = vst [vmem:[#allocation2 + $0x80] sm:$0xff] %v2529
    %2543 = vst [vmem:[#allocation2 + $0x88] sm:$0xff] %v2530
    %2544 = vst [vmem:[#allocation2 + $0x90] sm:$0xff] %v2531
    %2545 = vst [vmem:[#allocation2 + $0x98] sm:$0xff] %v2532
    %2546 = vst [vmem:[#allocation2 + $0xa0] sm:$0xff] %v2533
    %2547 = vst [vmem:[#allocation2 + $0xa8] sm:$0xff] %v2534
    %2548 = vst [vmem:[#allocation2 + $0xb0] sm:$0xff] %v2535
    %2549 = vst [vmem:[#allocation2 + $0xb8] sm:$0xff] %v2536
    %2550 = vst [vmem:[#allocation2 + $0xc0] sm:$0xff] %v2537
    %2551 = vst [vmem:[#allocation2 + $0xc8] sm:$0x3] %v2538
    %v2552 = vld [vmem:[#allocation2] sm:$0xff]
    %v2553 = vld [vmem:[#allocation2 + $0x8] sm:$0xff]
    %v2554 = vld [vmem:[#allocation2 + $0x10] sm:$0xff]
    %v2555 = vld [vmem:[#allocation2 + $0x18] sm:$0xff]
    %v2556 = vld [vmem:[#allocation2 + $0x20] sm:$0xff]
    %v2557 = vld [vmem:[#allocation2 + $0x28] sm:$0xff]
    %v2558 = vld [vmem:[#allocation2 + $0x30] sm:$0xff]
    %v2559 = vld [vmem:[#allocation2 + $0x38] sm:$0xff]
    %v2560 = vld [vmem:[#allocation2 + $0x40] sm:$0xff]
    %v2561 = vld [vmem:[#allocation2 + $0x48] sm:$0xff]
    %v2562 = vld [vmem:[#allocation2 + $0x50] sm:$0xff]
    %v2563 = vld [vmem:[#allocation2 + $0x58] sm:$0xff]
    %v2564 = vld [vmem:[#allocation2 + $0x60] sm:$0xff]
    %v2565 = vld [vmem:[#allocation2 + $0x68] sm:$0xff]
    %v2566 = vld [vmem:[#allocation2 + $0x70] sm:$0xff]
    %v2567 = vld [vmem:[#allocation2 + $0x78] sm:$0xff]
    %v2568 = vld [vmem:[#allocation2 + $0x80] sm:$0xff]
    %v2569 = vld [vmem:[#allocation2 + $0x88] sm:$0xff]
    %v2570 = vld [vmem:[#allocation2 + $0x90] sm:$0xff]
    %v2571 = vld [vmem:[#allocation2 + $0x98] sm:$0xff]
    %v2572 = vld [vmem:[#allocation2 + $0xa0] sm:$0xff]
    %v2573 = vld [vmem:[#allocation2 + $0xa8] sm:$0xff]
    %v2574 = vld [vmem:[#allocation2 + $0xb0] sm:$0xff]
    %v2575 = vld [vmem:[#allocation2 + $0xb8] sm:$0xff]
    %v2576 = vld [vmem:[#allocation2 + $0xc0] sm:$0xff]
    %v2577 = vld [vmem:[#allocation2 + $0xc8] sm:$0x3]
    %v2578 = vpack.c.bf16 %v2553, %v2552
    %v2579 = vpack.c.bf16 %v2555, %v2554
    %v2580 = vpack.c.bf16 %v2557, %v2556
    %v2581 = vpack.c.bf16 %v2559, %v2558
    %v2582 = vpack.c.bf16 %v2561, %v2560
    %v2583 = vpack.c.bf16 %v2563, %v2562
    %v2584 = vpack.c.bf16 %v2565, %v2564
    %v2585 = vpack.c.bf16 %v2567, %v2566
    %v2586 = vpack.c.bf16 %v2569, %v2568
    %v2587 = vpack.c.bf16 %v2571, %v2570
    %v2588 = vpack.c.bf16 %v2573, %v2572
    %v2589 = vpack.c.bf16 %v2575, %v2574
    %v2590 = vpack.c.bf16 %v2577, %v2576
    %v2591 = vld [vmem:[#allocation27] sm:$0xff]
    %v2592 = vld [vmem:[#allocation27 + $0x8] sm:$0xff]
    %v2593 = vld [vmem:[#allocation27 + $0x10] sm:$0xff]
    %v2594 = vld [vmem:[#allocation27 + $0x18] sm:$0xff]
    %v2595 = vld [vmem:[#allocation27 + $0x20] sm:$0xff]
    %v2596 = vld [vmem:[#allocation27 + $0x28] sm:$0xff]
    %v2597 = vld [vmem:[#allocation27 + $0x30] sm:$0xff]
    %v2598 = vld [vmem:[#allocation27 + $0x38] sm:$0xff]
    %v2599 = vld [vmem:[#allocation27 + $0x40] sm:$0xff]
    %v2600 = vld [vmem:[#allocation27 + $0x48] sm:$0xff]
    %v2601 = vld [vmem:[#allocation27 + $0x50] sm:$0xff]
    %v2602 = vld [vmem:[#allocation27 + $0x58] sm:$0xff]
    %v2603 = vld [vmem:[#allocation27 + $0x60] sm:$0xff]
    %v2604 = vld [vmem:[#allocation27 + $0x68] sm:$0xff]
    %v2605 = vld [vmem:[#allocation27 + $0x70] sm:$0xff]
    %v2606 = vld [vmem:[#allocation27 + $0x78] sm:$0xff]
    %v2607 = vld [vmem:[#allocation29] sm:$0x3]
    %v2609 = vperm.slane %v2607, 0
    %v2610 = vperm.slane %v2607, 1
    %v2629 = vunpack.c.l.b16 %v2591
    %v2630 = vunpack.c.h.b16 %v2591
    %v2631 = vunpack.c.l.b16 %v2592
    %v2632 = vunpack.c.h.b16 %v2592
    %v2633 = vunpack.c.l.b16 %v2593
    %v2634 = vunpack.c.h.b16 %v2593
    %v2635 = vunpack.c.l.b16 %v2594
    %v2636 = vunpack.c.h.b16 %v2594
    %v2637 = vunpack.c.l.b16 %v2595
    %v2638 = vunpack.c.h.b16 %v2595
    %v2639 = vunpack.c.l.b16 %v2596
    %v2640 = vunpack.c.h.b16 %v2596
    %v2641 = vunpack.c.l.b16 %v2597
    %v2642 = vunpack.c.h.b16 %v2597
    %v2643 = vunpack.c.l.b16 %v2598
    %v2644 = vunpack.c.h.b16 %v2598
    %v2645 = vunpack.c.l.b16 %v2599
    %v2646 = vunpack.c.h.b16 %v2599
    %v2647 = vunpack.c.l.b16 %v2600
    %v2648 = vunpack.c.h.b16 %v2600
    %v2649 = vunpack.c.l.b16 %v2601
    %v2650 = vunpack.c.h.b16 %v2601
    %v2651 = vunpack.c.l.b16 %v2602
    %v2652 = vunpack.c.h.b16 %v2602
    %v2653 = vunpack.c.l.b16 %v2603
    %v2654 = vunpack.c.h.b16 %v2603
    %v2655 = vunpack.c.l.b16 %v2604
    %v2656 = vunpack.c.h.b16 %v2604
    %v2657 = vunpack.c.l.b16 %v2605
    %v2658 = vunpack.c.h.b16 %v2605
    %v2659 = vunpack.c.l.b16 %v2606
    %v2660 = vunpack.c.h.b16 %v2606
    %v2661 = vpack.c.b16 %v2631, %v2629
    %v2662 = vpack.c.b16 %v2632, %v2630
    %v2663 = vpack.c.b16 %v2635, %v2633
    %v2664 = vpack.c.b16 %v2636, %v2634
    %v2665 = vpack.c.b16 %v2639, %v2637
    %v2666 = vpack.c.b16 %v2640, %v2638
    %v2667 = vpack.c.b16 %v2643, %v2641
    %v2668 = vpack.c.b16 %v2644, %v2642
    %v2669 = vpack.c.b16 %v2647, %v2645
    %v2670 = vpack.c.b16 %v2648, %v2646
    %v2671 = vpack.c.b16 %v2651, %v2649
    %v2672 = vpack.c.b16 %v2652, %v2650
    %v2673 = vpack.c.b16 %v2655, %v2653
    %v2674 = vpack.c.b16 %v2656, %v2654
    %v2675 = vpack.c.b16 %v2659, %v2657
    %v2676 = vpack.c.b16 %v2660, %v2658
    %2693 = vmatpush.bf16.msra.mxu0 %v2675
    %2694 = vmatpush.bf16.msra.mxu0 %v2673
    %2695 = vmatpush.bf16.msra.mxu0 %v2671
    %2696 = vmatpush.bf16.msra.mxu0 %v2669
    %2697 = vmatpush.bf16.msra.mxu0 %v2667
    %2698 = vmatpush.bf16.msra.mxu0 %v2665
    %2699 = vmatpush.bf16.msra.mxu0 %v2663
    %2700 = vmatpush.bf16.msra.mxu0 %v2661
    %2701 = vmatmul.bf16.gmra.mxu0 %v2578
    %v2702 = vpop.f32.mrf.mxu0
    %v2703 = vadd.f32 %v2609, %v2702
    %v2704 = vpop.f32.mrf.mxu0
    %v2705 = vadd.f32 %v2609, %v2704
    %2706 = vmatmul.bf16.gmra.mxu0 %v2579
    %v2707 = vpop.f32.mrf.mxu0
    %v2708 = vadd.f32 %v2609, %v2707
    %v2709 = vpop.f32.mrf.mxu0
    %v2710 = vadd.f32 %v2609, %v2709
    %2711 = vmatmul.bf16.gmra.mxu0 %v2580
    %v2712 = vpop.f32.mrf.mxu0
    %v2713 = vadd.f32 %v2609, %v2712
    %v2714 = vpop.f32.mrf.mxu0
    %v2715 = vadd.f32 %v2609, %v2714
    %2716 = vmatmul.bf16.gmra.mxu0 %v2581
    %v2717 = vpop.f32.mrf.mxu0
    %v2718 = vadd.f32 %v2609, %v2717
    %v2719 = vpop.f32.mrf.mxu0
    %v2720 = vadd.f32 %v2609, %v2719
    %2721 = vmatmul.bf16.gmra.mxu0 %v2582
    %v2722 = vpop.f32.mrf.mxu0
    %v2723 = vadd.f32 %v2609, %v2722
    %v2724 = vpop.f32.mrf.mxu0
    %v2725 = vadd.f32 %v2609, %v2724
    %2726 = vmatmul.bf16.gmra.mxu0 %v2583
    %v2727 = vpop.f32.mrf.mxu0
    %v2728 = vadd.f32 %v2609, %v2727
    %v2729 = vpop.f32.mrf.mxu0
    %v2730 = vadd.f32 %v2609, %v2729
    %2731 = vmatmul.bf16.gmra.mxu0 %v2584
    %v2732 = vpop.f32.mrf.mxu0
    %v2733 = vadd.f32 %v2609, %v2732
    %v2734 = vpop.f32.mrf.mxu0
    %v2735 = vadd.f32 %v2609, %v2734
    %2736 = vmatmul.bf16.gmra.mxu0 %v2585
    %v2737 = vpop.f32.mrf.mxu0
    %v2738 = vadd.f32 %v2609, %v2737
    %v2739 = vpop.f32.mrf.mxu0
    %v2740 = vadd.f32 %v2609, %v2739
    %2741 = vmatmul.bf16.gmra.mxu0 %v2586
    %v2742 = vpop.f32.mrf.mxu0
    %v2743 = vadd.f32 %v2609, %v2742
    %v2744 = vpop.f32.mrf.mxu0
    %v2745 = vadd.f32 %v2609, %v2744
    %2746 = vmatmul.bf16.gmra.mxu0 %v2587
    %v2747 = vpop.f32.mrf.mxu0
    %v2748 = vadd.f32 %v2609, %v2747
    %v2749 = vpop.f32.mrf.mxu0
    %v2750 = vadd.f32 %v2609, %v2749
    %2751 = vmatmul.bf16.gmra.mxu0 %v2588
    %v2752 = vpop.f32.mrf.mxu0
    %v2753 = vadd.f32 %v2609, %v2752
    %v2754 = vpop.f32.mrf.mxu0
    %v2755 = vadd.f32 %v2609, %v2754
    %2756 = vmatmul.bf16.gmra.mxu0 %v2589
    %v2757 = vpop.f32.mrf.mxu0
    %v2758 = vadd.f32 %v2609, %v2757
    %v2759 = vpop.f32.mrf.mxu0
    %v2760 = vadd.f32 %v2609, %v2759
    %2761 = vmatmul.bf16.gmra.mxu0 %v2590
    %v2762 = vpop.f32.mrf.mxu0
    %v2763 = vadd.f32 %v2609, %v2762
    %v2764 = vpop.f32.mrf.mxu0
    %v2765 = vadd.f32 %v2609, %v2764
    %2766 = vdwg.mxu0
    %2767 = vmatpush.bf16.msra.mxu0 %v2676
    %2768 = vmatpush.bf16.msra.mxu0 %v2674
    %2769 = vmatpush.bf16.msra.mxu0 %v2672
    %2770 = vmatpush.bf16.msra.mxu0 %v2670
    %2771 = vmatpush.bf16.msra.mxu0 %v2668
    %2772 = vmatpush.bf16.msra.mxu0 %v2666
    %2773 = vmatpush.bf16.msra.mxu0 %v2664
    %2774 = vmatpush.bf16.msra.mxu0 %v2662
    %2775 = vmatmul.bf16.gmra.mxu0 %v2578
    %v2776 = vpop.f32.mrf.mxu0
    %v2777 = vadd.f32 %v2610, %v2776
    %v2778 = vpop.f32.mrf.mxu0
    %v2779 = vadd.f32 %v2610, %v2778
    %2780 = vmatmul.bf16.gmra.mxu0 %v2579
    %v2781 = vpop.f32.mrf.mxu0
    %v2782 = vadd.f32 %v2610, %v2781
    %v2783 = vpop.f32.mrf.mxu0
    %v2784 = vadd.f32 %v2610, %v2783
    %2785 = vmatmul.bf16.gmra.mxu0 %v2580
    %v2786 = vpop.f32.mrf.mxu0
    %v2787 = vadd.f32 %v2610, %v2786
    %v2788 = vpop.f32.mrf.mxu0
    %v2789 = vadd.f32 %v2610, %v2788
    %2790 = vmatmul.bf16.gmra.mxu0 %v2581
    %v2791 = vpop.f32.mrf.mxu0
    %v2792 = vadd.f32 %v2610, %v2791
    %v2793 = vpop.f32.mrf.mxu0
    %v2794 = vadd.f32 %v2610, %v2793
    %2795 = vmatmul.bf16.gmra.mxu0 %v2582
    %v2796 = vpop.f32.mrf.mxu0
    %v2797 = vadd.f32 %v2610, %v2796
    %v2798 = vpop.f32.mrf.mxu0
    %v2799 = vadd.f32 %v2610, %v2798
    %2800 = vmatmul.bf16.gmra.mxu0 %v2583
    %v2801 = vpop.f32.mrf.mxu0
    %v2802 = vadd.f32 %v2610, %v2801
    %v2803 = vpop.f32.mrf.mxu0
    %v2804 = vadd.f32 %v2610, %v2803
    %2805 = vmatmul.bf16.gmra.mxu0 %v2584
    %v2806 = vpop.f32.mrf.mxu0
    %v2807 = vadd.f32 %v2610, %v2806
    %v2808 = vpop.f32.mrf.mxu0
    %v2809 = vadd.f32 %v2610, %v2808
    %2810 = vmatmul.bf16.gmra.mxu0 %v2585
    %v2811 = vpop.f32.mrf.mxu0
    %v2812 = vadd.f32 %v2610, %v2811
    %v2813 = vpop.f32.mrf.mxu0
    %v2814 = vadd.f32 %v2610, %v2813
    %2815 = vmatmul.bf16.gmra.mxu0 %v2586
    %v2816 = vpop.f32.mrf.mxu0
    %v2817 = vadd.f32 %v2610, %v2816
    %v2818 = vpop.f32.mrf.mxu0
    %v2819 = vadd.f32 %v2610, %v2818
    %2820 = vmatmul.bf16.gmra.mxu0 %v2587
    %v2821 = vpop.f32.mrf.mxu0
    %v2822 = vadd.f32 %v2610, %v2821
    %v2823 = vpop.f32.mrf.mxu0
    %v2824 = vadd.f32 %v2610, %v2823
    %2825 = vmatmul.bf16.gmra.mxu0 %v2588
    %v2826 = vpop.f32.mrf.mxu0
    %v2827 = vadd.f32 %v2610, %v2826
    %v2828 = vpop.f32.mrf.mxu0
    %v2829 = vadd.f32 %v2610, %v2828
    %2830 = vmatmul.bf16.gmra.mxu0 %v2589
    %v2831 = vpop.f32.mrf.mxu0
    %v2832 = vadd.f32 %v2610, %v2831
    %v2833 = vpop.f32.mrf.mxu0
    %v2834 = vadd.f32 %v2610, %v2833
    %2835 = vmatmul.bf16.gmra.mxu0 %v2590
    %v2836 = vpop.f32.mrf.mxu0
    %v2837 = vadd.f32 %v2610, %v2836
    %v2838 = vpop.f32.mrf.mxu0
    %v2839 = vadd.f32 %v2610, %v2838
    %2840 = vdwg.mxu0
    %v2841 = vld [vmem:[#allocation30] sm:$0xff]
    %v2842 = vld [vmem:[#allocation30 + $0x8] sm:$0xff]
    %v2843 = vld [vmem:[#allocation30 + $0x10] sm:$0xff]
    %v2844 = vld [vmem:[#allocation30 + $0x18] sm:$0xff]
    %v2845 = vld [vmem:[#allocation30 + $0x20] sm:$0xff]
    %v2846 = vld [vmem:[#allocation30 + $0x28] sm:$0xff]
    %v2847 = vld [vmem:[#allocation30 + $0x30] sm:$0xff]
    %v2848 = vld [vmem:[#allocation30 + $0x38] sm:$0xff]
    %v2849 = vld [vmem:[#allocation30 + $0x40] sm:$0xff]
    %v2850 = vld [vmem:[#allocation30 + $0x48] sm:$0xff]
    %v2851 = vld [vmem:[#allocation30 + $0x50] sm:$0xff]
    %v2852 = vld [vmem:[#allocation30 + $0x58] sm:$0xff]
    %v2853 = vld [vmem:[#allocation30 + $0x60] sm:$0x1f]
    %v2854 = vld [vmem:[#allocation32] sm:$0xff]
    %v2855 = vld [vmem:[#allocation32 + $0x8] sm:$0xff]
    %v2856 = vld [vmem:[#allocation32 + $0x10] sm:$0xff]
    %v2857 = vld [vmem:[#allocation32 + $0x18] sm:$0xff]
    %v2858 = vld [vmem:[#allocation32 + $0x20] sm:$0xff]
    %v2859 = vld [vmem:[#allocation32 + $0x28] sm:$0xff]
    %v2860 = vld [vmem:[#allocation32 + $0x30] sm:$0xff]
    %v2861 = vld [vmem:[#allocation32 + $0x38] sm:$0xff]
    %v2862 = vld [vmem:[#allocation32 + $0x40] sm:$0xff]
    %v2863 = vld [vmem:[#allocation32 + $0x48] sm:$0xff]
    %v2864 = vld [vmem:[#allocation32 + $0x50] sm:$0xff]
    %v2865 = vld [vmem:[#allocation32 + $0x58] sm:$0xff]
    %v2866 = vld [vmem:[#allocation32 + $0x60] sm:$0x1f]
    %v2867 = vld [vmem:[#allocation33] sm:$0xff]
    %v2868 = vld [vmem:[#allocation33 + $0x8] sm:$0xff]
    %v2869 = vld [vmem:[#allocation33 + $0x10] sm:$0xff]
    %v2870 = vld [vmem:[#allocation33 + $0x18] sm:$0xff]
    %v2871 = vld [vmem:[#allocation33 + $0x20] sm:$0xff]
    %v2872 = vld [vmem:[#allocation33 + $0x28] sm:$0xff]
    %v2873 = vld [vmem:[#allocation33 + $0x30] sm:$0xff]
    %v2874 = vld [vmem:[#allocation33 + $0x38] sm:$0xff]
    %v2875 = vld [vmem:[#allocation33 + $0x40] sm:$0xff]
    %v2876 = vld [vmem:[#allocation33 + $0x48] sm:$0xff]
    %v2877 = vld [vmem:[#allocation33 + $0x50] sm:$0xff]
    %v2878 = vld [vmem:[#allocation33 + $0x58] sm:$0xff]
    %v2879 = vld [vmem:[#allocation33 + $0x60] sm:$0x1f]
    %v2880 = vld [vmem:[#allocation35] sm:$0xff]
    %v2881 = vld [vmem:[#allocation35 + $0x8] sm:$0xff]
    %v2882 = vld [vmem:[#allocation35 + $0x10] sm:$0xff]
    %v2883 = vld [vmem:[#allocation35 + $0x18] sm:$0xff]
    %v2884 = vld [vmem:[#allocation35 + $0x20] sm:$0xff]
    %v2885 = vld [vmem:[#allocation35 + $0x28] sm:$0xff]
    %v2886 = vld [vmem:[#allocation35 + $0x30] sm:$0xff]
    %v2887 = vld [vmem:[#allocation35 + $0x38] sm:$0xff]
    %v2888 = vld [vmem:[#allocation35 + $0x40] sm:$0xff]
    %v2889 = vld [vmem:[#allocation35 + $0x48] sm:$0xff]
    %v2890 = vld [vmem:[#allocation35 + $0x50] sm:$0xff]
    %v2891 = vld [vmem:[#allocation35 + $0x58] sm:$0xff]
    %v2892 = vld [vmem:[#allocation35 + $0x60] sm:$0x1f]
    %v2893 = vadd.f32 %v2703, %v2705
    %v2894 = vadd.f32 %v2893, %v2708
    %v2895 = vadd.f32 %v2894, %v2710
    %v2896 = vadd.f32 %v2895, %v2713
    %v2897 = vadd.f32 %v2896, %v2715
    %v2898 = vadd.f32 %v2897, %v2718
    %v2899 = vadd.f32 %v2898, %v2720
    %v2900 = vadd.f32 %v2899, %v2723
    %v2901 = vadd.f32 %v2900, %v2725
    %v2902 = vadd.f32 %v2901, %v2728
    %v2903 = vadd.f32 %v2902, %v2730
    %vm2904 = vcmask 1044480
    %v2905 = vsel %vm2904, %v2733, 0.0
    %v2906 = vadd.f32 %v2903, %v2905
    %2907 = vadd.xlane.f32.xlu0 %v2906
    %v2908 = vpop.xlane.xlu0 %2907
    %v2909 = vrot.slane %v2908, 4
    %v2910 = vadd.f32 %v2908, %v2909
    %v2911 = vrot.slane %v2910, 2
    %v2912 = vadd.f32 %v2910, %v2911
    %v2913 = vrot.slane %v2912, 1
    %v2914 = vadd.f32 %v2912, %v2913
    %s2915 = vtos %v2914
    %v2916 = vmul.f32 %v2703, %v2703
    %v2917 = vmul.f32 %v2705, %v2705
    %v2918 = vmul.f32 %v2708, %v2708
    %v2919 = vmul.f32 %v2710, %v2710
    %v2920 = vmul.f32 %v2713, %v2713
    %v2921 = vmul.f32 %v2715, %v2715
    %v2922 = vmul.f32 %v2718, %v2718
    %v2923 = vmul.f32 %v2720, %v2720
    %v2924 = vmul.f32 %v2723, %v2723
    %v2925 = vmul.f32 %v2725, %v2725
    %v2926 = vmul.f32 %v2728, %v2728
    %v2927 = vmul.f32 %v2730, %v2730
    %v2928 = vmul.f32 %v2733, %v2733
    %v2929 = vadd.f32 %v2916, %v2917
    %v2930 = vadd.f32 %v2929, %v2918
    %v2931 = vadd.f32 %v2930, %v2919
    %v2932 = vadd.f32 %v2931, %v2920
    %v2933 = vadd.f32 %v2932, %v2921
    %v2934 = vadd.f32 %v2933, %v2922
    %v2935 = vadd.f32 %v2934, %v2923
    %v2936 = vadd.f32 %v2935, %v2924
    %v2937 = vadd.f32 %v2936, %v2925
    %v2938 = vadd.f32 %v2937, %v2926
    %v2939 = vadd.f32 %v2938, %v2927
    %v2940 = vsel %vm2904, %v2928, 0.0
    %v2941 = vadd.f32 %v2939, %v2940
    %2942 = vadd.xlane.f32.xlu0 %v2941
    %v2943 = vpop.xlane.xlu0 %2942
    %v2944 = vrot.slane %v2943, 4
    %v2945 = vadd.f32 %v2943, %v2944
    %v2946 = vrot.slane %v2945, 2
    %v2947 = vadd.f32 %v2945, %v2946
    %v2948 = vrot.slane %v2947, 1
    %v2949 = vadd.f32 %v2947, %v2948
    %s2950 = vtos %v2949
    %v2951 = vadd.f32 %v2777, %v2779
    %v2952 = vadd.f32 %v2951, %v2782
    %v2953 = vadd.f32 %v2952, %v2784
    %v2954 = vadd.f32 %v2953, %v2787
    %v2955 = vadd.f32 %v2954, %v2789
    %v2956 = vadd.f32 %v2955, %v2792
    %v2957 = vadd.f32 %v2956, %v2794
    %v2958 = vadd.f32 %v2957, %v2797
    %v2959 = vadd.f32 %v2958, %v2799
    %v2960 = vadd.f32 %v2959, %v2802
    %v2961 = vadd.f32 %v2960, %v2804
    %v2962 = vsel %vm2904, %v2807, 0.0
    %v2963 = vadd.f32 %v2961, %v2962
    %2964 = vadd.xlane.f32.xlu0 %v2963
    %v2965 = vpop.xlane.xlu0 %2964
    %v2966 = vrot.slane %v2965, 4
    %v2967 = vadd.f32 %v2965, %v2966
    %v2968 = vrot.slane %v2967, 2
    %v2969 = vadd.f32 %v2967, %v2968
    %v2970 = vrot.slane %v2969, 1
    %v2971 = vadd.f32 %v2969, %v2970
    %s2972 = vtos %v2971
    %v2973 = vmul.f32 %v2777, %v2777
    %v2974 = vmul.f32 %v2779, %v2779
    %v2975 = vmul.f32 %v2782, %v2782
    %v2976 = vmul.f32 %v2784, %v2784
    %v2977 = vmul.f32 %v2787, %v2787
    %v2978 = vmul.f32 %v2789, %v2789
    %v2979 = vmul.f32 %v2792, %v2792
    %v2980 = vmul.f32 %v2794, %v2794
    %v2981 = vmul.f32 %v2797, %v2797
    %v2982 = vmul.f32 %v2799, %v2799
    %v2983 = vmul.f32 %v2802, %v2802
    %v2984 = vmul.f32 %v2804, %v2804
    %v2985 = vmul.f32 %v2807, %v2807
    %v2986 = vadd.f32 %v2973, %v2974
    %v2987 = vadd.f32 %v2986, %v2975
    %v2988 = vadd.f32 %v2987, %v2976
    %v2989 = vadd.f32 %v2988, %v2977
    %v2990 = vadd.f32 %v2989, %v2978
    %v2991 = vadd.f32 %v2990, %v2979
    %v2992 = vadd.f32 %v2991, %v2980
    %v2993 = vadd.f32 %v2992, %v2981
    %v2994 = vadd.f32 %v2993, %v2982
    %v2995 = vadd.f32 %v2994, %v2983
    %v2996 = vadd.f32 %v2995, %v2984
    %v2997 = vsel %vm2904, %v2985, 0.0
    %v2998 = vadd.f32 %v2996, %v2997
    %2999 = vadd.xlane.f32.xlu0 %v2998
    %v3000 = vpop.xlane.xlu0 %2999
    %v3001 = vrot.slane %v3000, 4
    %v3002 = vadd.f32 %v3000, %v3001
    %v3003 = vrot.slane %v3002, 2
    %v3004 = vadd.f32 %v3002, %v3003
    %v3005 = vrot.slane %v3004, 1
    %v3006 = vadd.f32 %v3004, %v3005
    %s3007 = vtos %v3006
    %s3008 = smul.f32 %s2915, 7.7351484e-05
    %s3009 = smul.f32 %s2950, 7.7351484e-05
    %s3010 = smul.f32 %s3008, %s3008
    %s3011 = ssub.f32 %s3009, %s3010
    %s3012 = smax.f32 %s3011, 0.0
    %s3013 = smul.f32 %s2972, 7.7351484e-05
    %s3014 = smul.f32 %s3007, 7.7351484e-05
    %s3015 = smul.f32 %s3013, %s3013
    %s3016 = ssub.f32 %s3014, %s3015
    %s3017 = smax.f32 %s3016, 0.0
    %v3018 = vstv %s3008
    %v3019 = vsub.f32 %v2703, %v3018
    %v3020 = vsub.f32 %v2705, %v3018
    %v3021 = vsub.f32 %v2708, %v3018
    %v3022 = vsub.f32 %v2710, %v3018
    %v3023 = vsub.f32 %v2713, %v3018
    %v3024 = vsub.f32 %v2715, %v3018
    %v3025 = vsub.f32 %v2718, %v3018
    %v3026 = vsub.f32 %v2720, %v3018
    %v3027 = vsub.f32 %v2723, %v3018
    %v3028 = vsub.f32 %v2725, %v3018
    %v3029 = vsub.f32 %v2728, %v3018
    %v3030 = vsub.f32 %v2730, %v3018
    %v3031 = vsub.f32 %v2733, %v3018
    %s3032 = sadd.f32 %s3012, 1e-05
    %v3033 = vstv %s3032
    %v3034 = vrsqrt.pop %v3033
    %v3035 = vmul.f32 %v3034, %v3033
    %v3036 = vmul.f32 %v3035, %v3034
    %v3037 = vmul.f32 0.5, %v3036
    %v3038 = vsub.f32 1.5, %v3037
    %v3039 = vmul.f32 %v3034, %v3038
    %vm3040 = vweird.f32 %v3033
    %vm3041 = vweird.f32 %v3034
    %vm3042 = vmor %vm3040, %vm3041
    %v3043 = vsel %vm3042, %v3034, %v3039
    %s3044 = vtos %v3043
    %v3045 = vstv %s3044
    %v3046 = vmul.f32 %v3019, %v3045
    %v3047 = vmul.f32 %v3020, %v3045
    %v3048 = vmul.f32 %v3021, %v3045
    %v3049 = vmul.f32 %v3022, %v3045
    %v3050 = vmul.f32 %v3023, %v3045
    %v3051 = vmul.f32 %v3024, %v3045
    %v3052 = vmul.f32 %v3025, %v3045
    %v3053 = vmul.f32 %v3026, %v3045
    %v3054 = vmul.f32 %v3027, %v3045
    %v3055 = vmul.f32 %v3028, %v3045
    %v3056 = vmul.f32 %v3029, %v3045
    %v3057 = vmul.f32 %v3030, %v3045
    %v3058 = vmul.f32 %v3031, %v3045
    %v3059 = vmul.f32 %v3046, %v2841
    %v3060 = vmul.f32 %v3047, %v2842
    %v3061 = vmul.f32 %v3048, %v2843
    %v3062 = vmul.f32 %v3049, %v2844
    %v3063 = vmul.f32 %v3050, %v2845
    %v3064 = vmul.f32 %v3051, %v2846
    %v3065 = vmul.f32 %v3052, %v2847
    %v3066 = vmul.f32 %v3053, %v2848
    %v3067 = vmul.f32 %v3054, %v2849
    %v3068 = vmul.f32 %v3055, %v2850
    %v3069 = vmul.f32 %v3056, %v2851
    %v3070 = vmul.f32 %v3057, %v2852
    %v3071 = vmul.f32 %v3058, %v2853
    %v3072 = vadd.f32 %v3059, %v2854
    %v3073 = vadd.f32 %v3060, %v2855
    %v3074 = vadd.f32 %v3061, %v2856
    %v3075 = vadd.f32 %v3062, %v2857
    %v3076 = vadd.f32 %v3063, %v2858
    %v3077 = vadd.f32 %v3064, %v2859
    %v3078 = vadd.f32 %v3065, %v2860
    %v3079 = vadd.f32 %v3066, %v2861
    %v3080 = vadd.f32 %v3067, %v2862
    %v3081 = vadd.f32 %v3068, %v2863
    %v3082 = vadd.f32 %v3069, %v2864
    %v3083 = vadd.f32 %v3070, %v2865
    %v3084 = vadd.f32 %v3071, %v2866
    %3085 = vst [vmem:[%s69] sm:$0xff] %v3072
    %3086 = vst [vmem:[%s69 + $0x8] sm:$0xff] %v3073
    %3087 = vst [vmem:[%s69 + $0x10] sm:$0xff] %v3074
    %3088 = vst [vmem:[%s69 + $0x18] sm:$0xff] %v3075
    %3089 = vst [vmem:[%s69 + $0x20] sm:$0xff] %v3076
    %3090 = vst [vmem:[%s69 + $0x28] sm:$0xff] %v3077
    %3091 = vst [vmem:[%s69 + $0x30] sm:$0xff] %v3078
    %3092 = vst [vmem:[%s69 + $0x38] sm:$0xff] %v3079
    %3093 = vst [vmem:[%s69 + $0x40] sm:$0xff] %v3080
    %3094 = vst [vmem:[%s69 + $0x48] sm:$0xff] %v3081
    %3095 = vst [vmem:[%s69 + $0x50] sm:$0xff] %v3082
    %3096 = vst [vmem:[%s69 + $0x58] sm:$0xff] %v3083
    %3097 = vst [vmem:[%s69 + $0x60] sm:$0x1f] %v3084
    %v3098 = vstv %s3013
    %v3099 = vsub.f32 %v2777, %v3098
    %v3100 = vsub.f32 %v2779, %v3098
    %v3101 = vsub.f32 %v2782, %v3098
    %v3102 = vsub.f32 %v2784, %v3098
    %v3103 = vsub.f32 %v2787, %v3098
    %v3104 = vsub.f32 %v2789, %v3098
    %v3105 = vsub.f32 %v2792, %v3098
    %v3106 = vsub.f32 %v2794, %v3098
    %v3107 = vsub.f32 %v2797, %v3098
    %v3108 = vsub.f32 %v2799, %v3098
    %v3109 = vsub.f32 %v2802, %v3098
    %v3110 = vsub.f32 %v2804, %v3098
    %v3111 = vsub.f32 %v2807, %v3098
    %s3112 = sadd.f32 %s3017, 1e-05
    %v3113 = vstv %s3112
    %v3114 = vrsqrt.pop %v3113
    %v3115 = vmul.f32 %v3114, %v3113
    %v3116 = vmul.f32 %v3115, %v3114
    %v3117 = vmul.f32 0.5, %v3116
    %v3118 = vsub.f32 1.5, %v3117
    %v3119 = vmul.f32 %v3114, %v3118
    %vm3120 = vweird.f32 %v3113
    %vm3121 = vweird.f32 %v3114
    %vm3122 = vmor %vm3120, %vm3121
    %v3123 = vsel %vm3122, %v3114, %v3119
    %s3124 = vtos %v3123
    %v3125 = vstv %s3124
    %v3126 = vmul.f32 %v3099, %v3125
    %v3127 = vmul.f32 %v3100, %v3125
    %v3128 = vmul.f32 %v3101, %v3125
    %v3129 = vmul.f32 %v3102, %v3125
    %v3130 = vmul.f32 %v3103, %v3125
    %v3131 = vmul.f32 %v3104, %v3125
    %v3132 = vmul.f32 %v3105, %v3125
    %v3133 = vmul.f32 %v3106, %v3125
    %v3134 = vmul.f32 %v3107, %v3125
    %v3135 = vmul.f32 %v3108, %v3125
    %v3136 = vmul.f32 %v3109, %v3125
    %v3137 = vmul.f32 %v3110, %v3125
    %v3138 = vmul.f32 %v3111, %v3125
    %v3139 = vmul.f32 %v3126, %v2867
    %v3140 = vmul.f32 %v3127, %v2868
    %v3141 = vmul.f32 %v3128, %v2869
    %v3142 = vmul.f32 %v3129, %v2870
    %v3143 = vmul.f32 %v3130, %v2871
    %v3144 = vmul.f32 %v3131, %v2872
    %v3145 = vmul.f32 %v3132, %v2873
    %v3146 = vmul.f32 %v3133, %v2874
    %v3147 = vmul.f32 %v3134, %v2875
    %v3148 = vmul.f32 %v3135, %v2876
    %v3149 = vmul.f32 %v3136, %v2877
    %v3150 = vmul.f32 %v3137, %v2878
    %v3151 = vmul.f32 %v3138, %v2879
    %v3152 = vadd.f32 %v3139, %v2880
    %v3153 = vadd.f32 %v3140, %v2881
    %v3154 = vadd.f32 %v3141, %v2882
    %v3155 = vadd.f32 %v3142, %v2883
    %v3156 = vadd.f32 %v3143, %v2884
    %v3157 = vadd.f32 %v3144, %v2885
    %v3158 = vadd.f32 %v3145, %v2886
    %v3159 = vadd.f32 %v3146, %v2887
    %v3160 = vadd.f32 %v3147, %v2888
    %v3161 = vadd.f32 %v3148, %v2889
    %v3162 = vadd.f32 %v3149, %v2890
    %v3163 = vadd.f32 %v3150, %v2891
    %v3164 = vadd.f32 %v3151, %v2892
    %3165 = vst [vmem:[%s71] sm:$0xff] %v3152
    %3166 = vst [vmem:[%s71 + $0x8] sm:$0xff] %v3153
    %3167 = vst [vmem:[%s71 + $0x10] sm:$0xff] %v3154
    %3168 = vst [vmem:[%s71 + $0x18] sm:$0xff] %v3155
    %3169 = vst [vmem:[%s71 + $0x20] sm:$0xff] %v3156
    %3170 = vst [vmem:[%s71 + $0x28] sm:$0xff] %v3157
    %3171 = vst [vmem:[%s71 + $0x30] sm:$0xff] %v3158
    %3172 = vst [vmem:[%s71 + $0x38] sm:$0xff] %v3159
    %3173 = vst [vmem:[%s71 + $0x40] sm:$0xff] %v3160
    %3174 = vst [vmem:[%s71 + $0x48] sm:$0xff] %v3161
    %3175 = vst [vmem:[%s71 + $0x50] sm:$0xff] %v3162
    %3176 = vst [vmem:[%s71 + $0x58] sm:$0xff] %v3163
    %3177 = vst [vmem:[%s71 + $0x60] sm:$0x1f] %v3164
    %vm3192 = vcmask 1042432
    %v3193 = vrot.slane %v2733, 5
    %v3194 = vrot.slane %v2735, 5
    %v3195 = vsel %vm3192, %v3193, %v3194
    %v3196 = vrot.slane %v2738, 5
    %v3197 = vsel %vm3192, %v3194, %v3196
    %v3198 = vrot.slane %v2740, 5
    %v3199 = vsel %vm3192, %v3196, %v3198
    %v3200 = vrot.slane %v2743, 5
    %v3201 = vsel %vm3192, %v3198, %v3200
    %v3202 = vrot.slane %v2745, 5
    %v3203 = vsel %vm3192, %v3200, %v3202
    %v3204 = vrot.slane %v2748, 5
    %v3205 = vsel %vm3192, %v3202, %v3204
    %v3206 = vrot.slane %v2750, 5
    %v3207 = vsel %vm3192, %v3204, %v3206
    %v3208 = vrot.slane %v2753, 5
    %v3209 = vsel %vm3192, %v3206, %v3208
    %v3210 = vrot.slane %v2755, 5
    %v3211 = vsel %vm3192, %v3208, %v3210
    %v3212 = vrot.slane %v2758, 5
    %v3213 = vsel %vm3192, %v3210, %v3212
    %v3214 = vrot.slane %v2760, 5
    %v3215 = vsel %vm3192, %v3212, %v3214
    %v3216 = vrot.slane %v2763, 5
    %v3217 = vsel %vm3192, %v3214, %v3216
    %v3218 = vrot.slane %v2765, 5
    %v3219 = vsel %vm3192, %v3216, %v3218
    %v3233 = vadd.f32 %v3195, %v3197
    %v3234 = vadd.f32 %v3233, %v3199
    %v3235 = vadd.f32 %v3234, %v3201
    %v3236 = vadd.f32 %v3235, %v3203
    %v3237 = vadd.f32 %v3236, %v3205
    %v3238 = vadd.f32 %v3237, %v3207
    %v3239 = vadd.f32 %v3238, %v3209
    %v3240 = vadd.f32 %v3239, %v3211
    %v3241 = vadd.f32 %v3240, %v3213
    %v3242 = vadd.f32 %v3241, %v3215
    %v3243 = vadd.f32 %v3242, %v3217
    %v3244 = vsel %vm2904, %v3219, 0.0
    %v3245 = vadd.f32 %v3243, %v3244
    %3246 = vadd.xlane.f32.xlu0 %v3245
    %v3247 = vpop.xlane.xlu0 %3246
    %v3248 = vrot.slane %v3247, 4
    %v3249 = vadd.f32 %v3247, %v3248
    %v3250 = vrot.slane %v3249, 2
    %v3251 = vadd.f32 %v3249, %v3250
    %v3252 = vrot.slane %v3251, 1
    %v3253 = vadd.f32 %v3251, %v3252
    %s3254 = vtos %v3253
    %v3255 = vmul.f32 %v2735, %v2735
    %v3256 = vmul.f32 %v2738, %v2738
    %v3257 = vmul.f32 %v2740, %v2740
    %v3258 = vmul.f32 %v2743, %v2743
    %v3259 = vmul.f32 %v2745, %v2745
    %v3260 = vmul.f32 %v2748, %v2748
    %v3261 = vmul.f32 %v2750, %v2750
    %v3262 = vmul.f32 %v2753, %v2753
    %v3263 = vmul.f32 %v2755, %v2755
    %v3264 = vmul.f32 %v2758, %v2758
    %v3265 = vmul.f32 %v2760, %v2760
    %v3266 = vmul.f32 %v2763, %v2763
    %v3267 = vmul.f32 %v2765, %v2765
    %v3282 = vrot.slane %v2928, 5
    %v3283 = vrot.slane %v3255, 5
    %v3284 = vsel %vm3192, %v3282, %v3283
    %v3285 = vrot.slane %v3256, 5
    %v3286 = vsel %vm3192, %v3283, %v3285
    %v3287 = vrot.slane %v3257, 5
    %v3288 = vsel %vm3192, %v3285, %v3287
    %v3289 = vrot.slane %v3258, 5
    %v3290 = vsel %vm3192, %v3287, %v3289
    %v3291 = vrot.slane %v3259, 5
    %v3292 = vsel %vm3192, %v3289, %v3291
    %v3293 = vrot.slane %v3260, 5
    %v3294 = vsel %vm3192, %v3291, %v3293
    %v3295 = vrot.slane %v3261, 5
    %v3296 = vsel %vm3192, %v3293, %v3295
    %v3297 = vrot.slane %v3262, 5
    %v3298 = vsel %vm3192, %v3295, %v3297
    %v3299 = vrot.slane %v3263, 5
    %v3300 = vsel %vm3192, %v3297, %v3299
    %v3301 = vrot.slane %v3264, 5
    %v3302 = vsel %vm3192, %v3299, %v3301
    %v3303 = vrot.slane %v3265, 5
    %v3304 = vsel %vm3192, %v3301, %v3303
    %v3305 = vrot.slane %v3266, 5
    %v3306 = vsel %vm3192, %v3303, %v3305
    %v3307 = vrot.slane %v3267, 5
    %v3308 = vsel %vm3192, %v3305, %v3307
    %v3322 = vadd.f32 %v3284, %v3286
    %v3323 = vadd.f32 %v3322, %v3288
    %v3324 = vadd.f32 %v3323, %v3290
    %v3325 = vadd.f32 %v3324, %v3292
    %v3326 = vadd.f32 %v3325, %v3294
    %v3327 = vadd.f32 %v3326, %v3296
    %v3328 = vadd.f32 %v3327, %v3298
    %v3329 = vadd.f32 %v3328, %v3300
    %v3330 = vadd.f32 %v3329, %v3302
    %v3331 = vadd.f32 %v3330, %v3304
    %v3332 = vadd.f32 %v3331, %v3306
    %v3333 = vsel %vm2904, %v3308, 0.0
    %v3334 = vadd.f32 %v3332, %v3333
    %3335 = vadd.xlane.f32.xlu0 %v3334
    %v3336 = vpop.xlane.xlu0 %3335
    %v3337 = vrot.slane %v3336, 4
    %v3338 = vadd.f32 %v3336, %v3337
    %v3339 = vrot.slane %v3338, 2
    %v3340 = vadd.f32 %v3338, %v3339
    %v3341 = vrot.slane %v3340, 1
    %v3342 = vadd.f32 %v3340, %v3341
    %s3343 = vtos %v3342
    %v3358 = vrot.slane %v2807, 5
    %v3359 = vrot.slane %v2809, 5
    %v3360 = vsel %vm3192, %v3358, %v3359
    %v3361 = vrot.slane %v2812, 5
    %v3362 = vsel %vm3192, %v3359, %v3361
    %v3363 = vrot.slane %v2814, 5
    %v3364 = vsel %vm3192, %v3361, %v3363
    %v3365 = vrot.slane %v2817, 5
    %v3366 = vsel %vm3192, %v3363, %v3365
    %v3367 = vrot.slane %v2819, 5
    %v3368 = vsel %vm3192, %v3365, %v3367
    %v3369 = vrot.slane %v2822, 5
    %v3370 = vsel %vm3192, %v3367, %v3369
    %v3371 = vrot.slane %v2824, 5
    %v3372 = vsel %vm3192, %v3369, %v3371
    %v3373 = vrot.slane %v2827, 5
    %v3374 = vsel %vm3192, %v3371, %v3373
    %v3375 = vrot.slane %v2829, 5
    %v3376 = vsel %vm3192, %v3373, %v3375
    %v3377 = vrot.slane %v2832, 5
    %v3378 = vsel %vm3192, %v3375, %v3377
    %v3379 = vrot.slane %v2834, 5
    %v3380 = vsel %vm3192, %v3377, %v3379
    %v3381 = vrot.slane %v2837, 5
    %v3382 = vsel %vm3192, %v3379, %v3381
    %v3383 = vrot.slane %v2839, 5
    %v3384 = vsel %vm3192, %v3381, %v3383
    %v3398 = vadd.f32 %v3360, %v3362
    %v3399 = vadd.f32 %v3398, %v3364
    %v3400 = vadd.f32 %v3399, %v3366
    %v3401 = vadd.f32 %v3400, %v3368
    %v3402 = vadd.f32 %v3401, %v3370
    %v3403 = vadd.f32 %v3402, %v3372
    %v3404 = vadd.f32 %v3403, %v3374
    %v3405 = vadd.f32 %v3404, %v3376
    %v3406 = vadd.f32 %v3405, %v3378
    %v3407 = vadd.f32 %v3406, %v3380
    %v3408 = vadd.f32 %v3407, %v3382
    %v3409 = vsel %vm2904, %v3384, 0.0
    %v3410 = vadd.f32 %v3408, %v3409
    %3411 = vadd.xlane.f32.xlu0 %v3410
    %v3412 = vpop.xlane.xlu0 %3411
    %v3413 = vrot.slane %v3412, 4
    %v3414 = vadd.f32 %v3412, %v3413
    %v3415 = vrot.slane %v3414, 2
    %v3416 = vadd.f32 %v3414, %v3415
    %v3417 = vrot.slane %v3416, 1
    %v3418 = vadd.f32 %v3416, %v3417
    %s3419 = vtos %v3418
    %v3420 = vmul.f32 %v2809, %v2809
    %v3421 = vmul.f32 %v2812, %v2812
    %v3422 = vmul.f32 %v2814, %v2814
    %v3423 = vmul.f32 %v2817, %v2817
    %v3424 = vmul.f32 %v2819, %v2819
    %v3425 = vmul.f32 %v2822, %v2822
    %v3426 = vmul.f32 %v2824, %v2824
    %v3427 = vmul.f32 %v2827, %v2827
    %v3428 = vmul.f32 %v2829, %v2829
    %v3429 = vmul.f32 %v2832, %v2832
    %v3430 = vmul.f32 %v2834, %v2834
    %v3431 = vmul.f32 %v2837, %v2837
    %v3432 = vmul.f32 %v2839, %v2839
    %v3447 = vrot.slane %v2985, 5
    %v3448 = vrot.slane %v3420, 5
    %v3449 = vsel %vm3192, %v3447, %v3448
    %v3450 = vrot.slane %v3421, 5
    %v3451 = vsel %vm3192, %v3448, %v3450
    %v3452 = vrot.slane %v3422, 5
    %v3453 = vsel %vm3192, %v3450, %v3452
    %v3454 = vrot.slane %v3423, 5
    %v3455 = vsel %vm3192, %v3452, %v3454
    %v3456 = vrot.slane %v3424, 5
    %v3457 = vsel %vm3192, %v3454, %v3456
    %v3458 = vrot.slane %v3425, 5
    %v3459 = vsel %vm3192, %v3456, %v3458
    %v3460 = vrot.slane %v3426, 5
    %v3461 = vsel %vm3192, %v3458, %v3460
    %v3462 = vrot.slane %v3427, 5
    %v3463 = vsel %vm3192, %v3460, %v3462
    %v3464 = vrot.slane %v3428, 5
    %v3465 = vsel %vm3192, %v3462, %v3464
    %v3466 = vrot.slane %v3429, 5
    %v3467 = vsel %vm3192, %v3464, %v3466
    %v3468 = vrot.slane %v3430, 5
    %v3469 = vsel %vm3192, %v3466, %v3468
    %v3470 = vrot.slane %v3431, 5
    %v3471 = vsel %vm3192, %v3468, %v3470
    %v3472 = vrot.slane %v3432, 5
    %v3473 = vsel %vm3192, %v3470, %v3472
    %v3487 = vadd.f32 %v3449, %v3451
    %v3488 = vadd.f32 %v3487, %v3453
    %v3489 = vadd.f32 %v3488, %v3455
    %v3490 = vadd.f32 %v3489, %v3457
    %v3491 = vadd.f32 %v3490, %v3459
    %v3492 = vadd.f32 %v3491, %v3461
    %v3493 = vadd.f32 %v3492, %v3463
    %v3494 = vadd.f32 %v3493, %v3465
    %v3495 = vadd.f32 %v3494, %v3467
    %v3496 = vadd.f32 %v3495, %v3469
    %v3497 = vadd.f32 %v3496, %v3471
    %v3498 = vsel %vm2904, %v3473, 0.0
    %v3499 = vadd.f32 %v3497, %v3498
    %3500 = vadd.xlane.f32.xlu0 %v3499
    %v3501 = vpop.xlane.xlu0 %3500
    %v3502 = vrot.slane %v3501, 4
    %v3503 = vadd.f32 %v3501, %v3502
    %v3504 = vrot.slane %v3503, 2
    %v3505 = vadd.f32 %v3503, %v3504
    %v3506 = vrot.slane %v3505, 1
    %v3507 = vadd.f32 %v3505, %v3506
    %s3508 = vtos %v3507
    %s3509 = smul.f32 %s3254, 7.7351484e-05
    %s3510 = smul.f32 %s3343, 7.7351484e-05
    %s3511 = smul.f32 %s3509, %s3509
    %s3512 = ssub.f32 %s3510, %s3511
    %s3513 = smax.f32 %s3512, 0.0
    %s3514 = smul.f32 %s3419, 7.7351484e-05
    %s3515 = smul.f32 %s3508, 7.7351484e-05
    %s3516 = smul.f32 %s3514, %s3514
    %s3517 = ssub.f32 %s3515, %s3516
    %s3518 = smax.f32 %s3517, 0.0
    %v3519 = vstv %s3509
    %v3520 = vsub.f32 %v2733, %v3519
    %v3521 = vsub.f32 %v2735, %v3519
    %v3522 = vsub.f32 %v2738, %v3519
    %v3523 = vsub.f32 %v2740, %v3519
    %v3524 = vsub.f32 %v2743, %v3519
    %v3525 = vsub.f32 %v2745, %v3519
    %v3526 = vsub.f32 %v2748, %v3519
    %v3527 = vsub.f32 %v2750, %v3519
    %v3528 = vsub.f32 %v2753, %v3519
    %v3529 = vsub.f32 %v2755, %v3519
    %v3530 = vsub.f32 %v2758, %v3519
    %v3531 = vsub.f32 %v2760, %v3519
    %v3532 = vsub.f32 %v2763, %v3519
    %v3533 = vsub.f32 %v2765, %v3519
    %s3534 = sadd.f32 %s3513, 1e-05
    %v3535 = vstv %s3534
    %v3536 = vrsqrt.pop %v3535
    %v3537 = vmul.f32 %v3536, %v3535
    %v3538 = vmul.f32 %v3537, %v3536
    %v3539 = vmul.f32 0.5, %v3538
    %v3540 = vsub.f32 1.5, %v3539
    %v3541 = vmul.f32 %v3536, %v3540
    %vm3542 = vweird.f32 %v3535
    %vm3543 = vweird.f32 %v3536
    %vm3544 = vmor %vm3542, %vm3543
    %v3545 = vsel %vm3544, %v3536, %v3541
    %s3546 = vtos %v3545
    %v3547 = vstv %s3546
    %v3548 = vmul.f32 %v3520, %v3547
    %v3549 = vmul.f32 %v3521, %v3547
    %v3550 = vmul.f32 %v3522, %v3547
    %v3551 = vmul.f32 %v3523, %v3547
    %v3552 = vmul.f32 %v3524, %v3547
    %v3553 = vmul.f32 %v3525, %v3547
    %v3554 = vmul.f32 %v3526, %v3547
    %v3555 = vmul.f32 %v3527, %v3547
    %v3556 = vmul.f32 %v3528, %v3547
    %v3557 = vmul.f32 %v3529, %v3547
    %v3558 = vmul.f32 %v3530, %v3547
    %v3559 = vmul.f32 %v3531, %v3547
    %v3560 = vmul.f32 %v3532, %v3547
    %v3561 = vmul.f32 %v3533, %v3547
    %v3575 = vrot.slane %v2841, 3
    %v3576 = vrot.slane %v2842, 3
    %v3577 = vsel %vm2904, %v3575, %v3576
    %v3578 = vrot.slane %v2843, 3
    %v3579 = vsel %vm2904, %v3576, %v3578
    %v3580 = vrot.slane %v2844, 3
    %v3581 = vsel %vm2904, %v3578, %v3580
    %v3582 = vrot.slane %v2845, 3
    %v3583 = vsel %vm2904, %v3580, %v3582
    %v3584 = vrot.slane %v2846, 3
    %v3585 = vsel %vm2904, %v3582, %v3584
    %v3586 = vrot.slane %v2847, 3
    %v3587 = vsel %vm2904, %v3584, %v3586
    %v3588 = vrot.slane %v2848, 3
    %v3589 = vsel %vm2904, %v3586, %v3588
    %v3590 = vrot.slane %v2849, 3
    %v3591 = vsel %vm2904, %v3588, %v3590
    %v3592 = vrot.slane %v2850, 3
    %v3593 = vsel %vm2904, %v3590, %v3592
    %v3594 = vrot.slane %v2851, 3
    %v3595 = vsel %vm2904, %v3592, %v3594
    %v3596 = vrot.slane %v2852, 3
    %v3597 = vsel %vm2904, %v3594, %v3596
    %v3598 = vrot.slane %v2853, 3
    %v3599 = vsel %vm2904, %v3596, %v3598
    %v3614 = vmul.f32 %v3548, %v3575
    %v3615 = vmul.f32 %v3549, %v3577
    %v3616 = vmul.f32 %v3550, %v3579
    %v3617 = vmul.f32 %v3551, %v3581
    %v3618 = vmul.f32 %v3552, %v3583
    %v3619 = vmul.f32 %v3553, %v3585
    %v3620 = vmul.f32 %v3554, %v3587
    %v3621 = vmul.f32 %v3555, %v3589
    %v3622 = vmul.f32 %v3556, %v3591
    %v3623 = vmul.f32 %v3557, %v3593
    %v3624 = vmul.f32 %v3558, %v3595
    %v3625 = vmul.f32 %v3559, %v3597
    %v3626 = vmul.f32 %v3560, %v3599
    %v3627 = vmul.f32 %v3561, %v3598
    %v3641 = vrot.slane %v2854, 3
    %v3642 = vrot.slane %v2855, 3
    %v3643 = vsel %vm2904, %v3641, %v3642
    %v3644 = vrot.slane %v2856, 3
    %v3645 = vsel %vm2904, %v3642, %v3644
    %v3646 = vrot.slane %v2857, 3
    %v3647 = vsel %vm2904, %v3644, %v3646
    %v3648 = vrot.slane %v2858, 3
    %v3649 = vsel %vm2904, %v3646, %v3648
    %v3650 = vrot.slane %v2859, 3
    %v3651 = vsel %vm2904, %v3648, %v3650
    %v3652 = vrot.slane %v2860, 3
    %v3653 = vsel %vm2904, %v3650, %v3652
    %v3654 = vrot.slane %v2861, 3
    %v3655 = vsel %vm2904, %v3652, %v3654
    %v3656 = vrot.slane %v2862, 3
    %v3657 = vsel %vm2904, %v3654, %v3656
    %v3658 = vrot.slane %v2863, 3
    %v3659 = vsel %vm2904, %v3656, %v3658
    %v3660 = vrot.slane %v2864, 3
    %v3661 = vsel %vm2904, %v3658, %v3660
    %v3662 = vrot.slane %v2865, 3
    %v3663 = vsel %vm2904, %v3660, %v3662
    %v3664 = vrot.slane %v2866, 3
    %v3665 = vsel %vm2904, %v3662, %v3664
    %v3680 = vadd.f32 %v3614, %v3641
    %v3681 = vadd.f32 %v3615, %v3643
    %v3682 = vadd.f32 %v3616, %v3645
    %v3683 = vadd.f32 %v3617, %v3647
    %v3684 = vadd.f32 %v3618, %v3649
    %v3685 = vadd.f32 %v3619, %v3651
    %v3686 = vadd.f32 %v3620, %v3653
    %v3687 = vadd.f32 %v3621, %v3655
    %v3688 = vadd.f32 %v3622, %v3657
    %v3689 = vadd.f32 %v3623, %v3659
    %v3690 = vadd.f32 %v3624, %v3661
    %v3691 = vadd.f32 %v3625, %v3663
    %v3692 = vadd.f32 %v3626, %v3665
    %v3693 = vadd.f32 %v3627, %v3664
    %s3694 = scalar_lea.vmem %s69, 104
    %3695 = vst [vmem:[%s3694 - $0x5] sm:$0xe0] %v3680
    %3696 = vst [vmem:[%s3694 + $0x3] sm:$0xff] %v3681
    %3697 = vst [vmem:[%s3694 + $0xb] sm:$0xff] %v3682
    %3698 = vst [vmem:[%s3694 + $0x13] sm:$0xff] %v3683
    %3699 = vst [vmem:[%s3694 + $0x1b] sm:$0xff] %v3684
    %3700 = vst [vmem:[%s3694 + $0x23] sm:$0xff] %v3685
    %3701 = vst [vmem:[%s3694 + $0x2b] sm:$0xff] %v3686
    %3702 = vst [vmem:[%s3694 + $0x33] sm:$0xff] %v3687
    %3703 = vst [vmem:[%s3694 + $0x3b] sm:$0xff] %v3688
    %3704 = vst [vmem:[%s3694 + $0x43] sm:$0xff] %v3689
    %3705 = vst [vmem:[%s3694 + $0x4b] sm:$0xff] %v3690
    %3706 = vst [vmem:[%s3694 + $0x53] sm:$0xff] %v3691
    %3707 = vst [vmem:[%s3694 + $0x5b] sm:$0xff] %v3692
    %3708 = vst [vmem:[%s3694 + $0x63] sm:$0x3] %v3693
    %v3709 = vstv %s3514
    %v3710 = vsub.f32 %v2807, %v3709
    %v3711 = vsub.f32 %v2809, %v3709
    %v3712 = vsub.f32 %v2812, %v3709
    %v3713 = vsub.f32 %v2814, %v3709
    %v3714 = vsub.f32 %v2817, %v3709
    %v3715 = vsub.f32 %v2819, %v3709
    %v3716 = vsub.f32 %v2822, %v3709
    %v3717 = vsub.f32 %v2824, %v3709
    %v3718 = vsub.f32 %v2827, %v3709
    %v3719 = vsub.f32 %v2829, %v3709
    %v3720 = vsub.f32 %v2832, %v3709
    %v3721 = vsub.f32 %v2834, %v3709
    %v3722 = vsub.f32 %v2837, %v3709
    %v3723 = vsub.f32 %v2839, %v3709
    %s3724 = sadd.f32 %s3518, 1e-05
    %v3725 = vstv %s3724
    %v3726 = vrsqrt.pop %v3725
    %v3727 = vmul.f32 %v3726, %v3725
    %v3728 = vmul.f32 %v3727, %v3726
    %v3729 = vmul.f32 0.5, %v3728
    %v3730 = vsub.f32 1.5, %v3729
    %v3731 = vmul.f32 %v3726, %v3730
    %vm3732 = vweird.f32 %v3725
    %vm3733 = vweird.f32 %v3726
    %vm3734 = vmor %vm3732, %vm3733
    %v3735 = vsel %vm3734, %v3726, %v3731
    %s3736 = vtos %v3735
    %v3737 = vstv %s3736
    %v3738 = vmul.f32 %v3710, %v3737
    %v3739 = vmul.f32 %v3711, %v3737
    %v3740 = vmul.f32 %v3712, %v3737
    %v3741 = vmul.f32 %v3713, %v3737
    %v3742 = vmul.f32 %v3714, %v3737
    %v3743 = vmul.f32 %v3715, %v3737
    %v3744 = vmul.f32 %v3716, %v3737
    %v3745 = vmul.f32 %v3717, %v3737
    %v3746 = vmul.f32 %v3718, %v3737
    %v3747 = vmul.f32 %v3719, %v3737
    %v3748 = vmul.f32 %v3720, %v3737
    %v3749 = vmul.f32 %v3721, %v3737
    %v3750 = vmul.f32 %v3722, %v3737
    %v3751 = vmul.f32 %v3723, %v3737
    %v3765 = vrot.slane %v2867, 3
    %v3766 = vrot.slane %v2868, 3
    %v3767 = vsel %vm2904, %v3765, %v3766
    %v3768 = vrot.slane %v2869, 3
    %v3769 = vsel %vm2904, %v3766, %v3768
    %v3770 = vrot.slane %v2870, 3
    %v3771 = vsel %vm2904, %v3768, %v3770
    %v3772 = vrot.slane %v2871, 3
    %v3773 = vsel %vm2904, %v3770, %v3772
    %v3774 = vrot.slane %v2872, 3
    %v3775 = vsel %vm2904, %v3772, %v3774
    %v3776 = vrot.slane %v2873, 3
    %v3777 = vsel %vm2904, %v3774, %v3776
    %v3778 = vrot.slane %v2874, 3
    %v3779 = vsel %vm2904, %v3776, %v3778
    %v3780 = vrot.slane %v2875, 3
    %v3781 = vsel %vm2904, %v3778, %v3780
    %v3782 = vrot.slane %v2876, 3
    %v3783 = vsel %vm2904, %v3780, %v3782
    %v3784 = vrot.slane %v2877, 3
    %v3785 = vsel %vm2904, %v3782, %v3784
    %v3786 = vrot.slane %v2878, 3
    %v3787 = vsel %vm2904, %v3784, %v3786
    %v3788 = vrot.slane %v2879, 3
    %v3789 = vsel %vm2904, %v3786, %v3788
    %v3804 = vmul.f32 %v3738, %v3765
    %v3805 = vmul.f32 %v3739, %v3767
    %v3806 = vmul.f32 %v3740, %v3769
    %v3807 = vmul.f32 %v3741, %v3771
    %v3808 = vmul.f32 %v3742, %v3773
    %v3809 = vmul.f32 %v3743, %v3775
    %v3810 = vmul.f32 %v3744, %v3777
    %v3811 = vmul.f32 %v3745, %v3779
    %v3812 = vmul.f32 %v3746, %v3781
    %v3813 = vmul.f32 %v3747, %v3783
    %v3814 = vmul.f32 %v3748, %v3785
    %v3815 = vmul.f32 %v3749, %v3787
    %v3816 = vmul.f32 %v3750, %v3789
    %v3817 = vmul.f32 %v3751, %v3788
    %v3831 = vrot.slane %v2880, 3
    %v3832 = vrot.slane %v2881, 3
    %v3833 = vsel %vm2904, %v3831, %v3832
    %v3834 = vrot.slane %v2882, 3
    %v3835 = vsel %vm2904, %v3832, %v3834
    %v3836 = vrot.slane %v2883, 3
    %v3837 = vsel %vm2904, %v3834, %v3836
    %v3838 = vrot.slane %v2884, 3
    %v3839 = vsel %vm2904, %v3836, %v3838
    %v3840 = vrot.slane %v2885, 3
    %v3841 = vsel %vm2904, %v3838, %v3840
    %v3842 = vrot.slane %v2886, 3
    %v3843 = vsel %vm2904, %v3840, %v3842
    %v3844 = vrot.slane %v2887, 3
    %v3845 = vsel %vm2904, %v3842, %v3844
    %v3846 = vrot.slane %v2888, 3
    %v3847 = vsel %vm2904, %v3844, %v3846
    %v3848 = vrot.slane %v2889, 3
    %v3849 = vsel %vm2904, %v3846, %v3848
    %v3850 = vrot.slane %v2890, 3
    %v3851 = vsel %vm2904, %v3848, %v3850
    %v3852 = vrot.slane %v2891, 3
    %v3853 = vsel %vm2904, %v3850, %v3852
    %v3854 = vrot.slane %v2892, 3
    %v3855 = vsel %vm2904, %v3852, %v3854
    %v3870 = vadd.f32 %v3804, %v3831
    %v3871 = vadd.f32 %v3805, %v3833
    %v3872 = vadd.f32 %v3806, %v3835
    %v3873 = vadd.f32 %v3807, %v3837
    %v3874 = vadd.f32 %v3808, %v3839
    %v3875 = vadd.f32 %v3809, %v3841
    %v3876 = vadd.f32 %v3810, %v3843
    %v3877 = vadd.f32 %v3811, %v3845
    %v3878 = vadd.f32 %v3812, %v3847
    %v3879 = vadd.f32 %v3813, %v3849
    %v3880 = vadd.f32 %v3814, %v3851
    %v3881 = vadd.f32 %v3815, %v3853
    %v3882 = vadd.f32 %v3816, %v3855
    %v3883 = vadd.f32 %v3817, %v3854
    %s3884 = scalar_lea.vmem %s71, 104
    %3885 = vst [vmem:[%s3884 - $0x5] sm:$0xe0] %v3870
    %3886 = vst [vmem:[%s3884 + $0x3] sm:$0xff] %v3871
    %3887 = vst [vmem:[%s3884 + $0xb] sm:$0xff] %v3872
    %3888 = vst [vmem:[%s3884 + $0x13] sm:$0xff] %v3873
    %3889 = vst [vmem:[%s3884 + $0x1b] sm:$0xff] %v3874
    %3890 = vst [vmem:[%s3884 + $0x23] sm:$0xff] %v3875
    %3891 = vst [vmem:[%s3884 + $0x2b] sm:$0xff] %v3876
    %3892 = vst [vmem:[%s3884 + $0x33] sm:$0xff] %v3877
    %3893 = vst [vmem:[%s3884 + $0x3b] sm:$0xff] %v3878
    %3894 = vst [vmem:[%s3884 + $0x43] sm:$0xff] %v3879
    %3895 = vst [vmem:[%s3884 + $0x4b] sm:$0xff] %v3880
    %3896 = vst [vmem:[%s3884 + $0x53] sm:$0xff] %v3881
    %3897 = vst [vmem:[%s3884 + $0x5b] sm:$0xff] %v3882
    %3898 = vst [vmem:[%s3884 + $0x63] sm:$0x3] %v3883
    // Predicated region
    $region206: #{forward.1} parent=1 // pred_check
      _
    $region207: #{forward.1} parent=1 // pred_check_branch
      %3900 = sbr.rel (0) target = $region209
    $region208: #{forward.1} parent=1 // pred_region
      %3902 = vsyncadd [#allocation5], 0
      %s3904 = sshll.u32 [#allocation36], 4
      %s3905 = int_to_ptr.vmem [resolvable:$true] %s3904
      %s3906 = sshll.u32 %s61, 4
      %s3907 = int_to_ptr.hbm [resolvable:$true] %s3906
      %3909 = dma.vmem_to_hbm [thread:$0]  %s3905, 32, %s3907, [#allocation5]
    $region209: #{forward.1} parent=1 // pred_fallthru
      _
    // Predicated region
    $region210: #{forward.1} parent=1 // pred_check
      _
    $region211: #{forward.1} parent=1 // pred_check_branch
      %3911 = sbr.rel (0) target = $region213
    $region212: #{forward.1} parent=1 // pred_region
      %3913 = vsyncadd [#allocation38], 0
      %s3915 = sshll.u32 [#allocation37], 4
      %s3916 = int_to_ptr.vmem [resolvable:$true] %s3915
      %s3917 = sshll.u32 %s63, 4
      %s3918 = int_to_ptr.hbm [resolvable:$true] %s3917
      %3920 = dma.vmem_to_hbm [thread:$0]  %s3916, 32, %s3918, [#allocation38]
    $region213: #{forward.1} parent=1 // pred_fallthru
      _
    // Predicated region
    $region214: #{forward.1} parent=1 // pred_check
      _
    $region215: #{forward.1} parent=1 // pred_check_branch
      %3922 = sbr.rel (0) target = $region217
    $region216: #{forward.1} parent=1 // pred_region
      _
    $region217: #{forward.1} parent=1 // pred_fallthru
      _
    // Predicated region
    $region218: #{forward.1} parent=1 // pred_check
      _
    $region219: #{forward.1} parent=1 // pred_check_branch
      %3924 = sbr.rel (0) target = $region221
    $region220: #{forward.1} parent=1 // pred_region
      _
    $region221: #{forward.1} parent=1 // pred_fallthru
      _
    // Predicated region
    $region222: #{forward.1} parent=1 // pred_check
      _
    $region223: #{forward.1} parent=1 // pred_check_branch
      %3926 = sbr.rel (0) target = $region225
    $region224: #{forward.1} parent=1 // pred_region
      _
    $region225: #{forward.1} parent=1 // pred_fallthru
      _
    // Predicated region
    $region226: #{forward.1} parent=1 // pred_check
      _
    $region227: #{forward.1} parent=1 // pred_check_branch
      %3928 = sbr.rel (0) target = $region229
    $region228: #{forward.1} parent=1 // pred_region
      _
    $region229: #{forward.1} parent=1 // pred_fallthru
      _
    // Predicated region
    $region230: #{forward.1} parent=1 // pred_check
      _
    $region231: #{forward.1} parent=1 // pred_check_branch
      %3930 = sbr.rel (0) target = $region233
    $region232: #{forward.1} parent=1 // pred_region
      %3932 = dma.done [#allocation5], 32
    $region233: #{forward.1} parent=1 // pred_fallthru
      _
    // Predicated region
    $region234: #{forward.1} parent=1 // pred_check
      _
    $region235: #{forward.1} parent=1 // pred_check_branch
      %3934 = sbr.rel (0) target = $region237
    $region236: #{forward.1} parent=1 // pred_region
      %3936 = dma.done [#allocation38], 32
    $region237: #{forward.1} parent=1 // pred_fallthru
      _
    // Predicated region
    $region238: #{forward.1} parent=1 // pred_check
      _
    $region239: #{forward.1} parent=1 // pred_check_branch
      %3938 = sbr.rel (0) target = $region241
    $region240: #{forward.1} parent=1 // pred_region
      _
    $region241: #{forward.1} parent=1 // pred_fallthru
      _
    // Predicated region
    $region242: #{forward.1} parent=1 // pred_check
      _
    $region243: #{forward.1} parent=1 // pred_check_branch
      %3940 = sbr.rel (0) target = $region245
    $region244: #{forward.1} parent=1 // pred_region
      _
    $region245: #{forward.1} parent=1 // pred_fallthru
      _
    // Predicated region
    $region246: #{forward.1} parent=1 // pred_check
      _
    $region247: #{forward.1} parent=1 // pred_check_branch
      %3942 = sbr.rel (0) target = $region249
    $region248: #{forward.1} parent=1 // pred_region
      _
    $region249: #{forward.1} parent=1 // pred_fallthru
      _
    // Predicated region
    $region250: #{forward.1} parent=1 // pred_check
      _
    $region251: #{forward.1} parent=1 // pred_check_branch
      %3944 = sbr.rel (0) target = $region253
    $region252: #{forward.1} parent=1 // pred_region
      _
    $region253: #{forward.1} parent=1 // pred_fallthru
      _
    %3945 = vsyncpa [#allocation4], 1
    %3946 = vsyncpa [#allocation7], 1
    %3947 = vsyncpa [#allocation10], 1
    %3948 = vsyncpa [#allocation13], 1
    %3949 = vsyncpa [#allocation16], 1
    %3950 = vsyncpa [#allocation19], 1
    %3951 = vsyncpa [#allocation22], 1
    %3952 = vsyncpa [#allocation25], 1
    %3953 = vsyncpa [#allocation28], 1
    %3954 = vsyncpa [#allocation31], 1
    %3955 = vsyncpa [#allocation34], 1
    %3956 = vsyncpa [#allocation5], 1
    %3957 = vsyncpa [#allocation38], 1

</llo_original>
